<compile_context>
chip_gen: v5e
topology: v5e:2x2
jax: 0.10.0
libtpu: 0.0.40
codegen_flags: <defaults>
</compile_context>

<pallas_src>
import functools

import jax
import jax.numpy as jnp
from jax import lax
from jax.experimental import pallas as pl
from jax.experimental.pallas import tpu as pltpu


def _round_up(x, m):
    return ((x + m - 1) // m) * m


def _hint_multiple(x, m):
    # pl.multiple_of hint for traced offsets; pass-through for static Python ints.
    return x if isinstance(x, int) else pl.multiple_of(x, m)


def _make_lstm_kernel(num_layers, T, Tp, Tc, Bb, I, Hp, compute_dtype, time_unroll):
    num_chunks = Tp // Tc

    def kernel(*refs):
        # refs: x, (wih_T, whh_T, bias) * num_layers, wfc_T, bfc, out, seq_scr, proj_scr
        x_ref = refs[0]
        idx = 1
        layer_params = []
        for _ in range(num_layers):
            layer_params.append((refs[idx], refs[idx + 1], refs[idx + 2]))
            idx += 3
        wfc_ref, bfc_ref = refs[idx], refs[idx + 1]
        out_ref = refs[idx + 2]
        seq_scr = refs[idx + 3]   # VMEM (Tp*Bb, Hp)   bf16 : inter-layer sequence buffer
        proj_scr = refs[idx + 4]  # VMEM (Tc*Bb, 4Hp)  f32  : per-chunk input projection

        h = jnp.zeros((Bb, Hp), jnp.float32)
        for l in range(num_layers):
            wih_ref, whh_ref, b_ref = layer_params[l]
            whh = whh_ref[...]                      # (Hp, 4Hp)  compute_dtype (bf16)
            bias = b_ref[...].astype(jnp.float32)   # (1, 4Hp)
            write_seq = l < num_layers - 1          # last layer's sequence never read

            def run_chunk(n, carry, *, l=l, whh=whh, bias=bias,
                          wih_ref=wih_ref, write_seq=write_seq):
                # ---- hoisted input projection: one big MXU matmul per chunk ----
                if l == 0:
                    chunk_in = x_ref[pl.ds(n * Tc, Tc)].reshape(Tc * Bb, I)
                else:
                    row0 = _hint_multiple(n * (Tc * Bb), Bb)
                    chunk_in = seq_scr[pl.ds(row0, Tc * Bb), :]
                proj_scr[...] = (
                    jnp.dot(chunk_in, wih_ref[...],
                            preferred_element_type=jnp.float32)
                    + bias
                )

                # ---- serial recurrence: only h @ W_hh + elementwise per step ----
                def step(s, carry2):
                    h, c = carry2
                    r_loc = _hint_multiple(s * Bb, Bb)
                    gates = proj_scr[pl.ds(r_loc, Bb), :] + jnp.dot(
                        h.astype(compute_dtype), whh,
                        preferred_element_type=jnp.float32)
                    # gate columns pre-permuted to [i, f, o, g] in the wrapper:
                    sig = jax.nn.sigmoid(gates[:, :3 * Hp])
                    i_g = sig[:, 0 * Hp:1 * Hp]
                    f_g = sig[:, 1 * Hp:2 * Hp]
                    o_g = sig[:, 2 * Hp:3 * Hp]
                    g_g = jnp.tanh(gates[:, 3 * Hp:])
                    c_new = f_g * c + i_g * g_g
                    h_new = o_g * jnp.tanh(c_new)
                    if Tp != T:  # padded tail steps: freeze the state
                        valid = (n * Tc + s) < T
                        h_new = jnp.where(valid, h_new, h)
                        c_new = jnp.where(valid, c_new, c)
                    if write_seq:
                        row = _hint_multiple((n * Tc + s) * Bb, Bb)
                        seq_scr[pl.ds(row, Bb), :] = h_new.astype(seq_scr.dtype)
                    return h_new, c_new

                return lax.fori_loop(0, Tc, step, carry,
                                     unroll=min(time_unroll, Tc))

            h0 = jnp.zeros((Bb, Hp), jnp.float32)
            c0 = jnp.zeros((Bb, Hp), jnp.float32)
            if num_chunks == 1:
                h, _ = run_chunk(0, (h0, c0))
            else:
                h, _ = lax.fori_loop(0, num_chunks, run_chunk, (h0, c0))

        # ---- final linear head on h_T of the last layer ----
        out = (
            jnp.dot(h.astype(compute_dtype), wfc_ref[...],
                    preferred_element_type=jnp.float32)
            + bfc_ref[...].astype(jnp.float32)
        )
        out_ref[...] = out.astype(out_ref.dtype)

    return kernel


def lstm_forward_pallas(x, params, *, num_layers, hidden_size, output_size,
                        batch_block=None, time_chunk=None,
                        compute_dtype=jnp.bfloat16, time_unroll=8):
    """x: (B, T, I) float32. params: dict of LSTM + fc weights (PyTorch conventions)."""
    B, T, I = x.shape
    H, O = hidden_size, output_size
    Hp = _round_up(H, 128)          # lane-aligned hidden / gate boundaries

    # ---- batch padding / blocking -------------------------------------------------
    # Bb must be a multiple of 16 so bf16 per-step row stores stay sublane-packed.
    Bp = _round_up(B, 16)
    if batch_block is None:
        # Fill the MXU M dim (256 rows) and give >=2 grid blocks (v7x dual-TC) only
        # when the batch is large enough; otherwise keep one block.
        batch_block = 256 if (Bp % 256 == 0 and Bp >= 512) else Bp
    assert Bp % batch_block == 0 and batch_block % 16 == 0
    Bb = batch_block
    grid = (Bp // Bb,)

    # ---- time chunking for the hoisted input projection ---------------------------
    if time_chunk is None:
        budget = 8 * 1024 * 1024                      # ~8 MiB f32 projection scratch
        time_chunk = max(1, min(T, budget // (Bb * 4 * Hp * 4)))
    Tc = int(time_chunk)
    num_chunks = -(-T // Tc)
    Tp = num_chunks * Tc

    # ---- input: time-major, bf16, zero-padded to (Tp, Bp, I) ----------------------
    x_tm = jnp.transpose(x, (1, 0, 2)).astype(compute_dtype)
    x_tm = jnp.pad(x_tm, ((0, Tp - T), (0, Bp - B), (0, 0)))

    rep2 = lambda i: (0, 0)         # replicated (whole-array) blocks

    args = [x_tm]
    in_specs = [pl.BlockSpec((Tp, Bb, I), lambda i: (0, i, 0))]

    def reorder_pad(w, in_from, in_to):
        # (4H, in_from) -> (4Hp, in_to): PyTorch gate order [i,f,g,o] -> [i,f,o,g],
        # each gate block zero-padded H->Hp, input dim zero-padded in_from->in_to.
        i_b, f_b, g_b, o_b = jnp.split(w, 4, axis=0)
        blocks = [jnp.pad(blk, ((0, Hp - H), (0, in_to - in_from)))
                  for blk in (i_b, f_b, o_b, g_b)]
        return jnp.concatenate(blocks, axis=0)

    flops = 0
    for l in range(num_layers):
        in_feat = I if l == 0 else H
        in_p = I if l == 0 else Hp
        wih = reorder_pad(params[f"weight_ih_l{l}"], in_feat, in_p).T.astype(compute_dtype)
        whh = reorder_pad(params[f"weight_hh_l{l}"], H, Hp).T.astype(compute_dtype)
        b4 = (params[f"bias_ih_l{l}"] + params[f"bias_hh_l{l}"]).reshape(4 * H, 1)
        bias = reorder_pad(b4, 1, 1).reshape(1, 4 * Hp)   # stays f32
        args += [wih, whh, bias]
        in_specs += [
            pl.BlockSpec((in_p, 4 * Hp), rep2),
            pl.BlockSpec((Hp, 4 * Hp), rep2),
            pl.BlockSpec((1, 4 * Hp), rep2),
        ]
        flops += 2 * T * Bp * (in_p + Hp) * 4 * Hp

    wfc = jnp.pad(params["fc_weight"], ((0, 0), (0, Hp - H))).T.astype(compute_dtype)
    bfc = params["fc_bias"].reshape(1, O).astype(jnp.float32)
    args += [wfc, bfc]
    in_specs += [pl.BlockSpec((Hp, O), rep2), pl.BlockSpec((1, O), rep2)]
    flops += 2 * Bp * Hp * O

    # ---- scratch + explicit VMEM budget -------------------------------------------
    seq_rows = Tp * Bb if num_layers > 1 else 16
    scratch_shapes = [
        pltpu.VMEM((seq_rows, Hp), compute_dtype),     # inter-layer sequence (bf16)
        pltpu.VMEM((Tc * Bb, 4 * Hp), jnp.float32),    # per-chunk input projection
    ]
    cd_bytes = jnp.dtype(compute_dtype).itemsize
    weight_bytes = sum(int(a.size) * a.dtype.itemsize for a in args[1:])
    vmem_bytes = (
        2 * Tp * Bb * I * cd_bytes        # double-buffered input block
        + 2 * weight_bytes                # pipeline double-buffers replicated weights
        + 2 * Bb * O * 4                  # double-buffered output block
        + seq_rows * Hp * cd_bytes
        + Tc * Bb * 4 * Hp * 4
    )
    vmem_limit = min(120 * 1024 * 1024,
                     max(32 * 1024 * 1024, int(vmem_bytes * 1.3) + (4 << 20)))

    bytes_accessed = sum(int(a.size) * a.dtype.itemsize for a in args) + Bp * O * 4
    cost = pl.CostEstimate(
        flops=int(flops),
        transcendentals=int(5 * num_layers * T * Bp * Hp),
        bytes_accessed=int(bytes_accessed),
    )

    kernel = _make_lstm_kernel(num_layers, T, Tp, Tc, Bb, I, Hp, compute_dtype,
                               time_unroll)

    out = pl.pallas_call(
        kernel,
        out_shape=jax.ShapeDtypeStruct((Bp, O), jnp.float32),
        grid=grid,
        in_specs=in_specs,
        out_specs=pl.BlockSpec((Bb, O), lambda i: (i, 0)),
        scratch_shapes=scratch_shapes,
        compiler_params=pltpu.CompilerParams(
            dimension_semantics=("parallel",),
            vmem_limit_bytes=int(vmem_limit),
        ),
        cost_estimate=cost,
    )(*args)
    return out[:B]


def lstm_forward_ref(x, params, *, num_layers, hidden_size, output_size,
                     compute_dtype=jnp.float32):
    """Pure-JAX reference. compute_dtype=bf16 mirrors the kernel's matmul precision."""
    del output_size
    B, T, _ = x.shape
    H = hidden_size
    cd = compute_dtype
    seq = x.astype(cd)
    h = jnp.zeros((B, H), jnp.float32)
    for l in range(num_layers):
        in_feat = seq.shape[-1]
        wih = params[f"weight_ih_l{l}"].T.astype(cd)
        whh = params[f"weight_hh_l{l}"].T.astype(cd)
        b = (params[f"bias_ih_l{l}"] + params[f"bias_hh_l{l}"]).astype(jnp.float32)
        proj = (
            jnp.dot(seq.reshape(B * T, in_feat), wih,
                    preferred_element_type=jnp.float32).reshape(B, T, 4 * H) + b
        )
        h = jnp.zeros((B, H), jnp.float32)
        c = jnp.zeros((B, H), jnp.float32)
        outs = []
        for t in range(T):
            g = proj[:, t, :] + jnp.dot(h.astype(cd), whh,
                                        preferred_element_type=jnp.float32)
            i_g = jax.nn.sigmoid(g[:, :H])
            f_g = jax.nn.sigmoid(g[:, H:2 * H])
            g_g = jnp.tanh(g[:, 2 * H:3 * H])
            o_g = jax.nn.sigmoid(g[:, 3 * H:])
            c = f_g * c + i_g * g_g
            h = o_g * jnp.tanh(c)
            outs.append(h)
        seq = jnp.stack(outs, axis=1).astype(cd)
    return (jnp.dot(h.astype(cd), params["fc_weight"].T.astype(cd),
                    preferred_element_type=jnp.float32)
            + params["fc_bias"].astype(jnp.float32))


def init_params(key, *, input_size, hidden_size, output_size, num_layers):
    """Deterministic init mirroring PyTorch shapes (uniform(-1/sqrt(H), 1/sqrt(H)))."""
    H = hidden_size
    k = 1.0 / jnp.sqrt(jnp.float32(H))
    params = {}
    for l in range(num_layers):
        in_feat = input_size if l == 0 else H
        key, k1, k2, k3, k4 = jax.random.split(key, 5)
        params[f"weight_ih_l{l}"] = jax.random.uniform(k1, (4 * H, in_feat), jnp.float32, -k, k)
        params[f"weight_hh_l{l}"] = jax.random.uniform(k2, (4 * H, H), jnp.float32, -k, k)
        params[f"bias_ih_l{l}"] = jax.random.uniform(k3, (4 * H,), jnp.float32, -k, k)
        params[f"bias_hh_l{l}"] = jax.random.uniform(k4, (4 * H,), jnp.float32, -k, k)
    key, k1, k2 = jax.random.split(key, 3)
    kf = 1.0 / jnp.sqrt(jnp.float32(H))
    params["fc_weight"] = jax.random.uniform(k1, (output_size, H), jnp.float32, -kf, kf)
    params["fc_bias"] = jax.random.uniform(k2, (output_size,), jnp.float32, -kf, kf)
    return params


if __name__ == "__main__":
    # small shapes consistent with the module's forward: x is (batch, seq, input_size)
    B, T = 2, 8
    input_size, hidden_size, output_size, num_layers = 16, 32, 8, 2

    key = jax.random.PRNGKey(0)
    key, xk = jax.random.split(key)
    x = jax.random.normal(xk, (B, T, input_size), jnp.float32)
    params = init_params(
        key,
        input_size=input_size,
        hidden_size=hidden_size,
        output_size=output_size,
        num_layers=num_layers,
    )

    run = functools.partial(
        lstm_forward_pallas,
        num_layers=num_layers,
        hidden_size=hidden_size,
        output_size=output_size,
    )
    out = jax.block_until_ready(run(x, params))
    assert out.shape == (B, output_size)

    ref_kwargs = dict(num_layers=num_layers, hidden_size=hidden_size,
                      output_size=output_size)
    # precision-matched reference (bf16 matmul operands, f32 accumulation): tight check
    ref_bf16 = jax.block_until_ready(
        lstm_forward_ref(x, params, compute_dtype=jnp.bfloat16, **ref_kwargs))
    # pure-f32 reference (PyTorch-equivalent math): loose check for bf16 rounding
    ref_f32 = jax.block_until_ready(
        lstm_forward_ref(x, params, compute_dtype=jnp.float32, **ref_kwargs))

    assert jnp.allclose(out, ref_bf16, atol=5e-3, rtol=5e-3), (out, ref_bf16)
    assert jnp.allclose(out, ref_f32, atol=5e-2, rtol=5e-2), (out, ref_f32)

    print("KERNEL_OK")
</pallas_src>

<mosaic_0001>
module attributes {stable_mosaic.version = 11 : i64} {
  func.func @kernel(%arg0: i32, %arg1: memref<8x16x16xbf16, #tpu.memory_space<vmem>>, %arg2: memref<16x512xbf16, #tpu.memory_space<vmem>>, %arg3: memref<128x512xbf16, #tpu.memory_space<vmem>>, %arg4: memref<1x512xf32, #tpu.memory_space<vmem>>, %arg5: memref<128x512xbf16, #tpu.memory_space<vmem>>, %arg6: memref<128x512xbf16, #tpu.memory_space<vmem>>, %arg7: memref<1x512xf32, #tpu.memory_space<vmem>>, %arg8: memref<128x8xbf16, #tpu.memory_space<vmem>>, %arg9: memref<1x8xf32, #tpu.memory_space<vmem>>, %arg10: memref<16x8xf32, #tpu.memory_space<vmem>>, %arg11: memref<128x128xbf16, #tpu.memory_space<vmem>>, %arg12: memref<128x512xf32, #tpu.memory_space<vmem>>) attributes {dimension_semantics = [#tpu.dimension_semantics<parallel>], iteration_bounds = array<i64: 1>, scalar_prefetch = 0 : i64, scratch_operands = 2 : i64, tpu.core_type = #tpu.core_type<tc>, window_params = [{transform_indices = @transform_0, window_bounds = array<i64: 8, 16, 16>}, {pipeline_mode = #tpu.pipeline_mode<synchronous>, transform_indices = @transform_1, window_bounds = array<i64: 16, 512>}, {pipeline_mode = #tpu.pipeline_mode<synchronous>, transform_indices = @transform_2, window_bounds = array<i64: 128, 512>}, {pipeline_mode = #tpu.pipeline_mode<synchronous>, transform_indices = @transform_3, window_bounds = array<i64: 1, 512>}, {pipeline_mode = #tpu.pipeline_mode<synchronous>, transform_indices = @transform_4, window_bounds = array<i64: 128, 512>}, {pipeline_mode = #tpu.pipeline_mode<synchronous>, transform_indices = @transform_5, window_bounds = array<i64: 128, 512>}, {pipeline_mode = #tpu.pipeline_mode<synchronous>, transform_indices = @transform_6, window_bounds = array<i64: 1, 512>}, {pipeline_mode = #tpu.pipeline_mode<synchronous>, transform_indices = @transform_7, window_bounds = array<i64: 128, 8>}, {pipeline_mode = #tpu.pipeline_mode<synchronous>, transform_indices = @transform_8, window_bounds = array<i64: 1, 8>}, {transform_indices = @transform_9, window_bounds = array<i64: 16, 8>}]} {
    %c0 = arith.constant 0 : index
    %c0_0 = arith.constant 0 : index
    %0 = vector.load %arg3[%c0, %c0_0] : memref<128x512xbf16, #tpu.memory_space<vmem>>, vector<128x512xbf16>
    %c0_1 = arith.constant 0 : index
    %c0_2 = arith.constant 0 : index
    %1 = vector.load %arg4[%c0_1, %c0_2] : memref<1x512xf32, #tpu.memory_space<vmem>>, vector<1x512xf32>
    %cst = arith.constant 0.000000e+00 : f32
    %2 = vector.broadcast %cst : f32 to vector<16x128xf32>
    %cst_3 = arith.constant 0.000000e+00 : f32
    %3 = vector.broadcast %cst_3 : f32 to vector<16x128xf32>
    %c0_4 = arith.constant 0 : index
    %c0_5 = arith.constant 0 : index
    %c0_6 = arith.constant 0 : index
    %4 = vector.load %arg1[%c0_4, %c0_5, %c0_6] : memref<8x16x16xbf16, #tpu.memory_space<vmem>>, vector<8x16x16xbf16>
    %5 = vector.shape_cast %4 : vector<8x16x16xbf16> to vector<128x16xbf16>
    %c0_7 = arith.constant 0 : index
    %c0_8 = arith.constant 0 : index
    %6 = vector.load %arg2[%c0_7, %c0_8] : memref<16x512xbf16, #tpu.memory_space<vmem>>, vector<16x512xbf16>
    %cst_9 = arith.constant dense<0.000000e+00> : vector<128x512xf32>
    %7 = tpu.matmul %5, %6, %cst_9 {dimension_numbers = #tpu.dot_dimension_numbers<[1], [0], [0], [1], [0, 0, 1, 1], [], []>} : vector<128x16xbf16>, vector<16x512xbf16>, vector<128x512xf32> -> vector<128x512xf32>
    %8 = vector.broadcast %1 : vector<1x512xf32> to vector<128x512xf32>
    %9 = arith.addf %7, %8 : vector<128x512xf32>
    %c0_10 = arith.constant 0 : index
    %c0_11 = arith.constant 0 : index
    %10 = vector.load %arg12[%c0_10, %c0_11] : memref<128x512xf32, #tpu.memory_space<vmem>>, vector<128x512xf32>
    tpu.vector_store %arg12[%c0_10, %c0_11], %9 {strides = array<i32>} : memref<128x512xf32, #tpu.memory_space<vmem>>, vector<128x512xf32>,
    %c0_i32 = arith.constant 0 : i32
    %c16_i32 = arith.constant 16 : i32
    %11 = arith.muli %c0_i32, %c16_i32 : i32
    %12 = tpu.assume_multiple %11, 16 : i32
    %13 = arith.index_cast %12 : i32 to index
    %c0_12 = arith.constant 0 : index
    %14 = vector.load %arg12[%13, %c0_12] : memref<128x512xf32, #tpu.memory_space<vmem>>, vector<16x512xf32>
    %15 = arith.truncf %2 : vector<16x128xf32> to vector<16x128xbf16>
    %cst_13 = arith.constant dense<0.000000e+00> : vector<16x512xf32>
    %16 = tpu.matmul %15, %0, %cst_13 {dimension_numbers = #tpu.dot_dimension_numbers<[1], [0], [0], [1], [0, 0, 1, 1], [], []>} : vector<16x128xbf16>, vector<128x512xbf16>, vector<16x512xf32> -> vector<16x512xf32>
    %17 = arith.addf %14, %16 : vector<16x512xf32>
    %18 = vector.extract_strided_slice %17 {offsets = [0, 0], sizes = [16, 384], strides = [1, 1]} : vector<16x512xf32> to vector<16x384xf32>
    %19 = arith.negf %18 : vector<16x384xf32>
    %20 = math.exp %19 : vector<16x384xf32>
    %cst_14 = arith.constant 1.000000e+00 : f32
    %21 = vector.broadcast %cst_14 : f32 to vector<16x384xf32>
    %22 = arith.addf %21, %20 : vector<16x384xf32>
    %23 = arith.divf %21, %22 : vector<16x384xf32>
    %24 = vector.extract_strided_slice %23 {offsets = [0, 0], sizes = [16, 128], strides = [1, 1]} : vector<16x384xf32> to vector<16x128xf32>
    %25 = vector.extract_strided_slice %23 {offsets = [0, 128], sizes = [16, 128], strides = [1, 1]} : vector<16x384xf32> to vector<16x128xf32>
    %26 = vector.extract_strided_slice %23 {offsets = [0, 256], sizes = [16, 128], strides = [1, 1]} : vector<16x384xf32> to vector<16x128xf32>
    %27 = vector.extract_strided_slice %17 {offsets = [0, 384], sizes = [16, 128], strides = [1, 1]} : vector<16x512xf32> to vector<16x128xf32>
    %28 = math.tanh %27 : vector<16x128xf32>
    %29 = arith.mulf %25, %3 : vector<16x128xf32>
    %30 = arith.mulf %24, %28 : vector<16x128xf32>
    %31 = arith.addf %29, %30 : vector<16x128xf32>
    %32 = math.tanh %31 : vector<16x128xf32>
    %33 = arith.mulf %26, %32 : vector<16x128xf32>
    %c0_i32_15 = arith.constant 0 : i32
    %34 = arith.addi %c0_i32_15, %c0_i32 : i32
    %c16_i32_16 = arith.constant 16 : i32
    %35 = arith.muli %34, %c16_i32_16 : i32
    %36 = tpu.assume_multiple %35, 16 : i32
    %37 = arith.truncf %33 : vector<16x128xf32> to vector<16x128xbf16>
    %38 = arith.index_cast %36 : i32 to index
    %c0_17 = arith.constant 0 : index
    %39 = vector.load %arg11[%38, %c0_17] : memref<128x128xbf16, #tpu.memory_space<vmem>>, vector<16x128xbf16>
    tpu.vector_store %arg11[%38, %c0_17], %37 {strides = array<i32>} : memref<128x128xbf16, #tpu.memory_space<vmem>>, vector<16x128xbf16>,
    %c1_i32 = arith.constant 1 : i32
    %c16_i32_18 = arith.constant 16 : i32
    %40 = arith.muli %c1_i32, %c16_i32_18 : i32
    %41 = tpu.assume_multiple %40, 16 : i32
    %42 = arith.index_cast %41 : i32 to index
    %c0_19 = arith.constant 0 : index
    %43 = vector.load %arg12[%42, %c0_19] : memref<128x512xf32, #tpu.memory_space<vmem>>, vector<16x512xf32>
    %44 = arith.truncf %33 : vector<16x128xf32> to vector<16x128xbf16>
    %cst_20 = arith.constant dense<0.000000e+00> : vector<16x512xf32>
    %45 = tpu.matmul %44, %0, %cst_20 {dimension_numbers = #tpu.dot_dimension_numbers<[1], [0], [0], [1], [0, 0, 1, 1], [], []>} : vector<16x128xbf16>, vector<128x512xbf16>, vector<16x512xf32> -> vector<16x512xf32>
    %46 = arith.addf %43, %45 : vector<16x512xf32>
    %47 = vector.extract_strided_slice %46 {offsets = [0, 0], sizes = [16, 384], strides = [1, 1]} : vector<16x512xf32> to vector<16x384xf32>
    %48 = arith.negf %47 : vector<16x384xf32>
    %49 = math.exp %48 : vector<16x384xf32>
    %cst_21 = arith.constant 1.000000e+00 : f32
    %50 = vector.broadcast %cst_21 : f32 to vector<16x384xf32>
    %51 = arith.addf %50, %49 : vector<16x384xf32>
    %52 = arith.divf %50, %51 : vector<16x384xf32>
    %53 = vector.extract_strided_slice %52 {offsets = [0, 0], sizes = [16, 128], strides = [1, 1]} : vector<16x384xf32> to vector<16x128xf32>
    %54 = vector.extract_strided_slice %52 {offsets = [0, 128], sizes = [16, 128], strides = [1, 1]} : vector<16x384xf32> to vector<16x128xf32>
    %55 = vector.extract_strided_slice %52 {offsets = [0, 256], sizes = [16, 128], strides = [1, 1]} : vector<16x384xf32> to vector<16x128xf32>
    %56 = vector.extract_strided_slice %46 {offsets = [0, 384], sizes = [16, 128], strides = [1, 1]} : vector<16x512xf32> to vector<16x128xf32>
    %57 = math.tanh %56 : vector<16x128xf32>
    %58 = arith.mulf %54, %31 : vector<16x128xf32>
    %59 = arith.mulf %53, %57 : vector<16x128xf32>
    %60 = arith.addf %58, %59 : vector<16x128xf32>
    %61 = math.tanh %60 : vector<16x128xf32>
    %62 = arith.mulf %55, %61 : vector<16x128xf32>
    %c0_i32_22 = arith.constant 0 : i32
    %63 = arith.addi %c0_i32_22, %c1_i32 : i32
    %c16_i32_23 = arith.constant 16 : i32
    %64 = arith.muli %63, %c16_i32_23 : i32
    %65 = tpu.assume_multiple %64, 16 : i32
    %66 = arith.truncf %62 : vector<16x128xf32> to vector<16x128xbf16>
    %67 = arith.index_cast %65 : i32 to index
    %c0_24 = arith.constant 0 : index
    %68 = vector.load %arg11[%67, %c0_24] : memref<128x128xbf16, #tpu.memory_space<vmem>>, vector<16x128xbf16>
    tpu.vector_store %arg11[%67, %c0_24], %66 {strides = array<i32>} : memref<128x128xbf16, #tpu.memory_space<vmem>>, vector<16x128xbf16>,
    %c2_i32 = arith.constant 2 : i32
    %c16_i32_25 = arith.constant 16 : i32
    %69 = arith.muli %c2_i32, %c16_i32_25 : i32
    %70 = tpu.assume_multiple %69, 16 : i32
    %71 = arith.index_cast %70 : i32 to index
    %c0_26 = arith.constant 0 : index
    %72 = vector.load %arg12[%71, %c0_26] : memref<128x512xf32, #tpu.memory_space<vmem>>, vector<16x512xf32>
    %73 = arith.truncf %62 : vector<16x128xf32> to vector<16x128xbf16>
    %cst_27 = arith.constant dense<0.000000e+00> : vector<16x512xf32>
    %74 = tpu.matmul %73, %0, %cst_27 {dimension_numbers = #tpu.dot_dimension_numbers<[1], [0], [0], [1], [0, 0, 1, 1], [], []>} : vector<16x128xbf16>, vector<128x512xbf16>, vector<16x512xf32> -> vector<16x512xf32>
    %75 = arith.addf %72, %74 : vector<16x512xf32>
    %76 = vector.extract_strided_slice %75 {offsets = [0, 0], sizes = [16, 384], strides = [1, 1]} : vector<16x512xf32> to vector<16x384xf32>
    %77 = arith.negf %76 : vector<16x384xf32>
    %78 = math.exp %77 : vector<16x384xf32>
    %cst_28 = arith.constant 1.000000e+00 : f32
    %79 = vector.broadcast %cst_28 : f32 to vector<16x384xf32>
    %80 = arith.addf %79, %78 : vector<16x384xf32>
    %81 = arith.divf %79, %80 : vector<16x384xf32>
    %82 = vector.extract_strided_slice %81 {offsets = [0, 0], sizes = [16, 128], strides = [1, 1]} : vector<16x384xf32> to vector<16x128xf32>
    %83 = vector.extract_strided_slice %81 {offsets = [0, 128], sizes = [16, 128], strides = [1, 1]} : vector<16x384xf32> to vector<16x128xf32>
    %84 = vector.extract_strided_slice %81 {offsets = [0, 256], sizes = [16, 128], strides = [1, 1]} : vector<16x384xf32> to vector<16x128xf32>
    %85 = vector.extract_strided_slice %75 {offsets = [0, 384], sizes = [16, 128], strides = [1, 1]} : vector<16x512xf32> to vector<16x128xf32>
    %86 = math.tanh %85 : vector<16x128xf32>
    %87 = arith.mulf %83, %60 : vector<16x128xf32>
    %88 = arith.mulf %82, %86 : vector<16x128xf32>
    %89 = arith.addf %87, %88 : vector<16x128xf32>
    %90 = math.tanh %89 : vector<16x128xf32>
    %91 = arith.mulf %84, %90 : vector<16x128xf32>
    %c0_i32_29 = arith.constant 0 : i32
    %92 = arith.addi %c0_i32_29, %c2_i32 : i32
    %c16_i32_30 = arith.constant 16 : i32
    %93 = arith.muli %92, %c16_i32_30 : i32
    %94 = tpu.assume_multiple %93, 16 : i32
    %95 = arith.truncf %91 : vector<16x128xf32> to vector<16x128xbf16>
    %96 = arith.index_cast %94 : i32 to index
    %c0_31 = arith.constant 0 : index
    %97 = vector.load %arg11[%96, %c0_31] : memref<128x128xbf16, #tpu.memory_space<vmem>>, vector<16x128xbf16>
    tpu.vector_store %arg11[%96, %c0_31], %95 {strides = array<i32>} : memref<128x128xbf16, #tpu.memory_space<vmem>>, vector<16x128xbf16>,
    %c3_i32 = arith.constant 3 : i32
    %c16_i32_32 = arith.constant 16 : i32
    %98 = arith.muli %c3_i32, %c16_i32_32 : i32
    %99 = tpu.assume_multiple %98, 16 : i32
    %100 = arith.index_cast %99 : i32 to index
    %c0_33 = arith.constant 0 : index
    %101 = vector.load %arg12[%100, %c0_33] : memref<128x512xf32, #tpu.memory_space<vmem>>, vector<16x512xf32>
    %102 = arith.truncf %91 : vector<16x128xf32> to vector<16x128xbf16>
    %cst_34 = arith.constant dense<0.000000e+00> : vector<16x512xf32>
    %103 = tpu.matmul %102, %0, %cst_34 {dimension_numbers = #tpu.dot_dimension_numbers<[1], [0], [0], [1], [0, 0, 1, 1], [], []>} : vector<16x128xbf16>, vector<128x512xbf16>, vector<16x512xf32> -> vector<16x512xf32>
    %104 = arith.addf %101, %103 : vector<16x512xf32>
    %105 = vector.extract_strided_slice %104 {offsets = [0, 0], sizes = [16, 384], strides = [1, 1]} : vector<16x512xf32> to vector<16x384xf32>
    %106 = arith.negf %105 : vector<16x384xf32>
    %107 = math.exp %106 : vector<16x384xf32>
    %cst_35 = arith.constant 1.000000e+00 : f32
    %108 = vector.broadcast %cst_35 : f32 to vector<16x384xf32>
    %109 = arith.addf %108, %107 : vector<16x384xf32>
    %110 = arith.divf %108, %109 : vector<16x384xf32>
    %111 = vector.extract_strided_slice %110 {offsets = [0, 0], sizes = [16, 128], strides = [1, 1]} : vector<16x384xf32> to vector<16x128xf32>
    %112 = vector.extract_strided_slice %110 {offsets = [0, 128], sizes = [16, 128], strides = [1, 1]} : vector<16x384xf32> to vector<16x128xf32>
    %113 = vector.extract_strided_slice %110 {offsets = [0, 256], sizes = [16, 128], strides = [1, 1]} : vector<16x384xf32> to vector<16x128xf32>
    %114 = vector.extract_strided_slice %104 {offsets = [0, 384], sizes = [16, 128], strides = [1, 1]} : vector<16x512xf32> to vector<16x128xf32>
    %115 = math.tanh %114 : vector<16x128xf32>
    %116 = arith.mulf %112, %89 : vector<16x128xf32>
    %117 = arith.mulf %111, %115 : vector<16x128xf32>
    %118 = arith.addf %116, %117 : vector<16x128xf32>
    %119 = math.tanh %118 : vector<16x128xf32>
    %120 = arith.mulf %113, %119 : vector<16x128xf32>
    %c0_i32_36 = arith.constant 0 : i32
    %121 = arith.addi %c0_i32_36, %c3_i32 : i32
    %c16_i32_37 = arith.constant 16 : i32
    %122 = arith.muli %121, %c16_i32_37 : i32
    %123 = tpu.assume_multiple %122, 16 : i32
    %124 = arith.truncf %120 : vector<16x128xf32> to vector<16x128xbf16>
    %125 = arith.index_cast %123 : i32 to index
    %c0_38 = arith.constant 0 : index
    %126 = vector.load %arg11[%125, %c0_38] : memref<128x128xbf16, #tpu.memory_space<vmem>>, vector<16x128xbf16>
    tpu.vector_store %arg11[%125, %c0_38], %124 {strides = array<i32>} : memref<128x128xbf16, #tpu.memory_space<vmem>>, vector<16x128xbf16>,
    %c4_i32 = arith.constant 4 : i32
    %c16_i32_39 = arith.constant 16 : i32
    %127 = arith.muli %c4_i32, %c16_i32_39 : i32
    %128 = tpu.assume_multiple %127, 16 : i32
    %129 = arith.index_cast %128 : i32 to index
    %c0_40 = arith.constant 0 : index
    %130 = vector.load %arg12[%129, %c0_40] : memref<128x512xf32, #tpu.memory_space<vmem>>, vector<16x512xf32>
    %131 = arith.truncf %120 : vector<16x128xf32> to vector<16x128xbf16>
    %cst_41 = arith.constant dense<0.000000e+00> : vector<16x512xf32>
    %132 = tpu.matmul %131, %0, %cst_41 {dimension_numbers = #tpu.dot_dimension_numbers<[1], [0], [0], [1], [0, 0, 1, 1], [], []>} : vector<16x128xbf16>, vector<128x512xbf16>, vector<16x512xf32> -> vector<16x512xf32>
    %133 = arith.addf %130, %132 : vector<16x512xf32>
    %134 = vector.extract_strided_slice %133 {offsets = [0, 0], sizes = [16, 384], strides = [1, 1]} : vector<16x512xf32> to vector<16x384xf32>
    %135 = arith.negf %134 : vector<16x384xf32>
    %136 = math.exp %135 : vector<16x384xf32>
    %cst_42 = arith.constant 1.000000e+00 : f32
    %137 = vector.broadcast %cst_42 : f32 to vector<16x384xf32>
    %138 = arith.addf %137, %136 : vector<16x384xf32>
    %139 = arith.divf %137, %138 : vector<16x384xf32>
    %140 = vector.extract_strided_slice %139 {offsets = [0, 0], sizes = [16, 128], strides = [1, 1]} : vector<16x384xf32> to vector<16x128xf32>
    %141 = vector.extract_strided_slice %139 {offsets = [0, 128], sizes = [16, 128], strides = [1, 1]} : vector<16x384xf32> to vector<16x128xf32>
    %142 = vector.extract_strided_slice %139 {offsets = [0, 256], sizes = [16, 128], strides = [1, 1]} : vector<16x384xf32> to vector<16x128xf32>
    %143 = vector.extract_strided_slice %133 {offsets = [0, 384], sizes = [16, 128], strides = [1, 1]} : vector<16x512xf32> to vector<16x128xf32>
    %144 = math.tanh %143 : vector<16x128xf32>
    %145 = arith.mulf %141, %118 : vector<16x128xf32>
    %146 = arith.mulf %140, %144 : vector<16x128xf32>
    %147 = arith.addf %145, %146 : vector<16x128xf32>
    %148 = math.tanh %147 : vector<16x128xf32>
    %149 = arith.mulf %142, %148 : vector<16x128xf32>
    %c0_i32_43 = arith.constant 0 : i32
    %150 = arith.addi %c0_i32_43, %c4_i32 : i32
    %c16_i32_44 = arith.constant 16 : i32
    %151 = arith.muli %150, %c16_i32_44 : i32
    %152 = tpu.assume_multiple %151, 16 : i32
    %153 = arith.truncf %149 : vector<16x128xf32> to vector<16x128xbf16>
    %154 = arith.index_cast %152 : i32 to index
    %c0_45 = arith.constant 0 : index
    %155 = vector.load %arg11[%154, %c0_45] : memref<128x128xbf16, #tpu.memory_space<vmem>>, vector<16x128xbf16>
    tpu.vector_store %arg11[%154, %c0_45], %153 {strides = array<i32>} : memref<128x128xbf16, #tpu.memory_space<vmem>>, vector<16x128xbf16>,
    %c5_i32 = arith.constant 5 : i32
    %c16_i32_46 = arith.constant 16 : i32
    %156 = arith.muli %c5_i32, %c16_i32_46 : i32
    %157 = tpu.assume_multiple %156, 16 : i32
    %158 = arith.index_cast %157 : i32 to index
    %c0_47 = arith.constant 0 : index
    %159 = vector.load %arg12[%158, %c0_47] : memref<128x512xf32, #tpu.memory_space<vmem>>, vector<16x512xf32>
    %160 = arith.truncf %149 : vector<16x128xf32> to vector<16x128xbf16>
    %cst_48 = arith.constant dense<0.000000e+00> : vector<16x512xf32>
    %161 = tpu.matmul %160, %0, %cst_48 {dimension_numbers = #tpu.dot_dimension_numbers<[1], [0], [0], [1], [0, 0, 1, 1], [], []>} : vector<16x128xbf16>, vector<128x512xbf16>, vector<16x512xf32> -> vector<16x512xf32>
    %162 = arith.addf %159, %161 : vector<16x512xf32>
    %163 = vector.extract_strided_slice %162 {offsets = [0, 0], sizes = [16, 384], strides = [1, 1]} : vector<16x512xf32> to vector<16x384xf32>
    %164 = arith.negf %163 : vector<16x384xf32>
    %165 = math.exp %164 : vector<16x384xf32>
    %cst_49 = arith.constant 1.000000e+00 : f32
    %166 = vector.broadcast %cst_49 : f32 to vector<16x384xf32>
    %167 = arith.addf %166, %165 : vector<16x384xf32>
    %168 = arith.divf %166, %167 : vector<16x384xf32>
    %169 = vector.extract_strided_slice %168 {offsets = [0, 0], sizes = [16, 128], strides = [1, 1]} : vector<16x384xf32> to vector<16x128xf32>
    %170 = vector.extract_strided_slice %168 {offsets = [0, 128], sizes = [16, 128], strides = [1, 1]} : vector<16x384xf32> to vector<16x128xf32>
    %171 = vector.extract_strided_slice %168 {offsets = [0, 256], sizes = [16, 128], strides = [1, 1]} : vector<16x384xf32> to vector<16x128xf32>
    %172 = vector.extract_strided_slice %162 {offsets = [0, 384], sizes = [16, 128], strides = [1, 1]} : vector<16x512xf32> to vector<16x128xf32>
    %173 = math.tanh %172 : vector<16x128xf32>
    %174 = arith.mulf %170, %147 : vector<16x128xf32>
    %175 = arith.mulf %169, %173 : vector<16x128xf32>
    %176 = arith.addf %174, %175 : vector<16x128xf32>
    %177 = math.tanh %176 : vector<16x128xf32>
    %178 = arith.mulf %171, %177 : vector<16x128xf32>
    %c0_i32_50 = arith.constant 0 : i32
    %179 = arith.addi %c0_i32_50, %c5_i32 : i32
    %c16_i32_51 = arith.constant 16 : i32
    %180 = arith.muli %179, %c16_i32_51 : i32
    %181 = tpu.assume_multiple %180, 16 : i32
    %182 = arith.truncf %178 : vector<16x128xf32> to vector<16x128xbf16>
    %183 = arith.index_cast %181 : i32 to index
    %c0_52 = arith.constant 0 : index
    %184 = vector.load %arg11[%183, %c0_52] : memref<128x128xbf16, #tpu.memory_space<vmem>>, vector<16x128xbf16>
    tpu.vector_store %arg11[%183, %c0_52], %182 {strides = array<i32>} : memref<128x128xbf16, #tpu.memory_space<vmem>>, vector<16x128xbf16>,
    %c6_i32 = arith.constant 6 : i32
    %c16_i32_53 = arith.constant 16 : i32
    %185 = arith.muli %c6_i32, %c16_i32_53 : i32
    %186 = tpu.assume_multiple %185, 16 : i32
    %187 = arith.index_cast %186 : i32 to index
    %c0_54 = arith.constant 0 : index
    %188 = vector.load %arg12[%187, %c0_54] : memref<128x512xf32, #tpu.memory_space<vmem>>, vector<16x512xf32>
    %189 = arith.truncf %178 : vector<16x128xf32> to vector<16x128xbf16>
    %cst_55 = arith.constant dense<0.000000e+00> : vector<16x512xf32>
    %190 = tpu.matmul %189, %0, %cst_55 {dimension_numbers = #tpu.dot_dimension_numbers<[1], [0], [0], [1], [0, 0, 1, 1], [], []>} : vector<16x128xbf16>, vector<128x512xbf16>, vector<16x512xf32> -> vector<16x512xf32>
    %191 = arith.addf %188, %190 : vector<16x512xf32>
    %192 = vector.extract_strided_slice %191 {offsets = [0, 0], sizes = [16, 384], strides = [1, 1]} : vector<16x512xf32> to vector<16x384xf32>
    %193 = arith.negf %192 : vector<16x384xf32>
    %194 = math.exp %193 : vector<16x384xf32>
    %cst_56 = arith.constant 1.000000e+00 : f32
    %195 = vector.broadcast %cst_56 : f32 to vector<16x384xf32>
    %196 = arith.addf %195, %194 : vector<16x384xf32>
    %197 = arith.divf %195, %196 : vector<16x384xf32>
    %198 = vector.extract_strided_slice %197 {offsets = [0, 0], sizes = [16, 128], strides = [1, 1]} : vector<16x384xf32> to vector<16x128xf32>
    %199 = vector.extract_strided_slice %197 {offsets = [0, 128], sizes = [16, 128], strides = [1, 1]} : vector<16x384xf32> to vector<16x128xf32>
    %200 = vector.extract_strided_slice %197 {offsets = [0, 256], sizes = [16, 128], strides = [1, 1]} : vector<16x384xf32> to vector<16x128xf32>
    %201 = vector.extract_strided_slice %191 {offsets = [0, 384], sizes = [16, 128], strides = [1, 1]} : vector<16x512xf32> to vector<16x128xf32>
    %202 = math.tanh %201 : vector<16x128xf32>
    %203 = arith.mulf %199, %176 : vector<16x128xf32>
    %204 = arith.mulf %198, %202 : vector<16x128xf32>
    %205 = arith.addf %203, %204 : vector<16x128xf32>
    %206 = math.tanh %205 : vector<16x128xf32>
    %207 = arith.mulf %200, %206 : vector<16x128xf32>
    %c0_i32_57 = arith.constant 0 : i32
    %208 = arith.addi %c0_i32_57, %c6_i32 : i32
    %c16_i32_58 = arith.constant 16 : i32
    %209 = arith.muli %208, %c16_i32_58 : i32
    %210 = tpu.assume_multiple %209, 16 : i32
    %211 = arith.truncf %207 : vector<16x128xf32> to vector<16x128xbf16>
    %212 = arith.index_cast %210 : i32 to index
    %c0_59 = arith.constant 0 : index
    %213 = vector.load %arg11[%212, %c0_59] : memref<128x128xbf16, #tpu.memory_space<vmem>>, vector<16x128xbf16>
    tpu.vector_store %arg11[%212, %c0_59], %211 {strides = array<i32>} : memref<128x128xbf16, #tpu.memory_space<vmem>>, vector<16x128xbf16>,
    %c7_i32 = arith.constant 7 : i32
    %c16_i32_60 = arith.constant 16 : i32
    %214 = arith.muli %c7_i32, %c16_i32_60 : i32
    %215 = tpu.assume_multiple %214, 16 : i32
    %216 = arith.index_cast %215 : i32 to index
    %c0_61 = arith.constant 0 : index
    %217 = vector.load %arg12[%216, %c0_61] : memref<128x512xf32, #tpu.memory_space<vmem>>, vector<16x512xf32>
    %218 = arith.truncf %207 : vector<16x128xf32> to vector<16x128xbf16>
    %cst_62 = arith.constant dense<0.000000e+00> : vector<16x512xf32>
    %219 = tpu.matmul %218, %0, %cst_62 {dimension_numbers = #tpu.dot_dimension_numbers<[1], [0], [0], [1], [0, 0, 1, 1], [], []>} : vector<16x128xbf16>, vector<128x512xbf16>, vector<16x512xf32> -> vector<16x512xf32>
    %220 = arith.addf %217, %219 : vector<16x512xf32>
    %221 = vector.extract_strided_slice %220 {offsets = [0, 0], sizes = [16, 384], strides = [1, 1]} : vector<16x512xf32> to vector<16x384xf32>
    %222 = arith.negf %221 : vector<16x384xf32>
    %223 = math.exp %222 : vector<16x384xf32>
    %cst_63 = arith.constant 1.000000e+00 : f32
    %224 = vector.broadcast %cst_63 : f32 to vector<16x384xf32>
    %225 = arith.addf %224, %223 : vector<16x384xf32>
    %226 = arith.divf %224, %225 : vector<16x384xf32>
    %227 = vector.extract_strided_slice %226 {offsets = [0, 0], sizes = [16, 128], strides = [1, 1]} : vector<16x384xf32> to vector<16x128xf32>
    %228 = vector.extract_strided_slice %226 {offsets = [0, 128], sizes = [16, 128], strides = [1, 1]} : vector<16x384xf32> to vector<16x128xf32>
    %229 = vector.extract_strided_slice %226 {offsets = [0, 256], sizes = [16, 128], strides = [1, 1]} : vector<16x384xf32> to vector<16x128xf32>
    %230 = vector.extract_strided_slice %220 {offsets = [0, 384], sizes = [16, 128], strides = [1, 1]} : vector<16x512xf32> to vector<16x128xf32>
    %231 = math.tanh %230 : vector<16x128xf32>
    %232 = arith.mulf %228, %205 : vector<16x128xf32>
    %233 = arith.mulf %227, %231 : vector<16x128xf32>
    %234 = arith.addf %232, %233 : vector<16x128xf32>
    %235 = math.tanh %234 : vector<16x128xf32>
    %236 = arith.mulf %229, %235 : vector<16x128xf32>
    %c0_i32_64 = arith.constant 0 : i32
    %237 = arith.addi %c0_i32_64, %c7_i32 : i32
    %c16_i32_65 = arith.constant 16 : i32
    %238 = arith.muli %237, %c16_i32_65 : i32
    %239 = tpu.assume_multiple %238, 16 : i32
    %240 = arith.truncf %236 : vector<16x128xf32> to vector<16x128xbf16>
    %241 = arith.index_cast %239 : i32 to index
    %c0_66 = arith.constant 0 : index
    %242 = vector.load %arg11[%241, %c0_66] : memref<128x128xbf16, #tpu.memory_space<vmem>>, vector<16x128xbf16>
    tpu.vector_store %arg11[%241, %c0_66], %240 {strides = array<i32>} : memref<128x128xbf16, #tpu.memory_space<vmem>>, vector<16x128xbf16>,
    %c8_i32 = arith.constant 8 : i32
    %c0_67 = arith.constant 0 : index
    %c0_68 = arith.constant 0 : index
    %243 = vector.load %arg6[%c0_67, %c0_68] : memref<128x512xbf16, #tpu.memory_space<vmem>>, vector<128x512xbf16>
    %c0_69 = arith.constant 0 : index
    %c0_70 = arith.constant 0 : index
    %244 = vector.load %arg7[%c0_69, %c0_70] : memref<1x512xf32, #tpu.memory_space<vmem>>, vector<1x512xf32>
    %cst_71 = arith.constant 0.000000e+00 : f32
    %245 = vector.broadcast %cst_71 : f32 to vector<16x128xf32>
    %cst_72 = arith.constant 0.000000e+00 : f32
    %246 = vector.broadcast %cst_72 : f32 to vector<16x128xf32>
    %c0_73 = arith.constant 0 : index
    %c0_74 = arith.constant 0 : index
    %247 = vector.load %arg11[%c0_73, %c0_74] : memref<128x128xbf16, #tpu.memory_space<vmem>>, vector<128x128xbf16>
    %c0_75 = arith.constant 0 : index
    %c0_76 = arith.constant 0 : index
    %248 = vector.load %arg5[%c0_75, %c0_76] : memref<128x512xbf16, #tpu.memory_space<vmem>>, vector<128x512xbf16>
    %cst_77 = arith.constant dense<0.000000e+00> : vector<128x512xf32>
    %249 = tpu.matmul %247, %248, %cst_77 {dimension_numbers = #tpu.dot_dimension_numbers<[1], [0], [0], [1], [0, 0, 1, 1], [], []>} : vector<128x128xbf16>, vector<128x512xbf16>, vector<128x512xf32> -> vector<128x512xf32>
    %250 = vector.broadcast %244 : vector<1x512xf32> to vector<128x512xf32>
    %251 = arith.addf %249, %250 : vector<128x512xf32>
    %c0_78 = arith.constant 0 : index
    %c0_79 = arith.constant 0 : index
    %252 = vector.load %arg12[%c0_78, %c0_79] : memref<128x512xf32, #tpu.memory_space<vmem>>, vector<128x512xf32>
    tpu.vector_store %arg12[%c0_78, %c0_79], %251 {strides = array<i32>} : memref<128x512xf32, #tpu.memory_space<vmem>>, vector<128x512xf32>,
    %c0_i32_80 = arith.constant 0 : i32
    %c16_i32_81 = arith.constant 16 : i32
    %253 = arith.muli %c0_i32_80, %c16_i32_81 : i32
    %254 = tpu.assume_multiple %253, 16 : i32
    %255 = arith.index_cast %254 : i32 to index
    %c0_82 = arith.constant 0 : index
    %256 = vector.load %arg12[%255, %c0_82] : memref<128x512xf32, #tpu.memory_space<vmem>>, vector<16x512xf32>
    %257 = arith.truncf %245 : vector<16x128xf32> to vector<16x128xbf16>
    %cst_83 = arith.constant dense<0.000000e+00> : vector<16x512xf32>
    %258 = tpu.matmul %257, %243, %cst_83 {dimension_numbers = #tpu.dot_dimension_numbers<[1], [0], [0], [1], [0, 0, 1, 1], [], []>} : vector<16x128xbf16>, vector<128x512xbf16>, vector<16x512xf32> -> vector<16x512xf32>
    %259 = arith.addf %256, %258 : vector<16x512xf32>
    %260 = vector.extract_strided_slice %259 {offsets = [0, 0], sizes = [16, 384], strides = [1, 1]} : vector<16x512xf32> to vector<16x384xf32>
    %261 = arith.negf %260 : vector<16x384xf32>
    %262 = math.exp %261 : vector<16x384xf32>
    %cst_84 = arith.constant 1.000000e+00 : f32
    %263 = vector.broadcast %cst_84 : f32 to vector<16x384xf32>
    %264 = arith.addf %263, %262 : vector<16x384xf32>
    %265 = arith.divf %263, %264 : vector<16x384xf32>
    %266 = vector.extract_strided_slice %265 {offsets = [0, 0], sizes = [16, 128], strides = [1, 1]} : vector<16x384xf32> to vector<16x128xf32>
    %267 = vector.extract_strided_slice %265 {offsets = [0, 128], sizes = [16, 128], strides = [1, 1]} : vector<16x384xf32> to vector<16x128xf32>
    %268 = vector.extract_strided_slice %265 {offsets = [0, 256], sizes = [16, 128], strides = [1, 1]} : vector<16x384xf32> to vector<16x128xf32>
    %269 = vector.extract_strided_slice %259 {offsets = [0, 384], sizes = [16, 128], strides = [1, 1]} : vector<16x512xf32> to vector<16x128xf32>
    %270 = math.tanh %269 : vector<16x128xf32>
    %271 = arith.mulf %267, %246 : vector<16x128xf32>
    %272 = arith.mulf %266, %270 : vector<16x128xf32>
    %273 = arith.addf %271, %272 : vector<16x128xf32>
    %274 = math.tanh %273 : vector<16x128xf32>
    %275 = arith.mulf %268, %274 : vector<16x128xf32>
    %c1_i32_85 = arith.constant 1 : i32
    %c16_i32_86 = arith.constant 16 : i32
    %276 = arith.muli %c1_i32_85, %c16_i32_86 : i32
    %277 = tpu.assume_multiple %276, 16 : i32
    %278 = arith.index_cast %277 : i32 to index
    %c0_87 = arith.constant 0 : index
    %279 = vector.load %arg12[%278, %c0_87] : memref<128x512xf32, #tpu.memory_space<vmem>>, vector<16x512xf32>
    %280 = arith.truncf %275 : vector<16x128xf32> to vector<16x128xbf16>
    %cst_88 = arith.constant dense<0.000000e+00> : vector<16x512xf32>
    %281 = tpu.matmul %280, %243, %cst_88 {dimension_numbers = #tpu.dot_dimension_numbers<[1], [0], [0], [1], [0, 0, 1, 1], [], []>} : vector<16x128xbf16>, vector<128x512xbf16>, vector<16x512xf32> -> vector<16x512xf32>
    %282 = arith.addf %279, %281 : vector<16x512xf32>
    %283 = vector.extract_strided_slice %282 {offsets = [0, 0], sizes = [16, 384], strides = [1, 1]} : vector<16x512xf32> to vector<16x384xf32>
    %284 = arith.negf %283 : vector<16x384xf32>
    %285 = math.exp %284 : vector<16x384xf32>
    %cst_89 = arith.constant 1.000000e+00 : f32
    %286 = vector.broadcast %cst_89 : f32 to vector<16x384xf32>
    %287 = arith.addf %286, %285 : vector<16x384xf32>
    %288 = arith.divf %286, %287 : vector<16x384xf32>
    %289 = vector.extract_strided_slice %288 {offsets = [0, 0], sizes = [16, 128], strides = [1, 1]} : vector<16x384xf32> to vector<16x128xf32>
    %290 = vector.extract_strided_slice %288 {offsets = [0, 128], sizes = [16, 128], strides = [1, 1]} : vector<16x384xf32> to vector<16x128xf32>
    %291 = vector.extract_strided_slice %288 {offsets = [0, 256], sizes = [16, 128], strides = [1, 1]} : vector<16x384xf32> to vector<16x128xf32>
    %292 = vector.extract_strided_slice %282 {offsets = [0, 384], sizes = [16, 128], strides = [1, 1]} : vector<16x512xf32> to vector<16x128xf32>
    %293 = math.tanh %292 : vector<16x128xf32>
    %294 = arith.mulf %290, %273 : vector<16x128xf32>
    %295 = arith.mulf %289, %293 : vector<16x128xf32>
    %296 = arith.addf %294, %295 : vector<16x128xf32>
    %297 = math.tanh %296 : vector<16x128xf32>
    %298 = arith.mulf %291, %297 : vector<16x128xf32>
    %c2_i32_90 = arith.constant 2 : i32
    %c16_i32_91 = arith.constant 16 : i32
    %299 = arith.muli %c2_i32_90, %c16_i32_91 : i32
    %300 = tpu.assume_multiple %299, 16 : i32
    %301 = arith.index_cast %300 : i32 to index
    %c0_92 = arith.constant 0 : index
    %302 = vector.load %arg12[%301, %c0_92] : memref<128x512xf32, #tpu.memory_space<vmem>>, vector<16x512xf32>
    %303 = arith.truncf %298 : vector<16x128xf32> to vector<16x128xbf16>
    %cst_93 = arith.constant dense<0.000000e+00> : vector<16x512xf32>
    %304 = tpu.matmul %303, %243, %cst_93 {dimension_numbers = #tpu.dot_dimension_numbers<[1], [0], [0], [1], [0, 0, 1, 1], [], []>} : vector<16x128xbf16>, vector<128x512xbf16>, vector<16x512xf32> -> vector<16x512xf32>
    %305 = arith.addf %302, %304 : vector<16x512xf32>
    %306 = vector.extract_strided_slice %305 {offsets = [0, 0], sizes = [16, 384], strides = [1, 1]} : vector<16x512xf32> to vector<16x384xf32>
    %307 = arith.negf %306 : vector<16x384xf32>
    %308 = math.exp %307 : vector<16x384xf32>
    %cst_94 = arith.constant 1.000000e+00 : f32
    %309 = vector.broadcast %cst_94 : f32 to vector<16x384xf32>
    %310 = arith.addf %309, %308 : vector<16x384xf32>
    %311 = arith.divf %309, %310 : vector<16x384xf32>
    %312 = vector.extract_strided_slice %311 {offsets = [0, 0], sizes = [16, 128], strides = [1, 1]} : vector<16x384xf32> to vector<16x128xf32>
    %313 = vector.extract_strided_slice %311 {offsets = [0, 128], sizes = [16, 128], strides = [1, 1]} : vector<16x384xf32> to vector<16x128xf32>
    %314 = vector.extract_strided_slice %311 {offsets = [0, 256], sizes = [16, 128], strides = [1, 1]} : vector<16x384xf32> to vector<16x128xf32>
    %315 = vector.extract_strided_slice %305 {offsets = [0, 384], sizes = [16, 128], strides = [1, 1]} : vector<16x512xf32> to vector<16x128xf32>
    %316 = math.tanh %315 : vector<16x128xf32>
    %317 = arith.mulf %313, %296 : vector<16x128xf32>
    %318 = arith.mulf %312, %316 : vector<16x128xf32>
    %319 = arith.addf %317, %318 : vector<16x128xf32>
    %320 = math.tanh %319 : vector<16x128xf32>
    %321 = arith.mulf %314, %320 : vector<16x128xf32>
    %c3_i32_95 = arith.constant 3 : i32
    %c16_i32_96 = arith.constant 16 : i32
    %322 = arith.muli %c3_i32_95, %c16_i32_96 : i32
    %323 = tpu.assume_multiple %322, 16 : i32
    %324 = arith.index_cast %323 : i32 to index
    %c0_97 = arith.constant 0 : index
    %325 = vector.load %arg12[%324, %c0_97] : memref<128x512xf32, #tpu.memory_space<vmem>>, vector<16x512xf32>
    %326 = arith.truncf %321 : vector<16x128xf32> to vector<16x128xbf16>
    %cst_98 = arith.constant dense<0.000000e+00> : vector<16x512xf32>
    %327 = tpu.matmul %326, %243, %cst_98 {dimension_numbers = #tpu.dot_dimension_numbers<[1], [0], [0], [1], [0, 0, 1, 1], [], []>} : vector<16x128xbf16>, vector<128x512xbf16>, vector<16x512xf32> -> vector<16x512xf32>
    %328 = arith.addf %325, %327 : vector<16x512xf32>
    %329 = vector.extract_strided_slice %328 {offsets = [0, 0], sizes = [16, 384], strides = [1, 1]} : vector<16x512xf32> to vector<16x384xf32>
    %330 = arith.negf %329 : vector<16x384xf32>
    %331 = math.exp %330 : vector<16x384xf32>
    %cst_99 = arith.constant 1.000000e+00 : f32
    %332 = vector.broadcast %cst_99 : f32 to vector<16x384xf32>
    %333 = arith.addf %332, %331 : vector<16x384xf32>
    %334 = arith.divf %332, %333 : vector<16x384xf32>
    %335 = vector.extract_strided_slice %334 {offsets = [0, 0], sizes = [16, 128], strides = [1, 1]} : vector<16x384xf32> to vector<16x128xf32>
    %336 = vector.extract_strided_slice %334 {offsets = [0, 128], sizes = [16, 128], strides = [1, 1]} : vector<16x384xf32> to vector<16x128xf32>
    %337 = vector.extract_strided_slice %334 {offsets = [0, 256], sizes = [16, 128], strides = [1, 1]} : vector<16x384xf32> to vector<16x128xf32>
    %338 = vector.extract_strided_slice %328 {offsets = [0, 384], sizes = [16, 128], strides = [1, 1]} : vector<16x512xf32> to vector<16x128xf32>
    %339 = math.tanh %338 : vector<16x128xf32>
    %340 = arith.mulf %336, %319 : vector<16x128xf32>
    %341 = arith.mulf %335, %339 : vector<16x128xf32>
    %342 = arith.addf %340, %341 : vector<16x128xf32>
    %343 = math.tanh %342 : vector<16x128xf32>
    %344 = arith.mulf %337, %343 : vector<16x128xf32>
    %c4_i32_100 = arith.constant 4 : i32
    %c16_i32_101 = arith.constant 16 : i32
    %345 = arith.muli %c4_i32_100, %c16_i32_101 : i32
    %346 = tpu.assume_multiple %345, 16 : i32
    %347 = arith.index_cast %346 : i32 to index
    %c0_102 = arith.constant 0 : index
    %348 = vector.load %arg12[%347, %c0_102] : memref<128x512xf32, #tpu.memory_space<vmem>>, vector<16x512xf32>
    %349 = arith.truncf %344 : vector<16x128xf32> to vector<16x128xbf16>
    %cst_103 = arith.constant dense<0.000000e+00> : vector<16x512xf32>
    %350 = tpu.matmul %349, %243, %cst_103 {dimension_numbers = #tpu.dot_dimension_numbers<[1], [0], [0], [1], [0, 0, 1, 1], [], []>} : vector<16x128xbf16>, vector<128x512xbf16>, vector<16x512xf32> -> vector<16x512xf32>
    %351 = arith.addf %348, %350 : vector<16x512xf32>
    %352 = vector.extract_strided_slice %351 {offsets = [0, 0], sizes = [16, 384], strides = [1, 1]} : vector<16x512xf32> to vector<16x384xf32>
    %353 = arith.negf %352 : vector<16x384xf32>
    %354 = math.exp %353 : vector<16x384xf32>
    %cst_104 = arith.constant 1.000000e+00 : f32
    %355 = vector.broadcast %cst_104 : f32 to vector<16x384xf32>
    %356 = arith.addf %355, %354 : vector<16x384xf32>
    %357 = arith.divf %355, %356 : vector<16x384xf32>
    %358 = vector.extract_strided_slice %357 {offsets = [0, 0], sizes = [16, 128], strides = [1, 1]} : vector<16x384xf32> to vector<16x128xf32>
    %359 = vector.extract_strided_slice %357 {offsets = [0, 128], sizes = [16, 128], strides = [1, 1]} : vector<16x384xf32> to vector<16x128xf32>
    %360 = vector.extract_strided_slice %357 {offsets = [0, 256], sizes = [16, 128], strides = [1, 1]} : vector<16x384xf32> to vector<16x128xf32>
    %361 = vector.extract_strided_slice %351 {offsets = [0, 384], sizes = [16, 128], strides = [1, 1]} : vector<16x512xf32> to vector<16x128xf32>
    %362 = math.tanh %361 : vector<16x128xf32>
    %363 = arith.mulf %359, %342 : vector<16x128xf32>
    %364 = arith.mulf %358, %362 : vector<16x128xf32>
    %365 = arith.addf %363, %364 : vector<16x128xf32>
    %366 = math.tanh %365 : vector<16x128xf32>
    %367 = arith.mulf %360, %366 : vector<16x128xf32>
    %c5_i32_105 = arith.constant 5 : i32
    %c16_i32_106 = arith.constant 16 : i32
    %368 = arith.muli %c5_i32_105, %c16_i32_106 : i32
    %369 = tpu.assume_multiple %368, 16 : i32
    %370 = arith.index_cast %369 : i32 to index
    %c0_107 = arith.constant 0 : index
    %371 = vector.load %arg12[%370, %c0_107] : memref<128x512xf32, #tpu.memory_space<vmem>>, vector<16x512xf32>
    %372 = arith.truncf %367 : vector<16x128xf32> to vector<16x128xbf16>
    %cst_108 = arith.constant dense<0.000000e+00> : vector<16x512xf32>
    %373 = tpu.matmul %372, %243, %cst_108 {dimension_numbers = #tpu.dot_dimension_numbers<[1], [0], [0], [1], [0, 0, 1, 1], [], []>} : vector<16x128xbf16>, vector<128x512xbf16>, vector<16x512xf32> -> vector<16x512xf32>
    %374 = arith.addf %371, %373 : vector<16x512xf32>
    %375 = vector.extract_strided_slice %374 {offsets = [0, 0], sizes = [16, 384], strides = [1, 1]} : vector<16x512xf32> to vector<16x384xf32>
    %376 = arith.negf %375 : vector<16x384xf32>
    %377 = math.exp %376 : vector<16x384xf32>
    %cst_109 = arith.constant 1.000000e+00 : f32
    %378 = vector.broadcast %cst_109 : f32 to vector<16x384xf32>
    %379 = arith.addf %378, %377 : vector<16x384xf32>
    %380 = arith.divf %378, %379 : vector<16x384xf32>
    %381 = vector.extract_strided_slice %380 {offsets = [0, 0], sizes = [16, 128], strides = [1, 1]} : vector<16x384xf32> to vector<16x128xf32>
    %382 = vector.extract_strided_slice %380 {offsets = [0, 128], sizes = [16, 128], strides = [1, 1]} : vector<16x384xf32> to vector<16x128xf32>
    %383 = vector.extract_strided_slice %380 {offsets = [0, 256], sizes = [16, 128], strides = [1, 1]} : vector<16x384xf32> to vector<16x128xf32>
    %384 = vector.extract_strided_slice %374 {offsets = [0, 384], sizes = [16, 128], strides = [1, 1]} : vector<16x512xf32> to vector<16x128xf32>
    %385 = math.tanh %384 : vector<16x128xf32>
    %386 = arith.mulf %382, %365 : vector<16x128xf32>
    %387 = arith.mulf %381, %385 : vector<16x128xf32>
    %388 = arith.addf %386, %387 : vector<16x128xf32>
    %389 = math.tanh %388 : vector<16x128xf32>
    %390 = arith.mulf %383, %389 : vector<16x128xf32>
    %c6_i32_110 = arith.constant 6 : i32
    %c16_i32_111 = arith.constant 16 : i32
    %391 = arith.muli %c6_i32_110, %c16_i32_111 : i32
    %392 = tpu.assume_multiple %391, 16 : i32
    %393 = arith.index_cast %392 : i32 to index
    %c0_112 = arith.constant 0 : index
    %394 = vector.load %arg12[%393, %c0_112] : memref<128x512xf32, #tpu.memory_space<vmem>>, vector<16x512xf32>
    %395 = arith.truncf %390 : vector<16x128xf32> to vector<16x128xbf16>
    %cst_113 = arith.constant dense<0.000000e+00> : vector<16x512xf32>
    %396 = tpu.matmul %395, %243, %cst_113 {dimension_numbers = #tpu.dot_dimension_numbers<[1], [0], [0], [1], [0, 0, 1, 1], [], []>} : vector<16x128xbf16>, vector<128x512xbf16>, vector<16x512xf32> -> vector<16x512xf32>
    %397 = arith.addf %394, %396 : vector<16x512xf32>
    %398 = vector.extract_strided_slice %397 {offsets = [0, 0], sizes = [16, 384], strides = [1, 1]} : vector<16x512xf32> to vector<16x384xf32>
    %399 = arith.negf %398 : vector<16x384xf32>
    %400 = math.exp %399 : vector<16x384xf32>
    %cst_114 = arith.constant 1.000000e+00 : f32
    %401 = vector.broadcast %cst_114 : f32 to vector<16x384xf32>
    %402 = arith.addf %401, %400 : vector<16x384xf32>
    %403 = arith.divf %401, %402 : vector<16x384xf32>
    %404 = vector.extract_strided_slice %403 {offsets = [0, 0], sizes = [16, 128], strides = [1, 1]} : vector<16x384xf32> to vector<16x128xf32>
    %405 = vector.extract_strided_slice %403 {offsets = [0, 128], sizes = [16, 128], strides = [1, 1]} : vector<16x384xf32> to vector<16x128xf32>
    %406 = vector.extract_strided_slice %403 {offsets = [0, 256], sizes = [16, 128], strides = [1, 1]} : vector<16x384xf32> to vector<16x128xf32>
    %407 = vector.extract_strided_slice %397 {offsets = [0, 384], sizes = [16, 128], strides = [1, 1]} : vector<16x512xf32> to vector<16x128xf32>
    %408 = math.tanh %407 : vector<16x128xf32>
    %409 = arith.mulf %405, %388 : vector<16x128xf32>
    %410 = arith.mulf %404, %408 : vector<16x128xf32>
    %411 = arith.addf %409, %410 : vector<16x128xf32>
    %412 = math.tanh %411 : vector<16x128xf32>
    %413 = arith.mulf %406, %412 : vector<16x128xf32>
    %c7_i32_115 = arith.constant 7 : i32
    %c16_i32_116 = arith.constant 16 : i32
    %414 = arith.muli %c7_i32_115, %c16_i32_116 : i32
    %415 = tpu.assume_multiple %414, 16 : i32
    %416 = arith.index_cast %415 : i32 to index
    %c0_117 = arith.constant 0 : index
    %417 = vector.load %arg12[%416, %c0_117] : memref<128x512xf32, #tpu.memory_space<vmem>>, vector<16x512xf32>
    %418 = arith.truncf %413 : vector<16x128xf32> to vector<16x128xbf16>
    %cst_118 = arith.constant dense<0.000000e+00> : vector<16x512xf32>
    %419 = tpu.matmul %418, %243, %cst_118 {dimension_numbers = #tpu.dot_dimension_numbers<[1], [0], [0], [1], [0, 0, 1, 1], [], []>} : vector<16x128xbf16>, vector<128x512xbf16>, vector<16x512xf32> -> vector<16x512xf32>
    %420 = arith.addf %417, %419 : vector<16x512xf32>
    %421 = vector.extract_strided_slice %420 {offsets = [0, 0], sizes = [16, 384], strides = [1, 1]} : vector<16x512xf32> to vector<16x384xf32>
    %422 = arith.negf %421 : vector<16x384xf32>
    %423 = math.exp %422 : vector<16x384xf32>
    %cst_119 = arith.constant 1.000000e+00 : f32
    %424 = vector.broadcast %cst_119 : f32 to vector<16x384xf32>
    %425 = arith.addf %424, %423 : vector<16x384xf32>
    %426 = arith.divf %424, %425 : vector<16x384xf32>
    %427 = vector.extract_strided_slice %426 {offsets = [0, 0], sizes = [16, 128], strides = [1, 1]} : vector<16x384xf32> to vector<16x128xf32>
    %428 = vector.extract_strided_slice %426 {offsets = [0, 128], sizes = [16, 128], strides = [1, 1]} : vector<16x384xf32> to vector<16x128xf32>
    %429 = vector.extract_strided_slice %426 {offsets = [0, 256], sizes = [16, 128], strides = [1, 1]} : vector<16x384xf32> to vector<16x128xf32>
    %430 = vector.extract_strided_slice %420 {offsets = [0, 384], sizes = [16, 128], strides = [1, 1]} : vector<16x512xf32> to vector<16x128xf32>
    %431 = math.tanh %430 : vector<16x128xf32>
    %432 = arith.mulf %428, %411 : vector<16x128xf32>
    %433 = arith.mulf %427, %431 : vector<16x128xf32>
    %434 = arith.addf %432, %433 : vector<16x128xf32>
    %435 = math.tanh %434 : vector<16x128xf32>
    %436 = arith.mulf %429, %435 : vector<16x128xf32>
    %c8_i32_120 = arith.constant 8 : i32
    %437 = arith.truncf %436 : vector<16x128xf32> to vector<16x128xbf16>
    %c0_121 = arith.constant 0 : index
    %c0_122 = arith.constant 0 : index
    %438 = vector.load %arg8[%c0_121, %c0_122] : memref<128x8xbf16, #tpu.memory_space<vmem>>, vector<128x8xbf16>
    %cst_123 = arith.constant dense<0.000000e+00> : vector<16x8xf32>
    %439 = tpu.matmul %437, %438, %cst_123 {dimension_numbers = #tpu.dot_dimension_numbers<[1], [0], [0], [1], [0, 0, 1, 1], [], []>} : vector<16x128xbf16>, vector<128x8xbf16>, vector<16x8xf32> -> vector<16x8xf32>
    %c0_124 = arith.constant 0 : index
    %c0_125 = arith.constant 0 : index
    %440 = vector.load %arg9[%c0_124, %c0_125] : memref<1x8xf32, #tpu.memory_space<vmem>>, vector<1x8xf32>
    %441 = vector.broadcast %440 : vector<1x8xf32> to vector<16x8xf32>
    %442 = arith.addf %439, %441 : vector<16x8xf32>
    %c0_126 = arith.constant 0 : index
    %c0_127 = arith.constant 0 : index
    %443 = vector.load %arg10[%c0_126, %c0_127] : memref<16x8xf32, #tpu.memory_space<vmem>>, vector<16x8xf32>
    tpu.vector_store %arg10[%c0_126, %c0_127], %442 {strides = array<i32>} : memref<16x8xf32, #tpu.memory_space<vmem>>, vector<16x8xf32>,
    return
  }
  func.func @transform_0(%arg0: i32) -> (i32, i32, i32) {
    %c0_i32 = arith.constant 0 : i32
    %c0_i32_0 = arith.constant 0 : i32
    %c0_i32_1 = arith.constant 0 : i32
    return %c0_i32, %arg0, %c0_i32_0 : i32, i32, i32
  }
  func.func @transform_1(%arg0: i32) -> (i32, i32) {
    %c0_i32 = arith.constant 0 : i32
    %c0_i32_0 = arith.constant 0 : i32
    %c0_i32_1 = arith.constant 0 : i32
    return %c0_i32, %c0_i32_0 : i32, i32
  }
  func.func @transform_2(%arg0: i32) -> (i32, i32) {
    %c0_i32 = arith.constant 0 : i32
    %c0_i32_0 = arith.constant 0 : i32
    %c0_i32_1 = arith.constant 0 : i32
    return %c0_i32, %c0_i32_0 : i32, i32
  }
  func.func @transform_3(%arg0: i32) -> (i32, i32) {
    %c0_i32 = arith.constant 0 : i32
    %c0_i32_0 = arith.constant 0 : i32
    %c0_i32_1 = arith.constant 0 : i32
    return %c0_i32, %c0_i32_0 : i32, i32
  }
  func.func @transform_4(%arg0: i32) -> (i32, i32) {
    %c0_i32 = arith.constant 0 : i32
    %c0_i32_0 = arith.constant 0 : i32
    %c0_i32_1 = arith.constant 0 : i32
    return %c0_i32, %c0_i32_0 : i32, i32
  }
  func.func @transform_5(%arg0: i32) -> (i32, i32) {
    %c0_i32 = arith.constant 0 : i32
    %c0_i32_0 = arith.constant 0 : i32
    %c0_i32_1 = arith.constant 0 : i32
    return %c0_i32, %c0_i32_0 : i32, i32
  }
  func.func @transform_6(%arg0: i32) -> (i32, i32) {
    %c0_i32 = arith.constant 0 : i32
    %c0_i32_0 = arith.constant 0 : i32
    %c0_i32_1 = arith.constant 0 : i32
    return %c0_i32, %c0_i32_0 : i32, i32
  }
  func.func @transform_7(%arg0: i32) -> (i32, i32) {
    %c0_i32 = arith.constant 0 : i32
    %c0_i32_0 = arith.constant 0 : i32
    %c0_i32_1 = arith.constant 0 : i32
    return %c0_i32, %c0_i32_0 : i32, i32
  }
  func.func @transform_8(%arg0: i32) -> (i32, i32) {
    %c0_i32 = arith.constant 0 : i32
    %c0_i32_0 = arith.constant 0 : i32
    %c0_i32_1 = arith.constant 0 : i32
    return %c0_i32, %c0_i32_0 : i32, i32
  }
  func.func @transform_9(%arg0: i32) -> (i32, i32) {
    %c0_i32 = arith.constant 0 : i32
    %c0_i32_0 = arith.constant 0 : i32
    return %arg0, %c0_i32 : i32, i32
  }
}

</mosaic_0001>

<llo_original>
// kernel: tpu_custom_call.1
$region0: #{tpu_custom_call.1}
  #allocation0 [shape = 'u32[]', space=smem, size = 0x4, offset = 0x4, fixed_abs, tag = 'smem constant byte address 0x4 - core index']
  #allocation1 [shape = 'u32[72,128]{1,0:T(1,128)}', space=vmem, size = 0x9000, scoped, tag = 'internal scratch']
  #allocation2 [shape = 'bf16[128,128]{1,0:T(8,128)(2,1)}', space=vmem, size = 0x8000, scoped, tag = 'scratch operand']
  #allocation3 [shape = 'f32[128,512]{1,0:T(8,128)}', space=vmem, size = 0x40000, scoped, tag = 'scratch operand']
  %s0 = inlined_call_operand.vmem [shape: bf16[8,16,16], index: 0, kind: input, shape index: {}]
  %s1 = inlined_call_operand.hbm [shape: bf16[16,512], index: 1, kind: input, shape index: {}]
  %s2 = inlined_call_operand.hbm [shape: bf16[128,512], index: 2, kind: input, shape index: {}]
  %s3 = inlined_call_operand.vmem [shape: f32[1,512], index: 3, kind: input, shape index: {}]
  %s4 = inlined_call_operand.hbm [shape: bf16[128,512], index: 4, kind: input, shape index: {}]
  %s5 = inlined_call_operand.hbm [shape: bf16[128,512], index: 5, kind: input, shape index: {}]
  %s6 = inlined_call_operand.hbm [shape: f32[1,512], index: 6, kind: input, shape index: {}]
  %s7 = inlined_call_operand.vmem [shape: bf16[128,8], index: 7, kind: input, shape index: {}]
  %s8 = inlined_call_operand.vmem [shape: f32[1,8], index: 8, kind: input, shape index: {}]
  %s9 = inlined_call_operand.vmem [shape: f32[16,8], index: 9, kind: output, shape index: {}]
  %s10 = sld [smem:[#allocation0]]
  $region66: #{tpu_custom_call.1} parent=0
    _
  %s12 = ssub.s32 1, %s10
  %s13 = scalar_select 0, %s12, %s10
  $region1: #{tpu_custom_call.1} parent=0
    #allocation4 [shape = 'u8[16384]{0}', space=vmem, size = 0x4000, scoped, tag = 'input window, operand 1, single buffered']
    #allocation5 [shape = 's32[1]{0}', space=sflag, size = 0x4, scoped, tag = 'scoped memory for tpu_custom_call.1']
    #allocation6 [shape = 'u8[131072]{0}', space=vmem, size = 0x20000, scoped, tag = 'input window, operand 2, single buffered']
    #allocation7 [shape = 's32[1]{0}', space=sflag, size = 0x4, scoped, tag = 'scoped memory for tpu_custom_call.1']
    #allocation8 [shape = 'u8[131072]{0}', space=vmem, size = 0x20000, scoped, tag = 'input window, operand 4, single buffered']
    #allocation9 [shape = 'u8[131072]{0}', space=vmem, size = 0x20000, scoped, tag = 'input window, operand 5, single buffered']
    #allocation10 [shape = 's32[1]{0}', space=sflag, size = 0x4, scoped, tag = 'scoped memory for tpu_custom_call.1']
    #allocation11 [shape = 'u8[2048]{0}', space=vmem, size = 0x800, scoped, tag = 'input window, operand 6, single buffered']
    %14 = vsyncpa [#allocation5], 0
    %15 = vsyncpa [#allocation7], 0
    %16 = vsyncpa [#allocation10], 0
    // Predicated region
    $region2: #{tpu_custom_call.1} parent=1 // pred_check
      _
    $region3: #{tpu_custom_call.1} parent=1 // pred_check_branch
      %18 = sbr.rel (0) target = $region5
    $region4: #{tpu_custom_call.1} parent=1 // pred_region
      _
    $region5: #{tpu_custom_call.1} parent=1 // pred_fallthru
      _
    // Predicated region
    $region6: #{tpu_custom_call.1} parent=1 // pred_check
      _
    $region7: #{tpu_custom_call.1} parent=1 // pred_check_branch
      %20 = sbr.rel (0) target = $region9
    $region8: #{tpu_custom_call.1} parent=1 // pred_region
      %22 = vsyncadd [#allocation5], 0
      %s23 = sshll.u32 %s1, 4
      %s24 = int_to_ptr.hbm [resolvable:$true] %s23
      %s25 = sshll.u32 [#allocation4], 4
      %s26 = int_to_ptr.vmem [resolvable:$true] %s25
      %31 = dma.hbm_to_vmem [thread:$0]  %s24, 512, %s26, [#allocation5], 256, 256, 16
    $region9: #{tpu_custom_call.1} parent=1 // pred_fallthru
      _
    // Predicated region
    $region10: #{tpu_custom_call.1} parent=1 // pred_check
      _
    $region11: #{tpu_custom_call.1} parent=1 // pred_check_branch
      %33 = sbr.rel (0) target = $region13
    $region12: #{tpu_custom_call.1} parent=1 // pred_region
      %35 = vsyncadd [#allocation7], 0
      %s36 = sshll.u32 %s2, 4
      %s37 = int_to_ptr.hbm [resolvable:$true] %s36
      %s38 = sshll.u32 [#allocation6], 4
      %s39 = int_to_ptr.vmem [resolvable:$true] %s38
      %44 = dma.hbm_to_vmem [thread:$0]  %s37, 4096, %s39, [#allocation7], 256, 256, 16
    $region13: #{tpu_custom_call.1} parent=1 // pred_fallthru
      _
    // Predicated region
    $region14: #{tpu_custom_call.1} parent=1 // pred_check
      _
    $region15: #{tpu_custom_call.1} parent=1 // pred_check_branch
      %46 = sbr.rel (0) target = $region17
    $region16: #{tpu_custom_call.1} parent=1 // pred_region
      _
    $region17: #{tpu_custom_call.1} parent=1 // pred_fallthru
      _
    // Predicated region
    $region18: #{tpu_custom_call.1} parent=1 // pred_check
      _
    $region19: #{tpu_custom_call.1} parent=1 // pred_check_branch
      %48 = sbr.rel (0) target = $region21
    $region20: #{tpu_custom_call.1} parent=1 // pred_region
      %50 = vsyncadd [#allocation7], 0
      %s51 = sshll.u32 %s4, 4
      %s52 = int_to_ptr.hbm [resolvable:$true] %s51
      %s53 = sshll.u32 [#allocation8], 4
      %s54 = int_to_ptr.vmem [resolvable:$true] %s53
      %59 = dma.hbm_to_vmem [thread:$0]  %s52, 4096, %s54, [#allocation7], 256, 256, 16
    $region21: #{tpu_custom_call.1} parent=1 // pred_fallthru
      _
    // Predicated region
    $region22: #{tpu_custom_call.1} parent=1 // pred_check
      _
    $region23: #{tpu_custom_call.1} parent=1 // pred_check_branch
      %61 = sbr.rel (0) target = $region25
    $region24: #{tpu_custom_call.1} parent=1 // pred_region
      %63 = vsyncadd [#allocation10], 0
      %s64 = sshll.u32 %s5, 4
      %s65 = int_to_ptr.hbm [resolvable:$true] %s64
      %s66 = sshll.u32 [#allocation9], 4
      %s67 = int_to_ptr.vmem [resolvable:$true] %s66
      %72 = dma.hbm_to_vmem [thread:$0]  %s65, 4096, %s67, [#allocation10], 256, 256, 16
    $region25: #{tpu_custom_call.1} parent=1 // pred_fallthru
      _
    // Predicated region
    $region26: #{tpu_custom_call.1} parent=1 // pred_check
      _
    $region27: #{tpu_custom_call.1} parent=1 // pred_check_branch
      %74 = sbr.rel (0) target = $region29
    $region28: #{tpu_custom_call.1} parent=1 // pred_region
      %76 = vsyncadd [#allocation10], 0
      %s78 = sshll.u32 %s6, 4
      %s79 = int_to_ptr.hbm [resolvable:$true] %s78
      %s80 = sshll.u32 [#allocation11], 4
      %s81 = int_to_ptr.vmem [resolvable:$true] %s80
      %83 = dma.hbm_to_vmem [thread:$0]  %s79, 64, %s81, [#allocation10]
    $region29: #{tpu_custom_call.1} parent=1 // pred_fallthru
      _
    // Predicated region
    $region30: #{tpu_custom_call.1} parent=1 // pred_check
      _
    $region31: #{tpu_custom_call.1} parent=1 // pred_check_branch
      %85 = sbr.rel (0) target = $region33
    $region32: #{tpu_custom_call.1} parent=1 // pred_region
      _
    $region33: #{tpu_custom_call.1} parent=1 // pred_fallthru
      _
    // Predicated region
    $region34: #{tpu_custom_call.1} parent=1 // pred_check
      _
    $region35: #{tpu_custom_call.1} parent=1 // pred_check_branch
      %87 = sbr.rel (0) target = $region37
    $region36: #{tpu_custom_call.1} parent=1 // pred_region
      _
    $region37: #{tpu_custom_call.1} parent=1 // pred_fallthru
      _
    // Predicated region
    $region38: #{tpu_custom_call.1} parent=1 // pred_check
      _
    $region39: #{tpu_custom_call.1} parent=1 // pred_check_branch
      %89 = sbr.rel (0) target = $region41
    $region40: #{tpu_custom_call.1} parent=1 // pred_region
      %91 = dma.done [#allocation5], 512
    $region41: #{tpu_custom_call.1} parent=1 // pred_fallthru
      _
    // Predicated region
    $region42: #{tpu_custom_call.1} parent=1 // pred_check
      _
    $region43: #{tpu_custom_call.1} parent=1 // pred_check_branch
      %93 = sbr.rel (0) target = $region45
    $region44: #{tpu_custom_call.1} parent=1 // pred_region
      %95 = dma.done [#allocation7], 4096
    $region45: #{tpu_custom_call.1} parent=1 // pred_fallthru
      _
    // Predicated region
    $region46: #{tpu_custom_call.1} parent=1 // pred_check
      _
    $region47: #{tpu_custom_call.1} parent=1 // pred_check_branch
      %97 = sbr.rel (0) target = $region49
    $region48: #{tpu_custom_call.1} parent=1 // pred_region
      %99 = dma.done [#allocation7], 4096
    $region49: #{tpu_custom_call.1} parent=1 // pred_fallthru
      _
    // Predicated region
    $region50: #{tpu_custom_call.1} parent=1 // pred_check
      _
    $region51: #{tpu_custom_call.1} parent=1 // pred_check_branch
      %101 = sbr.rel (0) target = $region53
    $region52: #{tpu_custom_call.1} parent=1 // pred_region
      %103 = dma.done [#allocation10], 4096
    $region53: #{tpu_custom_call.1} parent=1 // pred_fallthru
      _
    // Predicated region
    $region54: #{tpu_custom_call.1} parent=1 // pred_check
      _
    $region55: #{tpu_custom_call.1} parent=1 // pred_check_branch
      %105 = sbr.rel (0) target = $region57
    $region56: #{tpu_custom_call.1} parent=1 // pred_region
      %107 = dma.done [#allocation10], 64
    $region57: #{tpu_custom_call.1} parent=1 // pred_fallthru
      _
    %v109 = vld [vmem:[#allocation6] sm:$0xff]
    %v110 = vld [vmem:[#allocation6 + $0x8] sm:$0xff]
    %v111 = vld [vmem:[#allocation6 + $0x10] sm:$0xff]
    %v112 = vld [vmem:[#allocation6 + $0x18] sm:$0xff]
    %v113 = vld [vmem:[#allocation6 + $0x20] sm:$0xff]
    %v114 = vld [vmem:[#allocation6 + $0x28] sm:$0xff]
    %v115 = vld [vmem:[#allocation6 + $0x30] sm:$0xff]
    %v116 = vld [vmem:[#allocation6 + $0x38] sm:$0xff]
    %v117 = vld [vmem:[#allocation6 + $0x40] sm:$0xff]
    %v118 = vld [vmem:[#allocation6 + $0x48] sm:$0xff]
    %v119 = vld [vmem:[#allocation6 + $0x50] sm:$0xff]
    %v120 = vld [vmem:[#allocation6 + $0x58] sm:$0xff]
    %v121 = vld [vmem:[#allocation6 + $0x60] sm:$0xff]
    %v122 = vld [vmem:[#allocation6 + $0x68] sm:$0xff]
    %v123 = vld [vmem:[#allocation6 + $0x70] sm:$0xff]
    %v124 = vld [vmem:[#allocation6 + $0x78] sm:$0xff]
    %v125 = vld [vmem:[#allocation6 + $0x80] sm:$0xff]
    %v126 = vld [vmem:[#allocation6 + $0x88] sm:$0xff]
    %v127 = vld [vmem:[#allocation6 + $0x90] sm:$0xff]
    %v128 = vld [vmem:[#allocation6 + $0x98] sm:$0xff]
    %v129 = vld [vmem:[#allocation6 + $0xa0] sm:$0xff]
    %v130 = vld [vmem:[#allocation6 + $0xa8] sm:$0xff]
    %v131 = vld [vmem:[#allocation6 + $0xb0] sm:$0xff]
    %v132 = vld [vmem:[#allocation6 + $0xb8] sm:$0xff]
    %v133 = vld [vmem:[#allocation6 + $0xc0] sm:$0xff]
    %v134 = vld [vmem:[#allocation6 + $0xc8] sm:$0xff]
    %v135 = vld [vmem:[#allocation6 + $0xd0] sm:$0xff]
    %v136 = vld [vmem:[#allocation6 + $0xd8] sm:$0xff]
    %v137 = vld [vmem:[#allocation6 + $0xe0] sm:$0xff]
    %v138 = vld [vmem:[#allocation6 + $0xe8] sm:$0xff]
    %v139 = vld [vmem:[#allocation6 + $0xf0] sm:$0xff]
    %v140 = vld [vmem:[#allocation6 + $0xf8] sm:$0xff]
    %v141 = vld [vmem:[%s3] sm:$0xf]
    %v142 = vld [vmem:[%s0] sm:$0xf]
    %v143 = vld [vmem:[%s0 + $0x4] sm:$0xf]
    %v144 = vld [vmem:[%s0 + $0x8] sm:$0xf]
    %v145 = vld [vmem:[%s0 + $0xc] sm:$0xf]
    %v146 = vld [vmem:[%s0 + $0x10] sm:$0xf]
    %v147 = vld [vmem:[%s0 + $0x14] sm:$0xf]
    %v148 = vld [vmem:[%s0 + $0x18] sm:$0xf]
    %v149 = vld [vmem:[%s0 + $0x1c] sm:$0xf]
    %v150 = vld [vmem:[%s0 + $0x20] sm:$0xf]
    %v151 = vld [vmem:[%s0 + $0x24] sm:$0xf]
    %v152 = vld [vmem:[%s0 + $0x28] sm:$0xf]
    %v153 = vld [vmem:[%s0 + $0x2c] sm:$0xf]
    %v154 = vld [vmem:[%s0 + $0x30] sm:$0xf]
    %v155 = vld [vmem:[%s0 + $0x34] sm:$0xf]
    %v156 = vld [vmem:[%s0 + $0x38] sm:$0xf]
    %v157 = vld [vmem:[%s0 + $0x3c] sm:$0xf]
    %v158 = vld [vmem:[#allocation4] sm:$0xff]
    %v159 = vld [vmem:[#allocation4 + $0x8] sm:$0xff]
    %v160 = vld [vmem:[#allocation4 + $0x10] sm:$0xff]
    %v161 = vld [vmem:[#allocation4 + $0x18] sm:$0xff]
    %v163 = vperm.slane %v141, 0
    %v164 = vperm.slane %v141, 1
    %v165 = vperm.slane %v141, 2
    %v166 = vperm.slane %v141, 3
    %v187 = vunpack.c.l.b16 %v142
    %v188 = vunpack.c.l.b16 %v143
    %v189 = vunpack.c.l.b16 %v144
    %v190 = vunpack.c.l.b16 %v145
    %v191 = vunpack.c.l.b16 %v146
    %v192 = vunpack.c.l.b16 %v147
    %v193 = vunpack.c.l.b16 %v148
    %v194 = vunpack.c.l.b16 %v149
    %v195 = vunpack.c.l.b16 %v150
    %v196 = vunpack.c.l.b16 %v151
    %v197 = vunpack.c.l.b16 %v152
    %v198 = vunpack.c.l.b16 %v153
    %v199 = vunpack.c.l.b16 %v154
    %v200 = vunpack.c.l.b16 %v155
    %v201 = vunpack.c.l.b16 %v156
    %v202 = vunpack.c.l.b16 %v157
    %v203 = vpack.c.b16 %v188, %v187
    %v204 = vpack.c.b16 %v190, %v189
    %v205 = vpack.c.b16 %v192, %v191
    %v206 = vpack.c.b16 %v194, %v193
    %v207 = vpack.c.b16 %v196, %v195
    %v208 = vpack.c.b16 %v198, %v197
    %v209 = vpack.c.b16 %v200, %v199
    %v210 = vpack.c.b16 %v202, %v201
    %v215 = vunpack.c.l.b16 %v158
    %v216 = vunpack.c.h.b16 %v158
    %v217 = vunpack.c.l.b16 %v159
    %v218 = vunpack.c.h.b16 %v159
    %v219 = vunpack.c.l.b16 %v160
    %v220 = vunpack.c.h.b16 %v160
    %v221 = vunpack.c.l.b16 %v161
    %v222 = vunpack.c.h.b16 %v161
    %v223 = vpack.c.b16 %v219, %v215
    %v224 = vpack.c.b16 %v220, %v216
    %v225 = vpack.c.b16 %v221, %v217
    %v226 = vpack.c.b16 %v222, %v218
    %vm231 = vcmask 130048
    %v233 = vsel %vm231, %v203, 0
    %v236 = vsel %vm231, %v204, 0
    %v239 = vsel %vm231, %v205, 0
    %v242 = vsel %vm231, %v206, 0
    %v245 = vsel %vm231, %v207, 0
    %v248 = vsel %vm231, %v208, 0
    %v251 = vsel %vm231, %v209, 0
    %v254 = vsel %vm231, %v210, 0
    %256 = vmatpush.bf16.msra.mxu0 0
    %257 = vmatpush.bf16.msra.mxu0 0
    %258 = vmatpush.bf16.msra.mxu0 0
    %259 = vmatpush.bf16.msra.mxu0 0
    %260 = vmatpush.bf16.msra.mxu0 0
    %261 = vmatpush.bf16.msra.mxu0 0
    %262 = vmatpush.bf16.msra.mxu0 0
    %263 = vmatpush.bf16.msra.mxu0 %v223
    %264 = vmatmul.bf16.gmra.mxu0 %v233
    %v265 = vpop.f32.mrf.mxu0
    %v266 = vadd.f32 %v163, %v265
    %v267 = vpop.f32.mrf.mxu0
    %v268 = vadd.f32 %v163, %v267
    %269 = vmatmul.bf16.gmra.mxu0 %v236
    %v270 = vpop.f32.mrf.mxu0
    %v271 = vadd.f32 %v163, %v270
    %v272 = vpop.f32.mrf.mxu0
    %v273 = vadd.f32 %v163, %v272
    %274 = vmatmul.bf16.gmra.mxu0 %v239
    %v275 = vpop.f32.mrf.mxu0
    %v276 = vadd.f32 %v163, %v275
    %v277 = vpop.f32.mrf.mxu0
    %v278 = vadd.f32 %v163, %v277
    %279 = vmatmul.bf16.gmra.mxu0 %v242
    %v280 = vpop.f32.mrf.mxu0
    %v281 = vadd.f32 %v163, %v280
    %v282 = vpop.f32.mrf.mxu0
    %v283 = vadd.f32 %v163, %v282
    %284 = vmatmul.bf16.gmra.mxu0 %v245
    %v285 = vpop.f32.mrf.mxu0
    %v286 = vadd.f32 %v163, %v285
    %v287 = vpop.f32.mrf.mxu0
    %v288 = vadd.f32 %v163, %v287
    %289 = vmatmul.bf16.gmra.mxu0 %v248
    %v290 = vpop.f32.mrf.mxu0
    %v291 = vadd.f32 %v163, %v290
    %v292 = vpop.f32.mrf.mxu0
    %v293 = vadd.f32 %v163, %v292
    %294 = vmatmul.bf16.gmra.mxu0 %v251
    %v295 = vpop.f32.mrf.mxu0
    %v296 = vadd.f32 %v163, %v295
    %v297 = vpop.f32.mrf.mxu0
    %v298 = vadd.f32 %v163, %v297
    %299 = vmatmul.bf16.gmra.mxu0 %v254
    %v300 = vpop.f32.mrf.mxu0
    %v301 = vadd.f32 %v163, %v300
    %v302 = vpop.f32.mrf.mxu0
    %v303 = vadd.f32 %v163, %v302
    %304 = vdwg.mxu0
    %305 = vmatpush.bf16.msra.mxu0 0
    %306 = vmatpush.bf16.msra.mxu0 0
    %307 = vmatpush.bf16.msra.mxu0 0
    %308 = vmatpush.bf16.msra.mxu0 0
    %309 = vmatpush.bf16.msra.mxu0 0
    %310 = vmatpush.bf16.msra.mxu0 0
    %311 = vmatpush.bf16.msra.mxu0 0
    %312 = vmatpush.bf16.msra.mxu0 %v224
    %313 = vmatmul.bf16.gmra.mxu0 %v233
    %v314 = vpop.f32.mrf.mxu0
    %v315 = vadd.f32 %v164, %v314
    %v316 = vpop.f32.mrf.mxu0
    %v317 = vadd.f32 %v164, %v316
    %318 = vmatmul.bf16.gmra.mxu0 %v236
    %v319 = vpop.f32.mrf.mxu0
    %v320 = vadd.f32 %v164, %v319
    %v321 = vpop.f32.mrf.mxu0
    %v322 = vadd.f32 %v164, %v321
    %323 = vmatmul.bf16.gmra.mxu0 %v239
    %v324 = vpop.f32.mrf.mxu0
    %v325 = vadd.f32 %v164, %v324
    %v326 = vpop.f32.mrf.mxu0
    %v327 = vadd.f32 %v164, %v326
    %328 = vmatmul.bf16.gmra.mxu0 %v242
    %v329 = vpop.f32.mrf.mxu0
    %v330 = vadd.f32 %v164, %v329
    %v331 = vpop.f32.mrf.mxu0
    %v332 = vadd.f32 %v164, %v331
    %333 = vmatmul.bf16.gmra.mxu0 %v245
    %v334 = vpop.f32.mrf.mxu0
    %v335 = vadd.f32 %v164, %v334
    %v336 = vpop.f32.mrf.mxu0
    %v337 = vadd.f32 %v164, %v336
    %338 = vmatmul.bf16.gmra.mxu0 %v248
    %v339 = vpop.f32.mrf.mxu0
    %v340 = vadd.f32 %v164, %v339
    %v341 = vpop.f32.mrf.mxu0
    %v342 = vadd.f32 %v164, %v341
    %343 = vmatmul.bf16.gmra.mxu0 %v251
    %v344 = vpop.f32.mrf.mxu0
    %v345 = vadd.f32 %v164, %v344
    %v346 = vpop.f32.mrf.mxu0
    %v347 = vadd.f32 %v164, %v346
    %348 = vmatmul.bf16.gmra.mxu0 %v254
    %v349 = vpop.f32.mrf.mxu0
    %v350 = vadd.f32 %v164, %v349
    %v351 = vpop.f32.mrf.mxu0
    %v352 = vadd.f32 %v164, %v351
    %353 = vdwg.mxu0
    %354 = vmatpush.bf16.msra.mxu0 0
    %355 = vmatpush.bf16.msra.mxu0 0
    %356 = vmatpush.bf16.msra.mxu0 0
    %357 = vmatpush.bf16.msra.mxu0 0
    %358 = vmatpush.bf16.msra.mxu0 0
    %359 = vmatpush.bf16.msra.mxu0 0
    %360 = vmatpush.bf16.msra.mxu0 0
    %361 = vmatpush.bf16.msra.mxu0 %v225
    %362 = vmatmul.bf16.gmra.mxu0 %v233
    %v363 = vpop.f32.mrf.mxu0
    %v364 = vadd.f32 %v165, %v363
    %v365 = vpop.f32.mrf.mxu0
    %v366 = vadd.f32 %v165, %v365
    %367 = vmatmul.bf16.gmra.mxu0 %v236
    %v368 = vpop.f32.mrf.mxu0
    %v369 = vadd.f32 %v165, %v368
    %v370 = vpop.f32.mrf.mxu0
    %v371 = vadd.f32 %v165, %v370
    %372 = vmatmul.bf16.gmra.mxu0 %v239
    %v373 = vpop.f32.mrf.mxu0
    %v374 = vadd.f32 %v165, %v373
    %v375 = vpop.f32.mrf.mxu0
    %v376 = vadd.f32 %v165, %v375
    %377 = vmatmul.bf16.gmra.mxu0 %v242
    %v378 = vpop.f32.mrf.mxu0
    %v379 = vadd.f32 %v165, %v378
    %v380 = vpop.f32.mrf.mxu0
    %v381 = vadd.f32 %v165, %v380
    %382 = vmatmul.bf16.gmra.mxu0 %v245
    %v383 = vpop.f32.mrf.mxu0
    %v384 = vadd.f32 %v165, %v383
    %v385 = vpop.f32.mrf.mxu0
    %v386 = vadd.f32 %v165, %v385
    %387 = vmatmul.bf16.gmra.mxu0 %v248
    %v388 = vpop.f32.mrf.mxu0
    %v389 = vadd.f32 %v165, %v388
    %v390 = vpop.f32.mrf.mxu0
    %v391 = vadd.f32 %v165, %v390
    %392 = vmatmul.bf16.gmra.mxu0 %v251
    %v393 = vpop.f32.mrf.mxu0
    %v394 = vadd.f32 %v165, %v393
    %v395 = vpop.f32.mrf.mxu0
    %v396 = vadd.f32 %v165, %v395
    %397 = vmatmul.bf16.gmra.mxu0 %v254
    %v398 = vpop.f32.mrf.mxu0
    %v399 = vadd.f32 %v165, %v398
    %v400 = vpop.f32.mrf.mxu0
    %v401 = vadd.f32 %v165, %v400
    %402 = vdwg.mxu0
    %403 = vmatpush.bf16.msra.mxu0 0
    %404 = vmatpush.bf16.msra.mxu0 0
    %405 = vmatpush.bf16.msra.mxu0 0
    %406 = vmatpush.bf16.msra.mxu0 0
    %407 = vmatpush.bf16.msra.mxu0 0
    %408 = vmatpush.bf16.msra.mxu0 0
    %409 = vmatpush.bf16.msra.mxu0 0
    %410 = vmatpush.bf16.msra.mxu0 %v226
    %411 = vmatmul.bf16.gmra.mxu0 %v233
    %v412 = vpop.f32.mrf.mxu0
    %v413 = vadd.f32 %v166, %v412
    %v414 = vpop.f32.mrf.mxu0
    %v415 = vadd.f32 %v166, %v414
    %416 = vmatmul.bf16.gmra.mxu0 %v236
    %v417 = vpop.f32.mrf.mxu0
    %v418 = vadd.f32 %v166, %v417
    %v419 = vpop.f32.mrf.mxu0
    %v420 = vadd.f32 %v166, %v419
    %421 = vmatmul.bf16.gmra.mxu0 %v239
    %v422 = vpop.f32.mrf.mxu0
    %v423 = vadd.f32 %v166, %v422
    %v424 = vpop.f32.mrf.mxu0
    %v425 = vadd.f32 %v166, %v424
    %426 = vmatmul.bf16.gmra.mxu0 %v242
    %v427 = vpop.f32.mrf.mxu0
    %v428 = vadd.f32 %v166, %v427
    %v429 = vpop.f32.mrf.mxu0
    %v430 = vadd.f32 %v166, %v429
    %431 = vmatmul.bf16.gmra.mxu0 %v245
    %v432 = vpop.f32.mrf.mxu0
    %v433 = vadd.f32 %v166, %v432
    %v434 = vpop.f32.mrf.mxu0
    %v435 = vadd.f32 %v166, %v434
    %436 = vmatmul.bf16.gmra.mxu0 %v248
    %v437 = vpop.f32.mrf.mxu0
    %v438 = vadd.f32 %v166, %v437
    %v439 = vpop.f32.mrf.mxu0
    %v440 = vadd.f32 %v166, %v439
    %441 = vmatmul.bf16.gmra.mxu0 %v251
    %v442 = vpop.f32.mrf.mxu0
    %v443 = vadd.f32 %v166, %v442
    %v444 = vpop.f32.mrf.mxu0
    %v445 = vadd.f32 %v166, %v444
    %446 = vmatmul.bf16.gmra.mxu0 %v254
    %v447 = vpop.f32.mrf.mxu0
    %v448 = vadd.f32 %v166, %v447
    %v449 = vpop.f32.mrf.mxu0
    %v450 = vadd.f32 %v166, %v449
    %451 = vdwg.mxu0
    %452 = vst [vmem:[#allocation3] sm:$0xff] %v266
    %453 = vst [vmem:[#allocation3 + $0x8] sm:$0xff] %v315
    %454 = vst [vmem:[#allocation3 + $0x10] sm:$0xff] %v364
    %455 = vst [vmem:[#allocation3 + $0x18] sm:$0xff] %v413
    %456 = vst [vmem:[#allocation3 + $0x20] sm:$0xff] %v268
    %457 = vst [vmem:[#allocation3 + $0x28] sm:$0xff] %v317
    %458 = vst [vmem:[#allocation3 + $0x30] sm:$0xff] %v366
    %459 = vst [vmem:[#allocation3 + $0x38] sm:$0xff] %v415
    %460 = vst [vmem:[#allocation3 + $0x40] sm:$0xff] %v271
    %461 = vst [vmem:[#allocation3 + $0x48] sm:$0xff] %v320
    %462 = vst [vmem:[#allocation3 + $0x50] sm:$0xff] %v369
    %463 = vst [vmem:[#allocation3 + $0x58] sm:$0xff] %v418
    %464 = vst [vmem:[#allocation3 + $0x60] sm:$0xff] %v273
    %465 = vst [vmem:[#allocation3 + $0x68] sm:$0xff] %v322
    %466 = vst [vmem:[#allocation3 + $0x70] sm:$0xff] %v371
    %467 = vst [vmem:[#allocation3 + $0x78] sm:$0xff] %v420
    %468 = vst [vmem:[#allocation3 + $0x80] sm:$0xff] %v276
    %469 = vst [vmem:[#allocation3 + $0x88] sm:$0xff] %v325
    %470 = vst [vmem:[#allocation3 + $0x90] sm:$0xff] %v374
    %471 = vst [vmem:[#allocation3 + $0x98] sm:$0xff] %v423
    %472 = vst [vmem:[#allocation3 + $0xa0] sm:$0xff] %v278
    %473 = vst [vmem:[#allocation3 + $0xa8] sm:$0xff] %v327
    %474 = vst [vmem:[#allocation3 + $0xb0] sm:$0xff] %v376
    %475 = vst [vmem:[#allocation3 + $0xb8] sm:$0xff] %v425
    %476 = vst [vmem:[#allocation3 + $0xc0] sm:$0xff] %v281
    %477 = vst [vmem:[#allocation3 + $0xc8] sm:$0xff] %v330
    %478 = vst [vmem:[#allocation3 + $0xd0] sm:$0xff] %v379
    %479 = vst [vmem:[#allocation3 + $0xd8] sm:$0xff] %v428
    %480 = vst [vmem:[#allocation3 + $0xe0] sm:$0xff] %v283
    %481 = vst [vmem:[#allocation3 + $0xe8] sm:$0xff] %v332
    %482 = vst [vmem:[#allocation3 + $0xf0] sm:$0xff] %v381
    %483 = vst [vmem:[#allocation3 + $0xf8] sm:$0xff] %v430
    %484 = vst [vmem:[#allocation3 + $0x100] sm:$0xff] %v286
    %485 = vst [vmem:[#allocation3 + $0x108] sm:$0xff] %v335
    %486 = vst [vmem:[#allocation3 + $0x110] sm:$0xff] %v384
    %487 = vst [vmem:[#allocation3 + $0x118] sm:$0xff] %v433
    %488 = vst [vmem:[#allocation3 + $0x120] sm:$0xff] %v288
    %489 = vst [vmem:[#allocation3 + $0x128] sm:$0xff] %v337
    %490 = vst [vmem:[#allocation3 + $0x130] sm:$0xff] %v386
    %491 = vst [vmem:[#allocation3 + $0x138] sm:$0xff] %v435
    %492 = vst [vmem:[#allocation3 + $0x140] sm:$0xff] %v291
    %493 = vst [vmem:[#allocation3 + $0x148] sm:$0xff] %v340
    %494 = vst [vmem:[#allocation3 + $0x150] sm:$0xff] %v389
    %495 = vst [vmem:[#allocation3 + $0x158] sm:$0xff] %v438
    %496 = vst [vmem:[#allocation3 + $0x160] sm:$0xff] %v293
    %497 = vst [vmem:[#allocation3 + $0x168] sm:$0xff] %v342
    %498 = vst [vmem:[#allocation3 + $0x170] sm:$0xff] %v391
    %499 = vst [vmem:[#allocation3 + $0x178] sm:$0xff] %v440
    %500 = vst [vmem:[#allocation3 + $0x180] sm:$0xff] %v296
    %501 = vst [vmem:[#allocation3 + $0x188] sm:$0xff] %v345
    %502 = vst [vmem:[#allocation3 + $0x190] sm:$0xff] %v394
    %503 = vst [vmem:[#allocation3 + $0x198] sm:$0xff] %v443
    %504 = vst [vmem:[#allocation3 + $0x1a0] sm:$0xff] %v298
    %505 = vst [vmem:[#allocation3 + $0x1a8] sm:$0xff] %v347
    %506 = vst [vmem:[#allocation3 + $0x1b0] sm:$0xff] %v396
    %507 = vst [vmem:[#allocation3 + $0x1b8] sm:$0xff] %v445
    %508 = vst [vmem:[#allocation3 + $0x1c0] sm:$0xff] %v301
    %509 = vst [vmem:[#allocation3 + $0x1c8] sm:$0xff] %v350
    %510 = vst [vmem:[#allocation3 + $0x1d0] sm:$0xff] %v399
    %511 = vst [vmem:[#allocation3 + $0x1d8] sm:$0xff] %v448
    %512 = vst [vmem:[#allocation3 + $0x1e0] sm:$0xff] %v303
    %513 = vst [vmem:[#allocation3 + $0x1e8] sm:$0xff] %v352
    %514 = vst [vmem:[#allocation3 + $0x1f0] sm:$0xff] %v401
    %515 = vst [vmem:[#allocation3 + $0x1f8] sm:$0xff] %v450
    %s516 = smul.u32 0, 4
    %s517 = smul.addr %s516, 8
    %s518 = scalar_lea.vmem [#allocation3], %s517
    %v519 = vld [vmem:[%s518] sm:$0xff]
    %v520 = vld [vmem:[%s518 + $0x8] sm:$0xff]
    %v521 = vld [vmem:[%s518 + $0x10] sm:$0xff]
    %v522 = vld [vmem:[%s518 + $0x18] sm:$0xff]
    %v523 = vld [vmem:[%s518 + $0x20] sm:$0xff]
    %v524 = vld [vmem:[%s518 + $0x28] sm:$0xff]
    %v525 = vld [vmem:[%s518 + $0x30] sm:$0xff]
    %v526 = vld [vmem:[%s518 + $0x38] sm:$0xff]
    %v559 = vunpack.c.l.b16 %v109
    %v560 = vunpack.c.h.b16 %v109
    %v561 = vunpack.c.l.b16 %v110
    %v562 = vunpack.c.h.b16 %v110
    %v563 = vunpack.c.l.b16 %v111
    %v564 = vunpack.c.h.b16 %v111
    %v565 = vunpack.c.l.b16 %v112
    %v566 = vunpack.c.h.b16 %v112
    %v567 = vunpack.c.l.b16 %v113
    %v568 = vunpack.c.h.b16 %v113
    %v569 = vunpack.c.l.b16 %v114
    %v570 = vunpack.c.h.b16 %v114
    %v571 = vunpack.c.l.b16 %v115
    %v572 = vunpack.c.h.b16 %v115
    %v573 = vunpack.c.l.b16 %v116
    %v574 = vunpack.c.h.b16 %v116
    %v575 = vunpack.c.l.b16 %v117
    %v576 = vunpack.c.h.b16 %v117
    %v577 = vunpack.c.l.b16 %v118
    %v578 = vunpack.c.h.b16 %v118
    %v579 = vunpack.c.l.b16 %v119
    %v580 = vunpack.c.h.b16 %v119
    %v581 = vunpack.c.l.b16 %v120
    %v582 = vunpack.c.h.b16 %v120
    %v583 = vunpack.c.l.b16 %v121
    %v584 = vunpack.c.h.b16 %v121
    %v585 = vunpack.c.l.b16 %v122
    %v586 = vunpack.c.h.b16 %v122
    %v587 = vunpack.c.l.b16 %v123
    %v588 = vunpack.c.h.b16 %v123
    %v589 = vunpack.c.l.b16 %v124
    %v590 = vunpack.c.h.b16 %v124
    %v591 = vunpack.c.l.b16 %v125
    %v592 = vunpack.c.h.b16 %v125
    %v593 = vunpack.c.l.b16 %v126
    %v594 = vunpack.c.h.b16 %v126
    %v595 = vunpack.c.l.b16 %v127
    %v596 = vunpack.c.h.b16 %v127
    %v597 = vunpack.c.l.b16 %v128
    %v598 = vunpack.c.h.b16 %v128
    %v599 = vunpack.c.l.b16 %v129
    %v600 = vunpack.c.h.b16 %v129
    %v601 = vunpack.c.l.b16 %v130
    %v602 = vunpack.c.h.b16 %v130
    %v603 = vunpack.c.l.b16 %v131
    %v604 = vunpack.c.h.b16 %v131
    %v605 = vunpack.c.l.b16 %v132
    %v606 = vunpack.c.h.b16 %v132
    %v607 = vunpack.c.l.b16 %v133
    %v608 = vunpack.c.h.b16 %v133
    %v609 = vunpack.c.l.b16 %v134
    %v610 = vunpack.c.h.b16 %v134
    %v611 = vunpack.c.l.b16 %v135
    %v612 = vunpack.c.h.b16 %v135
    %v613 = vunpack.c.l.b16 %v136
    %v614 = vunpack.c.h.b16 %v136
    %v615 = vunpack.c.l.b16 %v137
    %v616 = vunpack.c.h.b16 %v137
    %v617 = vunpack.c.l.b16 %v138
    %v618 = vunpack.c.h.b16 %v138
    %v619 = vunpack.c.l.b16 %v139
    %v620 = vunpack.c.h.b16 %v139
    %v621 = vunpack.c.l.b16 %v140
    %v622 = vunpack.c.h.b16 %v140
    %v623 = vpack.c.b16 %v563, %v559
    %v624 = vpack.c.b16 %v564, %v560
    %v625 = vpack.c.b16 %v565, %v561
    %v626 = vpack.c.b16 %v566, %v562
    %v627 = vpack.c.b16 %v571, %v567
    %v628 = vpack.c.b16 %v572, %v568
    %v629 = vpack.c.b16 %v573, %v569
    %v630 = vpack.c.b16 %v574, %v570
    %v631 = vpack.c.b16 %v579, %v575
    %v632 = vpack.c.b16 %v580, %v576
    %v633 = vpack.c.b16 %v581, %v577
    %v634 = vpack.c.b16 %v582, %v578
    %v635 = vpack.c.b16 %v587, %v583
    %v636 = vpack.c.b16 %v588, %v584
    %v637 = vpack.c.b16 %v589, %v585
    %v638 = vpack.c.b16 %v590, %v586
    %v639 = vpack.c.b16 %v595, %v591
    %v640 = vpack.c.b16 %v596, %v592
    %v641 = vpack.c.b16 %v597, %v593
    %v642 = vpack.c.b16 %v598, %v594
    %v643 = vpack.c.b16 %v603, %v599
    %v644 = vpack.c.b16 %v604, %v600
    %v645 = vpack.c.b16 %v605, %v601
    %v646 = vpack.c.b16 %v606, %v602
    %v647 = vpack.c.b16 %v611, %v607
    %v648 = vpack.c.b16 %v612, %v608
    %v649 = vpack.c.b16 %v613, %v609
    %v650 = vpack.c.b16 %v614, %v610
    %v651 = vpack.c.b16 %v619, %v615
    %v652 = vpack.c.b16 %v620, %v616
    %v653 = vpack.c.b16 %v621, %v617
    %v654 = vpack.c.b16 %v622, %v618
    %687 = vmatpush.bf16.msra.mxu0 %v651
    %688 = vmatpush.bf16.msra.mxu0 %v647
    %689 = vmatpush.bf16.msra.mxu0 %v643
    %690 = vmatpush.bf16.msra.mxu0 %v639
    %691 = vmatpush.bf16.msra.mxu0 %v635
    %692 = vmatpush.bf16.msra.mxu0 %v631
    %693 = vmatpush.bf16.msra.mxu0 %v627
    %694 = vmatpush.bf16.msra.mxu0 %v623
    %695 = vmatmul.bf16.gmra.mxu0 0
    %v696 = vpop.f32.mrf.mxu0
    %v697 = vadd.f32 0.0, %v696
    %v698 = vpop.f32.mrf.mxu0
    %v699 = vadd.f32 0.0, %v698
    %700 = vdwg.mxu0
    %701 = vmatpush.bf16.msra.mxu0 %v652
    %702 = vmatpush.bf16.msra.mxu0 %v648
    %703 = vmatpush.bf16.msra.mxu0 %v644
    %704 = vmatpush.bf16.msra.mxu0 %v640
    %705 = vmatpush.bf16.msra.mxu0 %v636
    %706 = vmatpush.bf16.msra.mxu0 %v632
    %707 = vmatpush.bf16.msra.mxu0 %v628
    %708 = vmatpush.bf16.msra.mxu0 %v624
    %709 = vmatmul.bf16.gmra.mxu0 0
    %v710 = vpop.f32.mrf.mxu0
    %v711 = vadd.f32 0.0, %v710
    %v712 = vpop.f32.mrf.mxu0
    %v713 = vadd.f32 0.0, %v712
    %714 = vdwg.mxu0
    %715 = vmatpush.bf16.msra.mxu0 %v653
    %716 = vmatpush.bf16.msra.mxu0 %v649
    %717 = vmatpush.bf16.msra.mxu0 %v645
    %718 = vmatpush.bf16.msra.mxu0 %v641
    %719 = vmatpush.bf16.msra.mxu0 %v637
    %720 = vmatpush.bf16.msra.mxu0 %v633
    %721 = vmatpush.bf16.msra.mxu0 %v629
    %722 = vmatpush.bf16.msra.mxu0 %v625
    %723 = vmatmul.bf16.gmra.mxu0 0
    %v724 = vpop.f32.mrf.mxu0
    %v725 = vadd.f32 0.0, %v724
    %v726 = vpop.f32.mrf.mxu0
    %v727 = vadd.f32 0.0, %v726
    %728 = vdwg.mxu0
    %729 = vmatpush.bf16.msra.mxu0 %v654
    %730 = vmatpush.bf16.msra.mxu0 %v650
    %731 = vmatpush.bf16.msra.mxu0 %v646
    %732 = vmatpush.bf16.msra.mxu0 %v642
    %733 = vmatpush.bf16.msra.mxu0 %v638
    %734 = vmatpush.bf16.msra.mxu0 %v634
    %735 = vmatpush.bf16.msra.mxu0 %v630
    %736 = vmatpush.bf16.msra.mxu0 %v626
    %737 = vmatmul.bf16.gmra.mxu0 0
    %v738 = vpop.f32.mrf.mxu0
    %v739 = vadd.f32 0.0, %v738
    %v740 = vpop.f32.mrf.mxu0
    %v741 = vadd.f32 0.0, %v740
    %742 = vdwg.mxu0
    %v743 = vadd.f32 %v519, %v697
    %v744 = vadd.f32 %v520, %v711
    %v745 = vadd.f32 %v521, %v725
    %v746 = vadd.f32 %v522, %v739
    %v747 = vadd.f32 %v523, %v699
    %v748 = vadd.f32 %v524, %v713
    %v749 = vadd.f32 %v525, %v727
    %v750 = vadd.f32 %v526, %v741
    %v751 = vxor.u32 %v743, 2147483648
    %v752 = vxor.u32 %v744, 2147483648
    %v753 = vxor.u32 %v745, 2147483648
    %v754 = vxor.u32 %v747, 2147483648
    %v755 = vxor.u32 %v748, 2147483648
    %v756 = vxor.u32 %v749, 2147483648
    %v757 = vmul.f32 %v751, 1.442695
    %v758 = vpow.pop %v757
    %v759 = vmul.f32 %v752, 1.442695
    %v760 = vpow.pop %v759
    %v761 = vmul.f32 %v753, 1.442695
    %v762 = vpow.pop %v761
    %v763 = vmul.f32 %v754, 1.442695
    %v764 = vpow.pop %v763
    %v765 = vmul.f32 %v755, 1.442695
    %v766 = vpow.pop %v765
    %v767 = vmul.f32 %v756, 1.442695
    %v768 = vpow.pop %v767
    %v769 = vadd.f32 %v758, 1.0
    %v770 = vadd.f32 %v760, 1.0
    %v771 = vadd.f32 %v762, 1.0
    %v772 = vadd.f32 %v764, 1.0
    %v773 = vadd.f32 %v766, 1.0
    %v774 = vadd.f32 %v768, 1.0
    %v775 = vrcp.pop %v769
    %v776 = vmul.f32 %v769, %v775
    %v777 = vsub.f32 1.0, %v776
    %v778 = vmul.f32 %v775, %v777
    %v779 = vadd.f32 %v775, %v778
    %vm780 = vweird.f32 %v769
    %vm781 = vweird.f32 %v775
    %vm782 = vmor %vm780, %vm781
    %v783 = vsel %vm782, %v775, %v779
    %v784 = vand.u32 2147483647, %v769
    %vm785 = vcmp.eq.f32.partialorder %v784, 8.507059e+37
    %v786 = vand.u32 %v769, 2147483648
    %v787 = vor.u32 1.1754944e-38, %v786
    %v788 = vsel %vm785, %v787, %v783
    %v789 = vmul.f32 1.0, %v788
    %v790 = vrcp.pop %v770
    %v791 = vmul.f32 %v770, %v790
    %v792 = vsub.f32 1.0, %v791
    %v793 = vmul.f32 %v790, %v792
    %v794 = vadd.f32 %v790, %v793
    %vm795 = vweird.f32 %v770
    %vm796 = vweird.f32 %v790
    %vm797 = vmor %vm795, %vm796
    %v798 = vsel %vm797, %v790, %v794
    %v799 = vand.u32 2147483647, %v770
    %vm800 = vcmp.eq.f32.partialorder %v799, 8.507059e+37
    %v801 = vand.u32 %v770, 2147483648
    %v802 = vor.u32 1.1754944e-38, %v801
    %v803 = vsel %vm800, %v802, %v798
    %v804 = vmul.f32 1.0, %v803
    %v805 = vrcp.pop %v771
    %v806 = vmul.f32 %v771, %v805
    %v807 = vsub.f32 1.0, %v806
    %v808 = vmul.f32 %v805, %v807
    %v809 = vadd.f32 %v805, %v808
    %vm810 = vweird.f32 %v771
    %vm811 = vweird.f32 %v805
    %vm812 = vmor %vm810, %vm811
    %v813 = vsel %vm812, %v805, %v809
    %v814 = vand.u32 2147483647, %v771
    %vm815 = vcmp.eq.f32.partialorder %v814, 8.507059e+37
    %v816 = vand.u32 %v771, 2147483648
    %v817 = vor.u32 1.1754944e-38, %v816
    %v818 = vsel %vm815, %v817, %v813
    %v819 = vmul.f32 1.0, %v818
    %v820 = vrcp.pop %v772
    %v821 = vmul.f32 %v772, %v820
    %v822 = vsub.f32 1.0, %v821
    %v823 = vmul.f32 %v820, %v822
    %v824 = vadd.f32 %v820, %v823
    %vm825 = vweird.f32 %v772
    %vm826 = vweird.f32 %v820
    %vm827 = vmor %vm825, %vm826
    %v828 = vsel %vm827, %v820, %v824
    %v829 = vand.u32 2147483647, %v772
    %vm830 = vcmp.eq.f32.partialorder %v829, 8.507059e+37
    %v831 = vand.u32 %v772, 2147483648
    %v832 = vor.u32 1.1754944e-38, %v831
    %v833 = vsel %vm830, %v832, %v828
    %v834 = vmul.f32 1.0, %v833
    %v835 = vrcp.pop %v773
    %v836 = vmul.f32 %v773, %v835
    %v837 = vsub.f32 1.0, %v836
    %v838 = vmul.f32 %v835, %v837
    %v839 = vadd.f32 %v835, %v838
    %vm840 = vweird.f32 %v773
    %vm841 = vweird.f32 %v835
    %vm842 = vmor %vm840, %vm841
    %v843 = vsel %vm842, %v835, %v839
    %v844 = vand.u32 2147483647, %v773
    %vm845 = vcmp.eq.f32.partialorder %v844, 8.507059e+37
    %v846 = vand.u32 %v773, 2147483648
    %v847 = vor.u32 1.1754944e-38, %v846
    %v848 = vsel %vm845, %v847, %v843
    %v849 = vmul.f32 1.0, %v848
    %v850 = vrcp.pop %v774
    %v851 = vmul.f32 %v774, %v850
    %v852 = vsub.f32 1.0, %v851
    %v853 = vmul.f32 %v850, %v852
    %v854 = vadd.f32 %v850, %v853
    %vm855 = vweird.f32 %v774
    %vm856 = vweird.f32 %v850
    %vm857 = vmor %vm855, %vm856
    %v858 = vsel %vm857, %v850, %v854
    %v859 = vand.u32 2147483647, %v774
    %vm860 = vcmp.eq.f32.partialorder %v859, 8.507059e+37
    %v861 = vand.u32 %v774, 2147483648
    %v862 = vor.u32 1.1754944e-38, %v861
    %v863 = vsel %vm860, %v862, %v858
    %v864 = vmul.f32 1.0, %v863
    %v865 = vtanh.pop %v746
    %v866 = vtanh.pop %v750
    %v867 = vmul.f32 %v804, 0.0
    %v868 = vmul.f32 %v849, 0.0
    %v869 = vmul.f32 %v789, %v865
    %v870 = vmul.f32 %v834, %v866
    %v871 = vadd.f32 %v867, %v869
    %v872 = vadd.f32 %v868, %v870
    %v873 = vtanh.pop %v871
    %v874 = vtanh.pop %v872
    %v875 = vmul.f32 %v819, %v873
    %v876 = vmul.f32 %v864, %v874
    %v877 = vpack.c.bf16 %v875, %v875
    %v878 = vpack.c.bf16 %v876, %v876
    %879 = vst [vmem:[#allocation2] sm:$0xf] %v877
    %880 = vst [vmem:[#allocation2 + $0x4] sm:$0xf] %v878
    %s881 = smul.u32 2, 4
    %s882 = smul.addr %s881, 8
    %s883 = scalar_lea.vmem [#allocation3], %s882
    %v884 = vld [vmem:[%s883] sm:$0xff]
    %v885 = vld [vmem:[%s883 + $0x8] sm:$0xff]
    %v886 = vld [vmem:[%s883 + $0x10] sm:$0xff]
    %v887 = vld [vmem:[%s883 + $0x18] sm:$0xff]
    %v888 = vld [vmem:[%s883 + $0x20] sm:$0xff]
    %v889 = vld [vmem:[%s883 + $0x28] sm:$0xff]
    %v890 = vld [vmem:[%s883 + $0x30] sm:$0xff]
    %v891 = vld [vmem:[%s883 + $0x38] sm:$0xff]
    %v894 = vunpack.c.l.b16 %v877
    %v895 = vunpack.c.l.b16 %v878
    %v896 = vpack.c.b16 %v895, %v894
    %898 = vmatpush.bf16.msra.mxu0 %v651
    %899 = vmatpush.bf16.msra.mxu0 %v647
    %900 = vmatpush.bf16.msra.mxu0 %v643
    %901 = vmatpush.bf16.msra.mxu0 %v639
    %902 = vmatpush.bf16.msra.mxu0 %v635
    %903 = vmatpush.bf16.msra.mxu0 %v631
    %904 = vmatpush.bf16.msra.mxu0 %v627
    %905 = vmatpush.bf16.msra.mxu0 %v623
    %906 = vmatmul.bf16.gmra.mxu0 %v896
    %v907 = vpop.f32.mrf.mxu0
    %v908 = vadd.f32 0.0, %v907
    %v909 = vpop.f32.mrf.mxu0
    %v910 = vadd.f32 0.0, %v909
    %911 = vdwg.mxu0
    %912 = vmatpush.bf16.msra.mxu0 %v652
    %913 = vmatpush.bf16.msra.mxu0 %v648
    %914 = vmatpush.bf16.msra.mxu0 %v644
    %915 = vmatpush.bf16.msra.mxu0 %v640
    %916 = vmatpush.bf16.msra.mxu0 %v636
    %917 = vmatpush.bf16.msra.mxu0 %v632
    %918 = vmatpush.bf16.msra.mxu0 %v628
    %919 = vmatpush.bf16.msra.mxu0 %v624
    %920 = vmatmul.bf16.gmra.mxu0 %v896
    %v921 = vpop.f32.mrf.mxu0
    %v922 = vadd.f32 0.0, %v921
    %v923 = vpop.f32.mrf.mxu0
    %v924 = vadd.f32 0.0, %v923
    %925 = vdwg.mxu0
    %926 = vmatpush.bf16.msra.mxu0 %v653
    %927 = vmatpush.bf16.msra.mxu0 %v649
    %928 = vmatpush.bf16.msra.mxu0 %v645
    %929 = vmatpush.bf16.msra.mxu0 %v641
    %930 = vmatpush.bf16.msra.mxu0 %v637
    %931 = vmatpush.bf16.msra.mxu0 %v633
    %932 = vmatpush.bf16.msra.mxu0 %v629
    %933 = vmatpush.bf16.msra.mxu0 %v625
    %934 = vmatmul.bf16.gmra.mxu0 %v896
    %v935 = vpop.f32.mrf.mxu0
    %v936 = vadd.f32 0.0, %v935
    %v937 = vpop.f32.mrf.mxu0
    %v938 = vadd.f32 0.0, %v937
    %939 = vdwg.mxu0
    %940 = vmatpush.bf16.msra.mxu0 %v654
    %941 = vmatpush.bf16.msra.mxu0 %v650
    %942 = vmatpush.bf16.msra.mxu0 %v646
    %943 = vmatpush.bf16.msra.mxu0 %v642
    %944 = vmatpush.bf16.msra.mxu0 %v638
    %945 = vmatpush.bf16.msra.mxu0 %v634
    %946 = vmatpush.bf16.msra.mxu0 %v630
    %947 = vmatpush.bf16.msra.mxu0 %v626
    %948 = vmatmul.bf16.gmra.mxu0 %v896
    %v949 = vpop.f32.mrf.mxu0
    %v950 = vadd.f32 0.0, %v949
    %v951 = vpop.f32.mrf.mxu0
    %v952 = vadd.f32 0.0, %v951
    %953 = vdwg.mxu0
    %v954 = vadd.f32 %v884, %v908
    %v955 = vadd.f32 %v885, %v922
    %v956 = vadd.f32 %v886, %v936
    %v957 = vadd.f32 %v887, %v950
    %v958 = vadd.f32 %v888, %v910
    %v959 = vadd.f32 %v889, %v924
    %v960 = vadd.f32 %v890, %v938
    %v961 = vadd.f32 %v891, %v952
    %v962 = vxor.u32 %v954, 2147483648
    %v963 = vxor.u32 %v955, 2147483648
    %v964 = vxor.u32 %v956, 2147483648
    %v965 = vxor.u32 %v958, 2147483648
    %v966 = vxor.u32 %v959, 2147483648
    %v967 = vxor.u32 %v960, 2147483648
    %v968 = vmul.f32 %v962, 1.442695
    %v969 = vpow.pop %v968
    %v970 = vmul.f32 %v963, 1.442695
    %v971 = vpow.pop %v970
    %v972 = vmul.f32 %v964, 1.442695
    %v973 = vpow.pop %v972
    %v974 = vmul.f32 %v965, 1.442695
    %v975 = vpow.pop %v974
    %v976 = vmul.f32 %v966, 1.442695
    %v977 = vpow.pop %v976
    %v978 = vmul.f32 %v967, 1.442695
    %v979 = vpow.pop %v978
    %v980 = vadd.f32 %v969, 1.0
    %v981 = vadd.f32 %v971, 1.0
    %v982 = vadd.f32 %v973, 1.0
    %v983 = vadd.f32 %v975, 1.0
    %v984 = vadd.f32 %v977, 1.0
    %v985 = vadd.f32 %v979, 1.0
    %v986 = vrcp.pop %v980
    %v987 = vmul.f32 %v980, %v986
    %v988 = vsub.f32 1.0, %v987
    %v989 = vmul.f32 %v986, %v988
    %v990 = vadd.f32 %v986, %v989
    %vm991 = vweird.f32 %v980
    %vm992 = vweird.f32 %v986
    %vm993 = vmor %vm991, %vm992
    %v994 = vsel %vm993, %v986, %v990
    %v995 = vand.u32 2147483647, %v980
    %vm996 = vcmp.eq.f32.partialorder %v995, 8.507059e+37
    %v997 = vand.u32 %v980, 2147483648
    %v998 = vor.u32 1.1754944e-38, %v997
    %v999 = vsel %vm996, %v998, %v994
    %v1000 = vmul.f32 1.0, %v999
    %v1001 = vrcp.pop %v981
    %v1002 = vmul.f32 %v981, %v1001
    %v1003 = vsub.f32 1.0, %v1002
    %v1004 = vmul.f32 %v1001, %v1003
    %v1005 = vadd.f32 %v1001, %v1004
    %vm1006 = vweird.f32 %v981
    %vm1007 = vweird.f32 %v1001
    %vm1008 = vmor %vm1006, %vm1007
    %v1009 = vsel %vm1008, %v1001, %v1005
    %v1010 = vand.u32 2147483647, %v981
    %vm1011 = vcmp.eq.f32.partialorder %v1010, 8.507059e+37
    %v1012 = vand.u32 %v981, 2147483648
    %v1013 = vor.u32 1.1754944e-38, %v1012
    %v1014 = vsel %vm1011, %v1013, %v1009
    %v1015 = vmul.f32 1.0, %v1014
    %v1016 = vrcp.pop %v982
    %v1017 = vmul.f32 %v982, %v1016
    %v1018 = vsub.f32 1.0, %v1017
    %v1019 = vmul.f32 %v1016, %v1018
    %v1020 = vadd.f32 %v1016, %v1019
    %vm1021 = vweird.f32 %v982
    %vm1022 = vweird.f32 %v1016
    %vm1023 = vmor %vm1021, %vm1022
    %v1024 = vsel %vm1023, %v1016, %v1020
    %v1025 = vand.u32 2147483647, %v982
    %vm1026 = vcmp.eq.f32.partialorder %v1025, 8.507059e+37
    %v1027 = vand.u32 %v982, 2147483648
    %v1028 = vor.u32 1.1754944e-38, %v1027
    %v1029 = vsel %vm1026, %v1028, %v1024
    %v1030 = vmul.f32 1.0, %v1029
    %v1031 = vrcp.pop %v983
    %v1032 = vmul.f32 %v983, %v1031
    %v1033 = vsub.f32 1.0, %v1032
    %v1034 = vmul.f32 %v1031, %v1033
    %v1035 = vadd.f32 %v1031, %v1034
    %vm1036 = vweird.f32 %v983
    %vm1037 = vweird.f32 %v1031
    %vm1038 = vmor %vm1036, %vm1037
    %v1039 = vsel %vm1038, %v1031, %v1035
    %v1040 = vand.u32 2147483647, %v983
    %vm1041 = vcmp.eq.f32.partialorder %v1040, 8.507059e+37
    %v1042 = vand.u32 %v983, 2147483648
    %v1043 = vor.u32 1.1754944e-38, %v1042
    %v1044 = vsel %vm1041, %v1043, %v1039
    %v1045 = vmul.f32 1.0, %v1044
    %v1046 = vrcp.pop %v984
    %v1047 = vmul.f32 %v984, %v1046
    %v1048 = vsub.f32 1.0, %v1047
    %v1049 = vmul.f32 %v1046, %v1048
    %v1050 = vadd.f32 %v1046, %v1049
    %vm1051 = vweird.f32 %v984
    %vm1052 = vweird.f32 %v1046
    %vm1053 = vmor %vm1051, %vm1052
    %v1054 = vsel %vm1053, %v1046, %v1050
    %v1055 = vand.u32 2147483647, %v984
    %vm1056 = vcmp.eq.f32.partialorder %v1055, 8.507059e+37
    %v1057 = vand.u32 %v984, 2147483648
    %v1058 = vor.u32 1.1754944e-38, %v1057
    %v1059 = vsel %vm1056, %v1058, %v1054
    %v1060 = vmul.f32 1.0, %v1059
    %v1061 = vrcp.pop %v985
    %v1062 = vmul.f32 %v985, %v1061
    %v1063 = vsub.f32 1.0, %v1062
    %v1064 = vmul.f32 %v1061, %v1063
    %v1065 = vadd.f32 %v1061, %v1064
    %vm1066 = vweird.f32 %v985
    %vm1067 = vweird.f32 %v1061
    %vm1068 = vmor %vm1066, %vm1067
    %v1069 = vsel %vm1068, %v1061, %v1065
    %v1070 = vand.u32 2147483647, %v985
    %vm1071 = vcmp.eq.f32.partialorder %v1070, 8.507059e+37
    %v1072 = vand.u32 %v985, 2147483648
    %v1073 = vor.u32 1.1754944e-38, %v1072
    %v1074 = vsel %vm1071, %v1073, %v1069
    %v1075 = vmul.f32 1.0, %v1074
    %v1076 = vtanh.pop %v957
    %v1077 = vtanh.pop %v961
    %v1078 = vmul.f32 %v1015, %v871
    %v1079 = vmul.f32 %v1060, %v872
    %v1080 = vmul.f32 %v1000, %v1076
    %v1081 = vmul.f32 %v1045, %v1077
    %v1082 = vadd.f32 %v1078, %v1080
    %v1083 = vadd.f32 %v1079, %v1081
    %v1084 = vtanh.pop %v1082
    %v1085 = vtanh.pop %v1083
    %v1086 = vmul.f32 %v1030, %v1084
    %v1087 = vmul.f32 %v1075, %v1085
    %v1088 = vpack.c.bf16 %v1086, %v1086
    %v1089 = vpack.c.bf16 %v1087, %v1087
    %s1090 = scalar_lea.vmem [#allocation2], 8
    %1091 = vst [vmem:[%s1090] sm:$0xf] %v1088
    %1092 = vst [vmem:[%s1090 + $0x4] sm:$0xf] %v1089
    %s1093 = smul.u32 4, 4
    %s1094 = smul.addr %s1093, 8
    %s1095 = scalar_lea.vmem [#allocation3], %s1094
    %v1096 = vld [vmem:[%s1095] sm:$0xff]
    %v1097 = vld [vmem:[%s1095 + $0x8] sm:$0xff]
    %v1098 = vld [vmem:[%s1095 + $0x10] sm:$0xff]
    %v1099 = vld [vmem:[%s1095 + $0x18] sm:$0xff]
    %v1100 = vld [vmem:[%s1095 + $0x20] sm:$0xff]
    %v1101 = vld [vmem:[%s1095 + $0x28] sm:$0xff]
    %v1102 = vld [vmem:[%s1095 + $0x30] sm:$0xff]
    %v1103 = vld [vmem:[%s1095 + $0x38] sm:$0xff]
    %v1106 = vunpack.c.l.b16 %v1088
    %v1107 = vunpack.c.l.b16 %v1089
    %v1108 = vpack.c.b16 %v1107, %v1106
    %1110 = vmatpush.bf16.msra.mxu0 %v651
    %1111 = vmatpush.bf16.msra.mxu0 %v647
    %1112 = vmatpush.bf16.msra.mxu0 %v643
    %1113 = vmatpush.bf16.msra.mxu0 %v639
    %1114 = vmatpush.bf16.msra.mxu0 %v635
    %1115 = vmatpush.bf16.msra.mxu0 %v631
    %1116 = vmatpush.bf16.msra.mxu0 %v627
    %1117 = vmatpush.bf16.msra.mxu0 %v623
    %1118 = vmatmul.bf16.gmra.mxu0 %v1108
    %v1119 = vpop.f32.mrf.mxu0
    %v1120 = vadd.f32 0.0, %v1119
    %v1121 = vpop.f32.mrf.mxu0
    %v1122 = vadd.f32 0.0, %v1121
    %1123 = vdwg.mxu0
    %1124 = vmatpush.bf16.msra.mxu0 %v652
    %1125 = vmatpush.bf16.msra.mxu0 %v648
    %1126 = vmatpush.bf16.msra.mxu0 %v644
    %1127 = vmatpush.bf16.msra.mxu0 %v640
    %1128 = vmatpush.bf16.msra.mxu0 %v636
    %1129 = vmatpush.bf16.msra.mxu0 %v632
    %1130 = vmatpush.bf16.msra.mxu0 %v628
    %1131 = vmatpush.bf16.msra.mxu0 %v624
    %1132 = vmatmul.bf16.gmra.mxu0 %v1108
    %v1133 = vpop.f32.mrf.mxu0
    %v1134 = vadd.f32 0.0, %v1133
    %v1135 = vpop.f32.mrf.mxu0
    %v1136 = vadd.f32 0.0, %v1135
    %1137 = vdwg.mxu0
    %1138 = vmatpush.bf16.msra.mxu0 %v653
    %1139 = vmatpush.bf16.msra.mxu0 %v649
    %1140 = vmatpush.bf16.msra.mxu0 %v645
    %1141 = vmatpush.bf16.msra.mxu0 %v641
    %1142 = vmatpush.bf16.msra.mxu0 %v637
    %1143 = vmatpush.bf16.msra.mxu0 %v633
    %1144 = vmatpush.bf16.msra.mxu0 %v629
    %1145 = vmatpush.bf16.msra.mxu0 %v625
    %1146 = vmatmul.bf16.gmra.mxu0 %v1108
    %v1147 = vpop.f32.mrf.mxu0
    %v1148 = vadd.f32 0.0, %v1147
    %v1149 = vpop.f32.mrf.mxu0
    %v1150 = vadd.f32 0.0, %v1149
    %1151 = vdwg.mxu0
    %1152 = vmatpush.bf16.msra.mxu0 %v654
    %1153 = vmatpush.bf16.msra.mxu0 %v650
    %1154 = vmatpush.bf16.msra.mxu0 %v646
    %1155 = vmatpush.bf16.msra.mxu0 %v642
    %1156 = vmatpush.bf16.msra.mxu0 %v638
    %1157 = vmatpush.bf16.msra.mxu0 %v634
    %1158 = vmatpush.bf16.msra.mxu0 %v630
    %1159 = vmatpush.bf16.msra.mxu0 %v626
    %1160 = vmatmul.bf16.gmra.mxu0 %v1108
    %v1161 = vpop.f32.mrf.mxu0
    %v1162 = vadd.f32 0.0, %v1161
    %v1163 = vpop.f32.mrf.mxu0
    %v1164 = vadd.f32 0.0, %v1163
    %1165 = vdwg.mxu0
    %v1166 = vadd.f32 %v1096, %v1120
    %v1167 = vadd.f32 %v1097, %v1134
    %v1168 = vadd.f32 %v1098, %v1148
    %v1169 = vadd.f32 %v1099, %v1162
    %v1170 = vadd.f32 %v1100, %v1122
    %v1171 = vadd.f32 %v1101, %v1136
    %v1172 = vadd.f32 %v1102, %v1150
    %v1173 = vadd.f32 %v1103, %v1164
    %v1174 = vxor.u32 %v1166, 2147483648
    %v1175 = vxor.u32 %v1167, 2147483648
    %v1176 = vxor.u32 %v1168, 2147483648
    %v1177 = vxor.u32 %v1170, 2147483648
    %v1178 = vxor.u32 %v1171, 2147483648
    %v1179 = vxor.u32 %v1172, 2147483648
    %v1180 = vmul.f32 %v1174, 1.442695
    %v1181 = vpow.pop %v1180
    %v1182 = vmul.f32 %v1175, 1.442695
    %v1183 = vpow.pop %v1182
    %v1184 = vmul.f32 %v1176, 1.442695
    %v1185 = vpow.pop %v1184
    %v1186 = vmul.f32 %v1177, 1.442695
    %v1187 = vpow.pop %v1186
    %v1188 = vmul.f32 %v1178, 1.442695
    %v1189 = vpow.pop %v1188
    %v1190 = vmul.f32 %v1179, 1.442695
    %v1191 = vpow.pop %v1190
    %v1192 = vadd.f32 %v1181, 1.0
    %v1193 = vadd.f32 %v1183, 1.0
    %v1194 = vadd.f32 %v1185, 1.0
    %v1195 = vadd.f32 %v1187, 1.0
    %v1196 = vadd.f32 %v1189, 1.0
    %v1197 = vadd.f32 %v1191, 1.0
    %v1198 = vrcp.pop %v1192
    %v1199 = vmul.f32 %v1192, %v1198
    %v1200 = vsub.f32 1.0, %v1199
    %v1201 = vmul.f32 %v1198, %v1200
    %v1202 = vadd.f32 %v1198, %v1201
    %vm1203 = vweird.f32 %v1192
    %vm1204 = vweird.f32 %v1198
    %vm1205 = vmor %vm1203, %vm1204
    %v1206 = vsel %vm1205, %v1198, %v1202
    %v1207 = vand.u32 2147483647, %v1192
    %vm1208 = vcmp.eq.f32.partialorder %v1207, 8.507059e+37
    %v1209 = vand.u32 %v1192, 2147483648
    %v1210 = vor.u32 1.1754944e-38, %v1209
    %v1211 = vsel %vm1208, %v1210, %v1206
    %v1212 = vmul.f32 1.0, %v1211
    %v1213 = vrcp.pop %v1193
    %v1214 = vmul.f32 %v1193, %v1213
    %v1215 = vsub.f32 1.0, %v1214
    %v1216 = vmul.f32 %v1213, %v1215
    %v1217 = vadd.f32 %v1213, %v1216
    %vm1218 = vweird.f32 %v1193
    %vm1219 = vweird.f32 %v1213
    %vm1220 = vmor %vm1218, %vm1219
    %v1221 = vsel %vm1220, %v1213, %v1217
    %v1222 = vand.u32 2147483647, %v1193
    %vm1223 = vcmp.eq.f32.partialorder %v1222, 8.507059e+37
    %v1224 = vand.u32 %v1193, 2147483648
    %v1225 = vor.u32 1.1754944e-38, %v1224
    %v1226 = vsel %vm1223, %v1225, %v1221
    %v1227 = vmul.f32 1.0, %v1226
    %v1228 = vrcp.pop %v1194
    %v1229 = vmul.f32 %v1194, %v1228
    %v1230 = vsub.f32 1.0, %v1229
    %v1231 = vmul.f32 %v1228, %v1230
    %v1232 = vadd.f32 %v1228, %v1231
    %vm1233 = vweird.f32 %v1194
    %vm1234 = vweird.f32 %v1228
    %vm1235 = vmor %vm1233, %vm1234
    %v1236 = vsel %vm1235, %v1228, %v1232
    %v1237 = vand.u32 2147483647, %v1194
    %vm1238 = vcmp.eq.f32.partialorder %v1237, 8.507059e+37
    %v1239 = vand.u32 %v1194, 2147483648
    %v1240 = vor.u32 1.1754944e-38, %v1239
    %v1241 = vsel %vm1238, %v1240, %v1236
    %v1242 = vmul.f32 1.0, %v1241
    %v1243 = vrcp.pop %v1195
    %v1244 = vmul.f32 %v1195, %v1243
    %v1245 = vsub.f32 1.0, %v1244
    %v1246 = vmul.f32 %v1243, %v1245
    %v1247 = vadd.f32 %v1243, %v1246
    %vm1248 = vweird.f32 %v1195
    %vm1249 = vweird.f32 %v1243
    %vm1250 = vmor %vm1248, %vm1249
    %v1251 = vsel %vm1250, %v1243, %v1247
    %v1252 = vand.u32 2147483647, %v1195
    %vm1253 = vcmp.eq.f32.partialorder %v1252, 8.507059e+37
    %v1254 = vand.u32 %v1195, 2147483648
    %v1255 = vor.u32 1.1754944e-38, %v1254
    %v1256 = vsel %vm1253, %v1255, %v1251
    %v1257 = vmul.f32 1.0, %v1256
    %v1258 = vrcp.pop %v1196
    %v1259 = vmul.f32 %v1196, %v1258
    %v1260 = vsub.f32 1.0, %v1259
    %v1261 = vmul.f32 %v1258, %v1260
    %v1262 = vadd.f32 %v1258, %v1261
    %vm1263 = vweird.f32 %v1196
    %vm1264 = vweird.f32 %v1258
    %vm1265 = vmor %vm1263, %vm1264
    %v1266 = vsel %vm1265, %v1258, %v1262
    %v1267 = vand.u32 2147483647, %v1196
    %vm1268 = vcmp.eq.f32.partialorder %v1267, 8.507059e+37
    %v1269 = vand.u32 %v1196, 2147483648
    %v1270 = vor.u32 1.1754944e-38, %v1269
    %v1271 = vsel %vm1268, %v1270, %v1266
    %v1272 = vmul.f32 1.0, %v1271
    %v1273 = vrcp.pop %v1197
    %v1274 = vmul.f32 %v1197, %v1273
    %v1275 = vsub.f32 1.0, %v1274
    %v1276 = vmul.f32 %v1273, %v1275
    %v1277 = vadd.f32 %v1273, %v1276
    %vm1278 = vweird.f32 %v1197
    %vm1279 = vweird.f32 %v1273
    %vm1280 = vmor %vm1278, %vm1279
    %v1281 = vsel %vm1280, %v1273, %v1277
    %v1282 = vand.u32 2147483647, %v1197
    %vm1283 = vcmp.eq.f32.partialorder %v1282, 8.507059e+37
    %v1284 = vand.u32 %v1197, 2147483648
    %v1285 = vor.u32 1.1754944e-38, %v1284
    %v1286 = vsel %vm1283, %v1285, %v1281
    %v1287 = vmul.f32 1.0, %v1286
    %v1288 = vtanh.pop %v1169
    %v1289 = vtanh.pop %v1173
    %v1290 = vmul.f32 %v1227, %v1082
    %v1291 = vmul.f32 %v1272, %v1083
    %v1292 = vmul.f32 %v1212, %v1288
    %v1293 = vmul.f32 %v1257, %v1289
    %v1294 = vadd.f32 %v1290, %v1292
    %v1295 = vadd.f32 %v1291, %v1293
    %v1296 = vtanh.pop %v1294
    %v1297 = vtanh.pop %v1295
    %v1298 = vmul.f32 %v1242, %v1296
    %v1299 = vmul.f32 %v1287, %v1297
    %v1300 = vpack.c.bf16 %v1298, %v1298
    %v1301 = vpack.c.bf16 %v1299, %v1299
    %s1302 = scalar_lea.vmem [#allocation2], 16
    %1303 = vst [vmem:[%s1302] sm:$0xf] %v1300
    %1304 = vst [vmem:[%s1302 + $0x4] sm:$0xf] %v1301
    %s1305 = smul.u32 6, 4
    %s1306 = smul.addr %s1305, 8
    %s1307 = scalar_lea.vmem [#allocation3], %s1306
    %v1308 = vld [vmem:[%s1307] sm:$0xff]
    %v1309 = vld [vmem:[%s1307 + $0x8] sm:$0xff]
    %v1310 = vld [vmem:[%s1307 + $0x10] sm:$0xff]
    %v1311 = vld [vmem:[%s1307 + $0x18] sm:$0xff]
    %v1312 = vld [vmem:[%s1307 + $0x20] sm:$0xff]
    %v1313 = vld [vmem:[%s1307 + $0x28] sm:$0xff]
    %v1314 = vld [vmem:[%s1307 + $0x30] sm:$0xff]
    %v1315 = vld [vmem:[%s1307 + $0x38] sm:$0xff]
    %v1318 = vunpack.c.l.b16 %v1300
    %v1319 = vunpack.c.l.b16 %v1301
    %v1320 = vpack.c.b16 %v1319, %v1318
    %1322 = vmatpush.bf16.msra.mxu0 %v651
    %1323 = vmatpush.bf16.msra.mxu0 %v647
    %1324 = vmatpush.bf16.msra.mxu0 %v643
    %1325 = vmatpush.bf16.msra.mxu0 %v639
    %1326 = vmatpush.bf16.msra.mxu0 %v635
    %1327 = vmatpush.bf16.msra.mxu0 %v631
    %1328 = vmatpush.bf16.msra.mxu0 %v627
    %1329 = vmatpush.bf16.msra.mxu0 %v623
    %1330 = vmatmul.bf16.gmra.mxu0 %v1320
    %v1331 = vpop.f32.mrf.mxu0
    %v1332 = vadd.f32 0.0, %v1331
    %v1333 = vpop.f32.mrf.mxu0
    %v1334 = vadd.f32 0.0, %v1333
    %1335 = vdwg.mxu0
    %1336 = vmatpush.bf16.msra.mxu0 %v652
    %1337 = vmatpush.bf16.msra.mxu0 %v648
    %1338 = vmatpush.bf16.msra.mxu0 %v644
    %1339 = vmatpush.bf16.msra.mxu0 %v640
    %1340 = vmatpush.bf16.msra.mxu0 %v636
    %1341 = vmatpush.bf16.msra.mxu0 %v632
    %1342 = vmatpush.bf16.msra.mxu0 %v628
    %1343 = vmatpush.bf16.msra.mxu0 %v624
    %1344 = vmatmul.bf16.gmra.mxu0 %v1320
    %v1345 = vpop.f32.mrf.mxu0
    %v1346 = vadd.f32 0.0, %v1345
    %v1347 = vpop.f32.mrf.mxu0
    %v1348 = vadd.f32 0.0, %v1347
    %1349 = vdwg.mxu0
    %1350 = vmatpush.bf16.msra.mxu0 %v653
    %1351 = vmatpush.bf16.msra.mxu0 %v649
    %1352 = vmatpush.bf16.msra.mxu0 %v645
    %1353 = vmatpush.bf16.msra.mxu0 %v641
    %1354 = vmatpush.bf16.msra.mxu0 %v637
    %1355 = vmatpush.bf16.msra.mxu0 %v633
    %1356 = vmatpush.bf16.msra.mxu0 %v629
    %1357 = vmatpush.bf16.msra.mxu0 %v625
    %1358 = vmatmul.bf16.gmra.mxu0 %v1320
    %v1359 = vpop.f32.mrf.mxu0
    %v1360 = vadd.f32 0.0, %v1359
    %v1361 = vpop.f32.mrf.mxu0
    %v1362 = vadd.f32 0.0, %v1361
    %1363 = vdwg.mxu0
    %1364 = vmatpush.bf16.msra.mxu0 %v654
    %1365 = vmatpush.bf16.msra.mxu0 %v650
    %1366 = vmatpush.bf16.msra.mxu0 %v646
    %1367 = vmatpush.bf16.msra.mxu0 %v642
    %1368 = vmatpush.bf16.msra.mxu0 %v638
    %1369 = vmatpush.bf16.msra.mxu0 %v634
    %1370 = vmatpush.bf16.msra.mxu0 %v630
    %1371 = vmatpush.bf16.msra.mxu0 %v626
    %1372 = vmatmul.bf16.gmra.mxu0 %v1320
    %v1373 = vpop.f32.mrf.mxu0
    %v1374 = vadd.f32 0.0, %v1373
    %v1375 = vpop.f32.mrf.mxu0
    %v1376 = vadd.f32 0.0, %v1375
    %1377 = vdwg.mxu0
    %v1378 = vadd.f32 %v1308, %v1332
    %v1379 = vadd.f32 %v1309, %v1346
    %v1380 = vadd.f32 %v1310, %v1360
    %v1381 = vadd.f32 %v1311, %v1374
    %v1382 = vadd.f32 %v1312, %v1334
    %v1383 = vadd.f32 %v1313, %v1348
    %v1384 = vadd.f32 %v1314, %v1362
    %v1385 = vadd.f32 %v1315, %v1376
    %v1386 = vxor.u32 %v1378, 2147483648
    %v1387 = vxor.u32 %v1379, 2147483648
    %v1388 = vxor.u32 %v1380, 2147483648
    %v1389 = vxor.u32 %v1382, 2147483648
    %v1390 = vxor.u32 %v1383, 2147483648
    %v1391 = vxor.u32 %v1384, 2147483648
    %v1392 = vmul.f32 %v1386, 1.442695
    %v1393 = vpow.pop %v1392
    %v1394 = vmul.f32 %v1387, 1.442695
    %v1395 = vpow.pop %v1394
    %v1396 = vmul.f32 %v1388, 1.442695
    %v1397 = vpow.pop %v1396
    %v1398 = vmul.f32 %v1389, 1.442695
    %v1399 = vpow.pop %v1398
    %v1400 = vmul.f32 %v1390, 1.442695
    %v1401 = vpow.pop %v1400
    %v1402 = vmul.f32 %v1391, 1.442695
    %v1403 = vpow.pop %v1402
    %v1404 = vadd.f32 %v1393, 1.0
    %v1405 = vadd.f32 %v1395, 1.0
    %v1406 = vadd.f32 %v1397, 1.0
    %v1407 = vadd.f32 %v1399, 1.0
    %v1408 = vadd.f32 %v1401, 1.0
    %v1409 = vadd.f32 %v1403, 1.0
    %v1410 = vrcp.pop %v1404
    %v1411 = vmul.f32 %v1404, %v1410
    %v1412 = vsub.f32 1.0, %v1411
    %v1413 = vmul.f32 %v1410, %v1412
    %v1414 = vadd.f32 %v1410, %v1413
    %vm1415 = vweird.f32 %v1404
    %vm1416 = vweird.f32 %v1410
    %vm1417 = vmor %vm1415, %vm1416
    %v1418 = vsel %vm1417, %v1410, %v1414
    %v1419 = vand.u32 2147483647, %v1404
    %vm1420 = vcmp.eq.f32.partialorder %v1419, 8.507059e+37
    %v1421 = vand.u32 %v1404, 2147483648
    %v1422 = vor.u32 1.1754944e-38, %v1421
    %v1423 = vsel %vm1420, %v1422, %v1418
    %v1424 = vmul.f32 1.0, %v1423
    %v1425 = vrcp.pop %v1405
    %v1426 = vmul.f32 %v1405, %v1425
    %v1427 = vsub.f32 1.0, %v1426
    %v1428 = vmul.f32 %v1425, %v1427
    %v1429 = vadd.f32 %v1425, %v1428
    %vm1430 = vweird.f32 %v1405
    %vm1431 = vweird.f32 %v1425
    %vm1432 = vmor %vm1430, %vm1431
    %v1433 = vsel %vm1432, %v1425, %v1429
    %v1434 = vand.u32 2147483647, %v1405
    %vm1435 = vcmp.eq.f32.partialorder %v1434, 8.507059e+37
    %v1436 = vand.u32 %v1405, 2147483648
    %v1437 = vor.u32 1.1754944e-38, %v1436
    %v1438 = vsel %vm1435, %v1437, %v1433
    %v1439 = vmul.f32 1.0, %v1438
    %v1440 = vrcp.pop %v1406
    %v1441 = vmul.f32 %v1406, %v1440
    %v1442 = vsub.f32 1.0, %v1441
    %v1443 = vmul.f32 %v1440, %v1442
    %v1444 = vadd.f32 %v1440, %v1443
    %vm1445 = vweird.f32 %v1406
    %vm1446 = vweird.f32 %v1440
    %vm1447 = vmor %vm1445, %vm1446
    %v1448 = vsel %vm1447, %v1440, %v1444
    %v1449 = vand.u32 2147483647, %v1406
    %vm1450 = vcmp.eq.f32.partialorder %v1449, 8.507059e+37
    %v1451 = vand.u32 %v1406, 2147483648
    %v1452 = vor.u32 1.1754944e-38, %v1451
    %v1453 = vsel %vm1450, %v1452, %v1448
    %v1454 = vmul.f32 1.0, %v1453
    %v1455 = vrcp.pop %v1407
    %v1456 = vmul.f32 %v1407, %v1455
    %v1457 = vsub.f32 1.0, %v1456
    %v1458 = vmul.f32 %v1455, %v1457
    %v1459 = vadd.f32 %v1455, %v1458
    %vm1460 = vweird.f32 %v1407
    %vm1461 = vweird.f32 %v1455
    %vm1462 = vmor %vm1460, %vm1461
    %v1463 = vsel %vm1462, %v1455, %v1459
    %v1464 = vand.u32 2147483647, %v1407
    %vm1465 = vcmp.eq.f32.partialorder %v1464, 8.507059e+37
    %v1466 = vand.u32 %v1407, 2147483648
    %v1467 = vor.u32 1.1754944e-38, %v1466
    %v1468 = vsel %vm1465, %v1467, %v1463
    %v1469 = vmul.f32 1.0, %v1468
    %v1470 = vrcp.pop %v1408
    %v1471 = vmul.f32 %v1408, %v1470
    %v1472 = vsub.f32 1.0, %v1471
    %v1473 = vmul.f32 %v1470, %v1472
    %v1474 = vadd.f32 %v1470, %v1473
    %vm1475 = vweird.f32 %v1408
    %vm1476 = vweird.f32 %v1470
    %vm1477 = vmor %vm1475, %vm1476
    %v1478 = vsel %vm1477, %v1470, %v1474
    %v1479 = vand.u32 2147483647, %v1408
    %vm1480 = vcmp.eq.f32.partialorder %v1479, 8.507059e+37
    %v1481 = vand.u32 %v1408, 2147483648
    %v1482 = vor.u32 1.1754944e-38, %v1481
    %v1483 = vsel %vm1480, %v1482, %v1478
    %v1484 = vmul.f32 1.0, %v1483
    %v1485 = vrcp.pop %v1409
    %v1486 = vmul.f32 %v1409, %v1485
    %v1487 = vsub.f32 1.0, %v1486
    %v1488 = vmul.f32 %v1485, %v1487
    %v1489 = vadd.f32 %v1485, %v1488
    %vm1490 = vweird.f32 %v1409
    %vm1491 = vweird.f32 %v1485
    %vm1492 = vmor %vm1490, %vm1491
    %v1493 = vsel %vm1492, %v1485, %v1489
    %v1494 = vand.u32 2147483647, %v1409
    %vm1495 = vcmp.eq.f32.partialorder %v1494, 8.507059e+37
    %v1496 = vand.u32 %v1409, 2147483648
    %v1497 = vor.u32 1.1754944e-38, %v1496
    %v1498 = vsel %vm1495, %v1497, %v1493
    %v1499 = vmul.f32 1.0, %v1498
    %v1500 = vtanh.pop %v1381
    %v1501 = vtanh.pop %v1385
    %v1502 = vmul.f32 %v1439, %v1294
    %v1503 = vmul.f32 %v1484, %v1295
    %v1504 = vmul.f32 %v1424, %v1500
    %v1505 = vmul.f32 %v1469, %v1501
    %v1506 = vadd.f32 %v1502, %v1504
    %v1507 = vadd.f32 %v1503, %v1505
    %v1508 = vtanh.pop %v1506
    %v1509 = vtanh.pop %v1507
    %v1510 = vmul.f32 %v1454, %v1508
    %v1511 = vmul.f32 %v1499, %v1509
    %v1512 = vpack.c.bf16 %v1510, %v1510
    %v1513 = vpack.c.bf16 %v1511, %v1511
    %s1514 = scalar_lea.vmem [#allocation2], 24
    %1515 = vst [vmem:[%s1514] sm:$0xf] %v1512
    %1516 = vst [vmem:[%s1514 + $0x4] sm:$0xf] %v1513
    %s1517 = smul.u32 8, 4
    %s1518 = smul.addr %s1517, 8
    %s1519 = scalar_lea.vmem [#allocation3], %s1518
    %v1520 = vld [vmem:[%s1519] sm:$0xff]
    %v1521 = vld [vmem:[%s1519 + $0x8] sm:$0xff]
    %v1522 = vld [vmem:[%s1519 + $0x10] sm:$0xff]
    %v1523 = vld [vmem:[%s1519 + $0x18] sm:$0xff]
    %v1524 = vld [vmem:[%s1519 + $0x20] sm:$0xff]
    %v1525 = vld [vmem:[%s1519 + $0x28] sm:$0xff]
    %v1526 = vld [vmem:[%s1519 + $0x30] sm:$0xff]
    %v1527 = vld [vmem:[%s1519 + $0x38] sm:$0xff]
    %v1530 = vunpack.c.l.b16 %v1512
    %v1531 = vunpack.c.l.b16 %v1513
    %v1532 = vpack.c.b16 %v1531, %v1530
    %1534 = vmatpush.bf16.msra.mxu0 %v651
    %1535 = vmatpush.bf16.msra.mxu0 %v647
    %1536 = vmatpush.bf16.msra.mxu0 %v643
    %1537 = vmatpush.bf16.msra.mxu0 %v639
    %1538 = vmatpush.bf16.msra.mxu0 %v635
    %1539 = vmatpush.bf16.msra.mxu0 %v631
    %1540 = vmatpush.bf16.msra.mxu0 %v627
    %1541 = vmatpush.bf16.msra.mxu0 %v623
    %1542 = vmatmul.bf16.gmra.mxu0 %v1532
    %v1543 = vpop.f32.mrf.mxu0
    %v1544 = vadd.f32 0.0, %v1543
    %v1545 = vpop.f32.mrf.mxu0
    %v1546 = vadd.f32 0.0, %v1545
    %1547 = vdwg.mxu0
    %1548 = vmatpush.bf16.msra.mxu0 %v652
    %1549 = vmatpush.bf16.msra.mxu0 %v648
    %1550 = vmatpush.bf16.msra.mxu0 %v644
    %1551 = vmatpush.bf16.msra.mxu0 %v640
    %1552 = vmatpush.bf16.msra.mxu0 %v636
    %1553 = vmatpush.bf16.msra.mxu0 %v632
    %1554 = vmatpush.bf16.msra.mxu0 %v628
    %1555 = vmatpush.bf16.msra.mxu0 %v624
    %1556 = vmatmul.bf16.gmra.mxu0 %v1532
    %v1557 = vpop.f32.mrf.mxu0
    %v1558 = vadd.f32 0.0, %v1557
    %v1559 = vpop.f32.mrf.mxu0
    %v1560 = vadd.f32 0.0, %v1559
    %1561 = vdwg.mxu0
    %1562 = vmatpush.bf16.msra.mxu0 %v653
    %1563 = vmatpush.bf16.msra.mxu0 %v649
    %1564 = vmatpush.bf16.msra.mxu0 %v645
    %1565 = vmatpush.bf16.msra.mxu0 %v641
    %1566 = vmatpush.bf16.msra.mxu0 %v637
    %1567 = vmatpush.bf16.msra.mxu0 %v633
    %1568 = vmatpush.bf16.msra.mxu0 %v629
    %1569 = vmatpush.bf16.msra.mxu0 %v625
    %1570 = vmatmul.bf16.gmra.mxu0 %v1532
    %v1571 = vpop.f32.mrf.mxu0
    %v1572 = vadd.f32 0.0, %v1571
    %v1573 = vpop.f32.mrf.mxu0
    %v1574 = vadd.f32 0.0, %v1573
    %1575 = vdwg.mxu0
    %1576 = vmatpush.bf16.msra.mxu0 %v654
    %1577 = vmatpush.bf16.msra.mxu0 %v650
    %1578 = vmatpush.bf16.msra.mxu0 %v646
    %1579 = vmatpush.bf16.msra.mxu0 %v642
    %1580 = vmatpush.bf16.msra.mxu0 %v638
    %1581 = vmatpush.bf16.msra.mxu0 %v634
    %1582 = vmatpush.bf16.msra.mxu0 %v630
    %1583 = vmatpush.bf16.msra.mxu0 %v626
    %1584 = vmatmul.bf16.gmra.mxu0 %v1532
    %v1585 = vpop.f32.mrf.mxu0
    %v1586 = vadd.f32 0.0, %v1585
    %v1587 = vpop.f32.mrf.mxu0
    %v1588 = vadd.f32 0.0, %v1587
    %1589 = vdwg.mxu0
    %v1590 = vadd.f32 %v1520, %v1544
    %v1591 = vadd.f32 %v1521, %v1558
    %v1592 = vadd.f32 %v1522, %v1572
    %v1593 = vadd.f32 %v1523, %v1586
    %v1594 = vadd.f32 %v1524, %v1546
    %v1595 = vadd.f32 %v1525, %v1560
    %v1596 = vadd.f32 %v1526, %v1574
    %v1597 = vadd.f32 %v1527, %v1588
    %v1598 = vxor.u32 %v1590, 2147483648
    %v1599 = vxor.u32 %v1591, 2147483648
    %v1600 = vxor.u32 %v1592, 2147483648
    %v1601 = vxor.u32 %v1594, 2147483648
    %v1602 = vxor.u32 %v1595, 2147483648
    %v1603 = vxor.u32 %v1596, 2147483648
    %v1604 = vmul.f32 %v1598, 1.442695
    %v1605 = vpow.pop %v1604
    %v1606 = vmul.f32 %v1599, 1.442695
    %v1607 = vpow.pop %v1606
    %v1608 = vmul.f32 %v1600, 1.442695
    %v1609 = vpow.pop %v1608
    %v1610 = vmul.f32 %v1601, 1.442695
    %v1611 = vpow.pop %v1610
    %v1612 = vmul.f32 %v1602, 1.442695
    %v1613 = vpow.pop %v1612
    %v1614 = vmul.f32 %v1603, 1.442695
    %v1615 = vpow.pop %v1614
    %v1616 = vadd.f32 %v1605, 1.0
    %v1617 = vadd.f32 %v1607, 1.0
    %v1618 = vadd.f32 %v1609, 1.0
    %v1619 = vadd.f32 %v1611, 1.0
    %v1620 = vadd.f32 %v1613, 1.0
    %v1621 = vadd.f32 %v1615, 1.0
    %v1622 = vrcp.pop %v1616
    %v1623 = vmul.f32 %v1616, %v1622
    %v1624 = vsub.f32 1.0, %v1623
    %v1625 = vmul.f32 %v1622, %v1624
    %v1626 = vadd.f32 %v1622, %v1625
    %vm1627 = vweird.f32 %v1616
    %vm1628 = vweird.f32 %v1622
    %vm1629 = vmor %vm1627, %vm1628
    %v1630 = vsel %vm1629, %v1622, %v1626
    %v1631 = vand.u32 2147483647, %v1616
    %vm1632 = vcmp.eq.f32.partialorder %v1631, 8.507059e+37
    %v1633 = vand.u32 %v1616, 2147483648
    %v1634 = vor.u32 1.1754944e-38, %v1633
    %v1635 = vsel %vm1632, %v1634, %v1630
    %v1636 = vmul.f32 1.0, %v1635
    %v1637 = vrcp.pop %v1617
    %v1638 = vmul.f32 %v1617, %v1637
    %v1639 = vsub.f32 1.0, %v1638
    %v1640 = vmul.f32 %v1637, %v1639
    %v1641 = vadd.f32 %v1637, %v1640
    %vm1642 = vweird.f32 %v1617
    %vm1643 = vweird.f32 %v1637
    %vm1644 = vmor %vm1642, %vm1643
    %v1645 = vsel %vm1644, %v1637, %v1641
    %v1646 = vand.u32 2147483647, %v1617
    %vm1647 = vcmp.eq.f32.partialorder %v1646, 8.507059e+37
    %v1648 = vand.u32 %v1617, 2147483648
    %v1649 = vor.u32 1.1754944e-38, %v1648
    %v1650 = vsel %vm1647, %v1649, %v1645
    %v1651 = vmul.f32 1.0, %v1650
    %v1652 = vrcp.pop %v1618
    %v1653 = vmul.f32 %v1618, %v1652
    %v1654 = vsub.f32 1.0, %v1653
    %v1655 = vmul.f32 %v1652, %v1654
    %v1656 = vadd.f32 %v1652, %v1655
    %vm1657 = vweird.f32 %v1618
    %vm1658 = vweird.f32 %v1652
    %vm1659 = vmor %vm1657, %vm1658
    %v1660 = vsel %vm1659, %v1652, %v1656
    %v1661 = vand.u32 2147483647, %v1618
    %vm1662 = vcmp.eq.f32.partialorder %v1661, 8.507059e+37
    %v1663 = vand.u32 %v1618, 2147483648
    %v1664 = vor.u32 1.1754944e-38, %v1663
    %v1665 = vsel %vm1662, %v1664, %v1660
    %v1666 = vmul.f32 1.0, %v1665
    %v1667 = vrcp.pop %v1619
    %v1668 = vmul.f32 %v1619, %v1667
    %v1669 = vsub.f32 1.0, %v1668
    %v1670 = vmul.f32 %v1667, %v1669
    %v1671 = vadd.f32 %v1667, %v1670
    %vm1672 = vweird.f32 %v1619
    %vm1673 = vweird.f32 %v1667
    %vm1674 = vmor %vm1672, %vm1673
    %v1675 = vsel %vm1674, %v1667, %v1671
    %v1676 = vand.u32 2147483647, %v1619
    %vm1677 = vcmp.eq.f32.partialorder %v1676, 8.507059e+37
    %v1678 = vand.u32 %v1619, 2147483648
    %v1679 = vor.u32 1.1754944e-38, %v1678
    %v1680 = vsel %vm1677, %v1679, %v1675
    %v1681 = vmul.f32 1.0, %v1680
    %v1682 = vrcp.pop %v1620
    %v1683 = vmul.f32 %v1620, %v1682
    %v1684 = vsub.f32 1.0, %v1683
    %v1685 = vmul.f32 %v1682, %v1684
    %v1686 = vadd.f32 %v1682, %v1685
    %vm1687 = vweird.f32 %v1620
    %vm1688 = vweird.f32 %v1682
    %vm1689 = vmor %vm1687, %vm1688
    %v1690 = vsel %vm1689, %v1682, %v1686
    %v1691 = vand.u32 2147483647, %v1620
    %vm1692 = vcmp.eq.f32.partialorder %v1691, 8.507059e+37
    %v1693 = vand.u32 %v1620, 2147483648
    %v1694 = vor.u32 1.1754944e-38, %v1693
    %v1695 = vsel %vm1692, %v1694, %v1690
    %v1696 = vmul.f32 1.0, %v1695
    %v1697 = vrcp.pop %v1621
    %v1698 = vmul.f32 %v1621, %v1697
    %v1699 = vsub.f32 1.0, %v1698
    %v1700 = vmul.f32 %v1697, %v1699
    %v1701 = vadd.f32 %v1697, %v1700
    %vm1702 = vweird.f32 %v1621
    %vm1703 = vweird.f32 %v1697
    %vm1704 = vmor %vm1702, %vm1703
    %v1705 = vsel %vm1704, %v1697, %v1701
    %v1706 = vand.u32 2147483647, %v1621
    %vm1707 = vcmp.eq.f32.partialorder %v1706, 8.507059e+37
    %v1708 = vand.u32 %v1621, 2147483648
    %v1709 = vor.u32 1.1754944e-38, %v1708
    %v1710 = vsel %vm1707, %v1709, %v1705
    %v1711 = vmul.f32 1.0, %v1710
    %v1712 = vtanh.pop %v1593
    %v1713 = vtanh.pop %v1597
    %v1714 = vmul.f32 %v1651, %v1506
    %v1715 = vmul.f32 %v1696, %v1507
    %v1716 = vmul.f32 %v1636, %v1712
    %v1717 = vmul.f32 %v1681, %v1713
    %v1718 = vadd.f32 %v1714, %v1716
    %v1719 = vadd.f32 %v1715, %v1717
    %v1720 = vtanh.pop %v1718
    %v1721 = vtanh.pop %v1719
    %v1722 = vmul.f32 %v1666, %v1720
    %v1723 = vmul.f32 %v1711, %v1721
    %v1724 = vpack.c.bf16 %v1722, %v1722
    %v1725 = vpack.c.bf16 %v1723, %v1723
    %s1726 = scalar_lea.vmem [#allocation2], 32
    %1727 = vst [vmem:[%s1726] sm:$0xf] %v1724
    %1728 = vst [vmem:[%s1726 + $0x4] sm:$0xf] %v1725
    %s1729 = smul.u32 10, 4
    %s1730 = smul.addr %s1729, 8
    %s1731 = scalar_lea.vmem [#allocation3], %s1730
    %v1732 = vld [vmem:[%s1731] sm:$0xff]
    %v1733 = vld [vmem:[%s1731 + $0x8] sm:$0xff]
    %v1734 = vld [vmem:[%s1731 + $0x10] sm:$0xff]
    %v1735 = vld [vmem:[%s1731 + $0x18] sm:$0xff]
    %v1736 = vld [vmem:[%s1731 + $0x20] sm:$0xff]
    %v1737 = vld [vmem:[%s1731 + $0x28] sm:$0xff]
    %v1738 = vld [vmem:[%s1731 + $0x30] sm:$0xff]
    %v1739 = vld [vmem:[%s1731 + $0x38] sm:$0xff]
    %v1742 = vunpack.c.l.b16 %v1724
    %v1743 = vunpack.c.l.b16 %v1725
    %v1744 = vpack.c.b16 %v1743, %v1742
    %1746 = vmatpush.bf16.msra.mxu0 %v651
    %1747 = vmatpush.bf16.msra.mxu0 %v647
    %1748 = vmatpush.bf16.msra.mxu0 %v643
    %1749 = vmatpush.bf16.msra.mxu0 %v639
    %1750 = vmatpush.bf16.msra.mxu0 %v635
    %1751 = vmatpush.bf16.msra.mxu0 %v631
    %1752 = vmatpush.bf16.msra.mxu0 %v627
    %1753 = vmatpush.bf16.msra.mxu0 %v623
    %1754 = vmatmul.bf16.gmra.mxu0 %v1744
    %v1755 = vpop.f32.mrf.mxu0
    %v1756 = vadd.f32 0.0, %v1755
    %v1757 = vpop.f32.mrf.mxu0
    %v1758 = vadd.f32 0.0, %v1757
    %1759 = vdwg.mxu0
    %1760 = vmatpush.bf16.msra.mxu0 %v652
    %1761 = vmatpush.bf16.msra.mxu0 %v648
    %1762 = vmatpush.bf16.msra.mxu0 %v644
    %1763 = vmatpush.bf16.msra.mxu0 %v640
    %1764 = vmatpush.bf16.msra.mxu0 %v636
    %1765 = vmatpush.bf16.msra.mxu0 %v632
    %1766 = vmatpush.bf16.msra.mxu0 %v628
    %1767 = vmatpush.bf16.msra.mxu0 %v624
    %1768 = vmatmul.bf16.gmra.mxu0 %v1744
    %v1769 = vpop.f32.mrf.mxu0
    %v1770 = vadd.f32 0.0, %v1769
    %v1771 = vpop.f32.mrf.mxu0
    %v1772 = vadd.f32 0.0, %v1771
    %1773 = vdwg.mxu0
    %1774 = vmatpush.bf16.msra.mxu0 %v653
    %1775 = vmatpush.bf16.msra.mxu0 %v649
    %1776 = vmatpush.bf16.msra.mxu0 %v645
    %1777 = vmatpush.bf16.msra.mxu0 %v641
    %1778 = vmatpush.bf16.msra.mxu0 %v637
    %1779 = vmatpush.bf16.msra.mxu0 %v633
    %1780 = vmatpush.bf16.msra.mxu0 %v629
    %1781 = vmatpush.bf16.msra.mxu0 %v625
    %1782 = vmatmul.bf16.gmra.mxu0 %v1744
    %v1783 = vpop.f32.mrf.mxu0
    %v1784 = vadd.f32 0.0, %v1783
    %v1785 = vpop.f32.mrf.mxu0
    %v1786 = vadd.f32 0.0, %v1785
    %1787 = vdwg.mxu0
    %1788 = vmatpush.bf16.msra.mxu0 %v654
    %1789 = vmatpush.bf16.msra.mxu0 %v650
    %1790 = vmatpush.bf16.msra.mxu0 %v646
    %1791 = vmatpush.bf16.msra.mxu0 %v642
    %1792 = vmatpush.bf16.msra.mxu0 %v638
    %1793 = vmatpush.bf16.msra.mxu0 %v634
    %1794 = vmatpush.bf16.msra.mxu0 %v630
    %1795 = vmatpush.bf16.msra.mxu0 %v626
    %1796 = vmatmul.bf16.gmra.mxu0 %v1744
    %v1797 = vpop.f32.mrf.mxu0
    %v1798 = vadd.f32 0.0, %v1797
    %v1799 = vpop.f32.mrf.mxu0
    %v1800 = vadd.f32 0.0, %v1799
    %1801 = vdwg.mxu0
    %v1802 = vadd.f32 %v1732, %v1756
    %v1803 = vadd.f32 %v1733, %v1770
    %v1804 = vadd.f32 %v1734, %v1784
    %v1805 = vadd.f32 %v1735, %v1798
    %v1806 = vadd.f32 %v1736, %v1758
    %v1807 = vadd.f32 %v1737, %v1772
    %v1808 = vadd.f32 %v1738, %v1786
    %v1809 = vadd.f32 %v1739, %v1800
    %v1810 = vxor.u32 %v1802, 2147483648
    %v1811 = vxor.u32 %v1803, 2147483648
    %v1812 = vxor.u32 %v1804, 2147483648
    %v1813 = vxor.u32 %v1806, 2147483648
    %v1814 = vxor.u32 %v1807, 2147483648
    %v1815 = vxor.u32 %v1808, 2147483648
    %v1816 = vmul.f32 %v1810, 1.442695
    %v1817 = vpow.pop %v1816
    %v1818 = vmul.f32 %v1811, 1.442695
    %v1819 = vpow.pop %v1818
    %v1820 = vmul.f32 %v1812, 1.442695
    %v1821 = vpow.pop %v1820
    %v1822 = vmul.f32 %v1813, 1.442695
    %v1823 = vpow.pop %v1822
    %v1824 = vmul.f32 %v1814, 1.442695
    %v1825 = vpow.pop %v1824
    %v1826 = vmul.f32 %v1815, 1.442695
    %v1827 = vpow.pop %v1826
    %v1828 = vadd.f32 %v1817, 1.0
    %v1829 = vadd.f32 %v1819, 1.0
    %v1830 = vadd.f32 %v1821, 1.0
    %v1831 = vadd.f32 %v1823, 1.0
    %v1832 = vadd.f32 %v1825, 1.0
    %v1833 = vadd.f32 %v1827, 1.0
    %v1834 = vrcp.pop %v1828
    %v1835 = vmul.f32 %v1828, %v1834
    %v1836 = vsub.f32 1.0, %v1835
    %v1837 = vmul.f32 %v1834, %v1836
    %v1838 = vadd.f32 %v1834, %v1837
    %vm1839 = vweird.f32 %v1828
    %vm1840 = vweird.f32 %v1834
    %vm1841 = vmor %vm1839, %vm1840
    %v1842 = vsel %vm1841, %v1834, %v1838
    %v1843 = vand.u32 2147483647, %v1828
    %vm1844 = vcmp.eq.f32.partialorder %v1843, 8.507059e+37
    %v1845 = vand.u32 %v1828, 2147483648
    %v1846 = vor.u32 1.1754944e-38, %v1845
    %v1847 = vsel %vm1844, %v1846, %v1842
    %v1848 = vmul.f32 1.0, %v1847
    %v1849 = vrcp.pop %v1829
    %v1850 = vmul.f32 %v1829, %v1849
    %v1851 = vsub.f32 1.0, %v1850
    %v1852 = vmul.f32 %v1849, %v1851
    %v1853 = vadd.f32 %v1849, %v1852
    %vm1854 = vweird.f32 %v1829
    %vm1855 = vweird.f32 %v1849
    %vm1856 = vmor %vm1854, %vm1855
    %v1857 = vsel %vm1856, %v1849, %v1853
    %v1858 = vand.u32 2147483647, %v1829
    %vm1859 = vcmp.eq.f32.partialorder %v1858, 8.507059e+37
    %v1860 = vand.u32 %v1829, 2147483648
    %v1861 = vor.u32 1.1754944e-38, %v1860
    %v1862 = vsel %vm1859, %v1861, %v1857
    %v1863 = vmul.f32 1.0, %v1862
    %v1864 = vrcp.pop %v1830
    %v1865 = vmul.f32 %v1830, %v1864
    %v1866 = vsub.f32 1.0, %v1865
    %v1867 = vmul.f32 %v1864, %v1866
    %v1868 = vadd.f32 %v1864, %v1867
    %vm1869 = vweird.f32 %v1830
    %vm1870 = vweird.f32 %v1864
    %vm1871 = vmor %vm1869, %vm1870
    %v1872 = vsel %vm1871, %v1864, %v1868
    %v1873 = vand.u32 2147483647, %v1830
    %vm1874 = vcmp.eq.f32.partialorder %v1873, 8.507059e+37
    %v1875 = vand.u32 %v1830, 2147483648
    %v1876 = vor.u32 1.1754944e-38, %v1875
    %v1877 = vsel %vm1874, %v1876, %v1872
    %v1878 = vmul.f32 1.0, %v1877
    %v1879 = vrcp.pop %v1831
    %v1880 = vmul.f32 %v1831, %v1879
    %v1881 = vsub.f32 1.0, %v1880
    %v1882 = vmul.f32 %v1879, %v1881
    %v1883 = vadd.f32 %v1879, %v1882
    %vm1884 = vweird.f32 %v1831
    %vm1885 = vweird.f32 %v1879
    %vm1886 = vmor %vm1884, %vm1885
    %v1887 = vsel %vm1886, %v1879, %v1883
    %v1888 = vand.u32 2147483647, %v1831
    %vm1889 = vcmp.eq.f32.partialorder %v1888, 8.507059e+37
    %v1890 = vand.u32 %v1831, 2147483648
    %v1891 = vor.u32 1.1754944e-38, %v1890
    %v1892 = vsel %vm1889, %v1891, %v1887
    %v1893 = vmul.f32 1.0, %v1892
    %v1894 = vrcp.pop %v1832
    %v1895 = vmul.f32 %v1832, %v1894
    %v1896 = vsub.f32 1.0, %v1895
    %v1897 = vmul.f32 %v1894, %v1896
    %v1898 = vadd.f32 %v1894, %v1897
    %vm1899 = vweird.f32 %v1832
    %vm1900 = vweird.f32 %v1894
    %vm1901 = vmor %vm1899, %vm1900
    %v1902 = vsel %vm1901, %v1894, %v1898
    %v1903 = vand.u32 2147483647, %v1832
    %vm1904 = vcmp.eq.f32.partialorder %v1903, 8.507059e+37
    %v1905 = vand.u32 %v1832, 2147483648
    %v1906 = vor.u32 1.1754944e-38, %v1905
    %v1907 = vsel %vm1904, %v1906, %v1902
    %v1908 = vmul.f32 1.0, %v1907
    %v1909 = vrcp.pop %v1833
    %v1910 = vmul.f32 %v1833, %v1909
    %v1911 = vsub.f32 1.0, %v1910
    %v1912 = vmul.f32 %v1909, %v1911
    %v1913 = vadd.f32 %v1909, %v1912
    %vm1914 = vweird.f32 %v1833
    %vm1915 = vweird.f32 %v1909
    %vm1916 = vmor %vm1914, %vm1915
    %v1917 = vsel %vm1916, %v1909, %v1913
    %v1918 = vand.u32 2147483647, %v1833
    %vm1919 = vcmp.eq.f32.partialorder %v1918, 8.507059e+37
    %v1920 = vand.u32 %v1833, 2147483648
    %v1921 = vor.u32 1.1754944e-38, %v1920
    %v1922 = vsel %vm1919, %v1921, %v1917
    %v1923 = vmul.f32 1.0, %v1922
    %v1924 = vtanh.pop %v1805
    %v1925 = vtanh.pop %v1809
    %v1926 = vmul.f32 %v1863, %v1718
    %v1927 = vmul.f32 %v1908, %v1719
    %v1928 = vmul.f32 %v1848, %v1924
    %v1929 = vmul.f32 %v1893, %v1925
    %v1930 = vadd.f32 %v1926, %v1928
    %v1931 = vadd.f32 %v1927, %v1929
    %v1932 = vtanh.pop %v1930
    %v1933 = vtanh.pop %v1931
    %v1934 = vmul.f32 %v1878, %v1932
    %v1935 = vmul.f32 %v1923, %v1933
    %v1936 = vpack.c.bf16 %v1934, %v1934
    %v1937 = vpack.c.bf16 %v1935, %v1935
    %s1938 = scalar_lea.vmem [#allocation2], 40
    %1939 = vst [vmem:[%s1938] sm:$0xf] %v1936
    %1940 = vst [vmem:[%s1938 + $0x4] sm:$0xf] %v1937
    %s1941 = smul.u32 12, 4
    %s1942 = smul.addr %s1941, 8
    %s1943 = scalar_lea.vmem [#allocation3], %s1942
    %v1944 = vld [vmem:[%s1943] sm:$0xff]
    %v1945 = vld [vmem:[%s1943 + $0x8] sm:$0xff]
    %v1946 = vld [vmem:[%s1943 + $0x10] sm:$0xff]
    %v1947 = vld [vmem:[%s1943 + $0x18] sm:$0xff]
    %v1948 = vld [vmem:[%s1943 + $0x20] sm:$0xff]
    %v1949 = vld [vmem:[%s1943 + $0x28] sm:$0xff]
    %v1950 = vld [vmem:[%s1943 + $0x30] sm:$0xff]
    %v1951 = vld [vmem:[%s1943 + $0x38] sm:$0xff]
    %v1954 = vunpack.c.l.b16 %v1936
    %v1955 = vunpack.c.l.b16 %v1937
    %v1956 = vpack.c.b16 %v1955, %v1954
    %1958 = vmatpush.bf16.msra.mxu0 %v651
    %1959 = vmatpush.bf16.msra.mxu0 %v647
    %1960 = vmatpush.bf16.msra.mxu0 %v643
    %1961 = vmatpush.bf16.msra.mxu0 %v639
    %1962 = vmatpush.bf16.msra.mxu0 %v635
    %1963 = vmatpush.bf16.msra.mxu0 %v631
    %1964 = vmatpush.bf16.msra.mxu0 %v627
    %1965 = vmatpush.bf16.msra.mxu0 %v623
    %1966 = vmatmul.bf16.gmra.mxu0 %v1956
    %v1967 = vpop.f32.mrf.mxu0
    %v1968 = vadd.f32 0.0, %v1967
    %v1969 = vpop.f32.mrf.mxu0
    %v1970 = vadd.f32 0.0, %v1969
    %1971 = vdwg.mxu0
    %1972 = vmatpush.bf16.msra.mxu0 %v652
    %1973 = vmatpush.bf16.msra.mxu0 %v648
    %1974 = vmatpush.bf16.msra.mxu0 %v644
    %1975 = vmatpush.bf16.msra.mxu0 %v640
    %1976 = vmatpush.bf16.msra.mxu0 %v636
    %1977 = vmatpush.bf16.msra.mxu0 %v632
    %1978 = vmatpush.bf16.msra.mxu0 %v628
    %1979 = vmatpush.bf16.msra.mxu0 %v624
    %1980 = vmatmul.bf16.gmra.mxu0 %v1956
    %v1981 = vpop.f32.mrf.mxu0
    %v1982 = vadd.f32 0.0, %v1981
    %v1983 = vpop.f32.mrf.mxu0
    %v1984 = vadd.f32 0.0, %v1983
    %1985 = vdwg.mxu0
    %1986 = vmatpush.bf16.msra.mxu0 %v653
    %1987 = vmatpush.bf16.msra.mxu0 %v649
    %1988 = vmatpush.bf16.msra.mxu0 %v645
    %1989 = vmatpush.bf16.msra.mxu0 %v641
    %1990 = vmatpush.bf16.msra.mxu0 %v637
    %1991 = vmatpush.bf16.msra.mxu0 %v633
    %1992 = vmatpush.bf16.msra.mxu0 %v629
    %1993 = vmatpush.bf16.msra.mxu0 %v625
    %1994 = vmatmul.bf16.gmra.mxu0 %v1956
    %v1995 = vpop.f32.mrf.mxu0
    %v1996 = vadd.f32 0.0, %v1995
    %v1997 = vpop.f32.mrf.mxu0
    %v1998 = vadd.f32 0.0, %v1997
    %1999 = vdwg.mxu0
    %2000 = vmatpush.bf16.msra.mxu0 %v654
    %2001 = vmatpush.bf16.msra.mxu0 %v650
    %2002 = vmatpush.bf16.msra.mxu0 %v646
    %2003 = vmatpush.bf16.msra.mxu0 %v642
    %2004 = vmatpush.bf16.msra.mxu0 %v638
    %2005 = vmatpush.bf16.msra.mxu0 %v634
    %2006 = vmatpush.bf16.msra.mxu0 %v630
    %2007 = vmatpush.bf16.msra.mxu0 %v626
    %2008 = vmatmul.bf16.gmra.mxu0 %v1956
    %v2009 = vpop.f32.mrf.mxu0
    %v2010 = vadd.f32 0.0, %v2009
    %v2011 = vpop.f32.mrf.mxu0
    %v2012 = vadd.f32 0.0, %v2011
    %2013 = vdwg.mxu0
    %v2014 = vadd.f32 %v1944, %v1968
    %v2015 = vadd.f32 %v1945, %v1982
    %v2016 = vadd.f32 %v1946, %v1996
    %v2017 = vadd.f32 %v1947, %v2010
    %v2018 = vadd.f32 %v1948, %v1970
    %v2019 = vadd.f32 %v1949, %v1984
    %v2020 = vadd.f32 %v1950, %v1998
    %v2021 = vadd.f32 %v1951, %v2012
    %v2022 = vxor.u32 %v2014, 2147483648
    %v2023 = vxor.u32 %v2015, 2147483648
    %v2024 = vxor.u32 %v2016, 2147483648
    %v2025 = vxor.u32 %v2018, 2147483648
    %v2026 = vxor.u32 %v2019, 2147483648
    %v2027 = vxor.u32 %v2020, 2147483648
    %v2028 = vmul.f32 %v2022, 1.442695
    %v2029 = vpow.pop %v2028
    %v2030 = vmul.f32 %v2023, 1.442695
    %v2031 = vpow.pop %v2030
    %v2032 = vmul.f32 %v2024, 1.442695
    %v2033 = vpow.pop %v2032
    %v2034 = vmul.f32 %v2025, 1.442695
    %v2035 = vpow.pop %v2034
    %v2036 = vmul.f32 %v2026, 1.442695
    %v2037 = vpow.pop %v2036
    %v2038 = vmul.f32 %v2027, 1.442695
    %v2039 = vpow.pop %v2038
    %v2040 = vadd.f32 %v2029, 1.0
    %v2041 = vadd.f32 %v2031, 1.0
    %v2042 = vadd.f32 %v2033, 1.0
    %v2043 = vadd.f32 %v2035, 1.0
    %v2044 = vadd.f32 %v2037, 1.0
    %v2045 = vadd.f32 %v2039, 1.0
    %v2046 = vrcp.pop %v2040
    %v2047 = vmul.f32 %v2040, %v2046
    %v2048 = vsub.f32 1.0, %v2047
    %v2049 = vmul.f32 %v2046, %v2048
    %v2050 = vadd.f32 %v2046, %v2049
    %vm2051 = vweird.f32 %v2040
    %vm2052 = vweird.f32 %v2046
    %vm2053 = vmor %vm2051, %vm2052
    %v2054 = vsel %vm2053, %v2046, %v2050
    %v2055 = vand.u32 2147483647, %v2040
    %vm2056 = vcmp.eq.f32.partialorder %v2055, 8.507059e+37
    %v2057 = vand.u32 %v2040, 2147483648
    %v2058 = vor.u32 1.1754944e-38, %v2057
    %v2059 = vsel %vm2056, %v2058, %v2054
    %v2060 = vmul.f32 1.0, %v2059
    %v2061 = vrcp.pop %v2041
    %v2062 = vmul.f32 %v2041, %v2061
    %v2063 = vsub.f32 1.0, %v2062
    %v2064 = vmul.f32 %v2061, %v2063
    %v2065 = vadd.f32 %v2061, %v2064
    %vm2066 = vweird.f32 %v2041
    %vm2067 = vweird.f32 %v2061
    %vm2068 = vmor %vm2066, %vm2067
    %v2069 = vsel %vm2068, %v2061, %v2065
    %v2070 = vand.u32 2147483647, %v2041
    %vm2071 = vcmp.eq.f32.partialorder %v2070, 8.507059e+37
    %v2072 = vand.u32 %v2041, 2147483648
    %v2073 = vor.u32 1.1754944e-38, %v2072
    %v2074 = vsel %vm2071, %v2073, %v2069
    %v2075 = vmul.f32 1.0, %v2074
    %v2076 = vrcp.pop %v2042
    %v2077 = vmul.f32 %v2042, %v2076
    %v2078 = vsub.f32 1.0, %v2077
    %v2079 = vmul.f32 %v2076, %v2078
    %v2080 = vadd.f32 %v2076, %v2079
    %vm2081 = vweird.f32 %v2042
    %vm2082 = vweird.f32 %v2076
    %vm2083 = vmor %vm2081, %vm2082
    %v2084 = vsel %vm2083, %v2076, %v2080
    %v2085 = vand.u32 2147483647, %v2042
    %vm2086 = vcmp.eq.f32.partialorder %v2085, 8.507059e+37
    %v2087 = vand.u32 %v2042, 2147483648
    %v2088 = vor.u32 1.1754944e-38, %v2087
    %v2089 = vsel %vm2086, %v2088, %v2084
    %v2090 = vmul.f32 1.0, %v2089
    %v2091 = vrcp.pop %v2043
    %v2092 = vmul.f32 %v2043, %v2091
    %v2093 = vsub.f32 1.0, %v2092
    %v2094 = vmul.f32 %v2091, %v2093
    %v2095 = vadd.f32 %v2091, %v2094
    %vm2096 = vweird.f32 %v2043
    %vm2097 = vweird.f32 %v2091
    %vm2098 = vmor %vm2096, %vm2097
    %v2099 = vsel %vm2098, %v2091, %v2095
    %v2100 = vand.u32 2147483647, %v2043
    %vm2101 = vcmp.eq.f32.partialorder %v2100, 8.507059e+37
    %v2102 = vand.u32 %v2043, 2147483648
    %v2103 = vor.u32 1.1754944e-38, %v2102
    %v2104 = vsel %vm2101, %v2103, %v2099
    %v2105 = vmul.f32 1.0, %v2104
    %v2106 = vrcp.pop %v2044
    %v2107 = vmul.f32 %v2044, %v2106
    %v2108 = vsub.f32 1.0, %v2107
    %v2109 = vmul.f32 %v2106, %v2108
    %v2110 = vadd.f32 %v2106, %v2109
    %vm2111 = vweird.f32 %v2044
    %vm2112 = vweird.f32 %v2106
    %vm2113 = vmor %vm2111, %vm2112
    %v2114 = vsel %vm2113, %v2106, %v2110
    %v2115 = vand.u32 2147483647, %v2044
    %vm2116 = vcmp.eq.f32.partialorder %v2115, 8.507059e+37
    %v2117 = vand.u32 %v2044, 2147483648
    %v2118 = vor.u32 1.1754944e-38, %v2117
    %v2119 = vsel %vm2116, %v2118, %v2114
    %v2120 = vmul.f32 1.0, %v2119
    %v2121 = vrcp.pop %v2045
    %v2122 = vmul.f32 %v2045, %v2121
    %v2123 = vsub.f32 1.0, %v2122
    %v2124 = vmul.f32 %v2121, %v2123
    %v2125 = vadd.f32 %v2121, %v2124
    %vm2126 = vweird.f32 %v2045
    %vm2127 = vweird.f32 %v2121
    %vm2128 = vmor %vm2126, %vm2127
    %v2129 = vsel %vm2128, %v2121, %v2125
    %v2130 = vand.u32 2147483647, %v2045
    %vm2131 = vcmp.eq.f32.partialorder %v2130, 8.507059e+37
    %v2132 = vand.u32 %v2045, 2147483648
    %v2133 = vor.u32 1.1754944e-38, %v2132
    %v2134 = vsel %vm2131, %v2133, %v2129
    %v2135 = vmul.f32 1.0, %v2134
    %v2136 = vtanh.pop %v2017
    %v2137 = vtanh.pop %v2021
    %v2138 = vmul.f32 %v2075, %v1930
    %v2139 = vmul.f32 %v2120, %v1931
    %v2140 = vmul.f32 %v2060, %v2136
    %v2141 = vmul.f32 %v2105, %v2137
    %v2142 = vadd.f32 %v2138, %v2140
    %v2143 = vadd.f32 %v2139, %v2141
    %v2144 = vtanh.pop %v2142
    %v2145 = vtanh.pop %v2143
    %v2146 = vmul.f32 %v2090, %v2144
    %v2147 = vmul.f32 %v2135, %v2145
    %v2148 = vpack.c.bf16 %v2146, %v2146
    %v2149 = vpack.c.bf16 %v2147, %v2147
    %s2150 = scalar_lea.vmem [#allocation2], 48
    %2151 = vst [vmem:[%s2150] sm:$0xf] %v2148
    %2152 = vst [vmem:[%s2150 + $0x4] sm:$0xf] %v2149
    %s2153 = smul.u32 14, 4
    %s2154 = smul.addr %s2153, 8
    %s2155 = scalar_lea.vmem [#allocation3], %s2154
    %v2156 = vld [vmem:[%s2155] sm:$0xff]
    %v2157 = vld [vmem:[%s2155 + $0x8] sm:$0xff]
    %v2158 = vld [vmem:[%s2155 + $0x10] sm:$0xff]
    %v2159 = vld [vmem:[%s2155 + $0x18] sm:$0xff]
    %v2160 = vld [vmem:[%s2155 + $0x20] sm:$0xff]
    %v2161 = vld [vmem:[%s2155 + $0x28] sm:$0xff]
    %v2162 = vld [vmem:[%s2155 + $0x30] sm:$0xff]
    %v2163 = vld [vmem:[%s2155 + $0x38] sm:$0xff]
    %v2166 = vunpack.c.l.b16 %v2148
    %v2167 = vunpack.c.l.b16 %v2149
    %v2168 = vpack.c.b16 %v2167, %v2166
    %2170 = vmatpush.bf16.msra.mxu0 %v651
    %2171 = vmatpush.bf16.msra.mxu0 %v647
    %2172 = vmatpush.bf16.msra.mxu0 %v643
    %2173 = vmatpush.bf16.msra.mxu0 %v639
    %2174 = vmatpush.bf16.msra.mxu0 %v635
    %2175 = vmatpush.bf16.msra.mxu0 %v631
    %2176 = vmatpush.bf16.msra.mxu0 %v627
    %2177 = vmatpush.bf16.msra.mxu0 %v623
    %2178 = vmatmul.bf16.gmra.mxu0 %v2168
    %v2179 = vpop.f32.mrf.mxu0
    %v2180 = vadd.f32 0.0, %v2179
    %v2181 = vpop.f32.mrf.mxu0
    %v2182 = vadd.f32 0.0, %v2181
    %2183 = vdwg.mxu0
    %2184 = vmatpush.bf16.msra.mxu0 %v652
    %2185 = vmatpush.bf16.msra.mxu0 %v648
    %2186 = vmatpush.bf16.msra.mxu0 %v644
    %2187 = vmatpush.bf16.msra.mxu0 %v640
    %2188 = vmatpush.bf16.msra.mxu0 %v636
    %2189 = vmatpush.bf16.msra.mxu0 %v632
    %2190 = vmatpush.bf16.msra.mxu0 %v628
    %2191 = vmatpush.bf16.msra.mxu0 %v624
    %2192 = vmatmul.bf16.gmra.mxu0 %v2168
    %v2193 = vpop.f32.mrf.mxu0
    %v2194 = vadd.f32 0.0, %v2193
    %v2195 = vpop.f32.mrf.mxu0
    %v2196 = vadd.f32 0.0, %v2195
    %2197 = vdwg.mxu0
    %2198 = vmatpush.bf16.msra.mxu0 %v653
    %2199 = vmatpush.bf16.msra.mxu0 %v649
    %2200 = vmatpush.bf16.msra.mxu0 %v645
    %2201 = vmatpush.bf16.msra.mxu0 %v641
    %2202 = vmatpush.bf16.msra.mxu0 %v637
    %2203 = vmatpush.bf16.msra.mxu0 %v633
    %2204 = vmatpush.bf16.msra.mxu0 %v629
    %2205 = vmatpush.bf16.msra.mxu0 %v625
    %2206 = vmatmul.bf16.gmra.mxu0 %v2168
    %v2207 = vpop.f32.mrf.mxu0
    %v2208 = vadd.f32 0.0, %v2207
    %v2209 = vpop.f32.mrf.mxu0
    %v2210 = vadd.f32 0.0, %v2209
    %2211 = vdwg.mxu0
    %2212 = vmatpush.bf16.msra.mxu0 %v654
    %2213 = vmatpush.bf16.msra.mxu0 %v650
    %2214 = vmatpush.bf16.msra.mxu0 %v646
    %2215 = vmatpush.bf16.msra.mxu0 %v642
    %2216 = vmatpush.bf16.msra.mxu0 %v638
    %2217 = vmatpush.bf16.msra.mxu0 %v634
    %2218 = vmatpush.bf16.msra.mxu0 %v630
    %2219 = vmatpush.bf16.msra.mxu0 %v626
    %2220 = vmatmul.bf16.gmra.mxu0 %v2168
    %v2221 = vpop.f32.mrf.mxu0
    %v2222 = vadd.f32 0.0, %v2221
    %v2223 = vpop.f32.mrf.mxu0
    %v2224 = vadd.f32 0.0, %v2223
    %2225 = vdwg.mxu0
    %v2226 = vadd.f32 %v2156, %v2180
    %v2227 = vadd.f32 %v2157, %v2194
    %v2228 = vadd.f32 %v2158, %v2208
    %v2229 = vadd.f32 %v2159, %v2222
    %v2230 = vadd.f32 %v2160, %v2182
    %v2231 = vadd.f32 %v2161, %v2196
    %v2232 = vadd.f32 %v2162, %v2210
    %v2233 = vadd.f32 %v2163, %v2224
    %v2234 = vxor.u32 %v2226, 2147483648
    %v2235 = vxor.u32 %v2227, 2147483648
    %v2236 = vxor.u32 %v2228, 2147483648
    %v2237 = vxor.u32 %v2230, 2147483648
    %v2238 = vxor.u32 %v2231, 2147483648
    %v2239 = vxor.u32 %v2232, 2147483648
    %v2240 = vmul.f32 %v2234, 1.442695
    %v2241 = vpow.pop %v2240
    %v2242 = vmul.f32 %v2235, 1.442695
    %v2243 = vpow.pop %v2242
    %v2244 = vmul.f32 %v2236, 1.442695
    %v2245 = vpow.pop %v2244
    %v2246 = vmul.f32 %v2237, 1.442695
    %v2247 = vpow.pop %v2246
    %v2248 = vmul.f32 %v2238, 1.442695
    %v2249 = vpow.pop %v2248
    %v2250 = vmul.f32 %v2239, 1.442695
    %v2251 = vpow.pop %v2250
    %v2252 = vadd.f32 %v2241, 1.0
    %v2253 = vadd.f32 %v2243, 1.0
    %v2254 = vadd.f32 %v2245, 1.0
    %v2255 = vadd.f32 %v2247, 1.0
    %v2256 = vadd.f32 %v2249, 1.0
    %v2257 = vadd.f32 %v2251, 1.0
    %v2258 = vrcp.pop %v2252
    %v2259 = vmul.f32 %v2252, %v2258
    %v2260 = vsub.f32 1.0, %v2259
    %v2261 = vmul.f32 %v2258, %v2260
    %v2262 = vadd.f32 %v2258, %v2261
    %vm2263 = vweird.f32 %v2252
    %vm2264 = vweird.f32 %v2258
    %vm2265 = vmor %vm2263, %vm2264
    %v2266 = vsel %vm2265, %v2258, %v2262
    %v2267 = vand.u32 2147483647, %v2252
    %vm2268 = vcmp.eq.f32.partialorder %v2267, 8.507059e+37
    %v2269 = vand.u32 %v2252, 2147483648
    %v2270 = vor.u32 1.1754944e-38, %v2269
    %v2271 = vsel %vm2268, %v2270, %v2266
    %v2272 = vmul.f32 1.0, %v2271
    %v2273 = vrcp.pop %v2253
    %v2274 = vmul.f32 %v2253, %v2273
    %v2275 = vsub.f32 1.0, %v2274
    %v2276 = vmul.f32 %v2273, %v2275
    %v2277 = vadd.f32 %v2273, %v2276
    %vm2278 = vweird.f32 %v2253
    %vm2279 = vweird.f32 %v2273
    %vm2280 = vmor %vm2278, %vm2279
    %v2281 = vsel %vm2280, %v2273, %v2277
    %v2282 = vand.u32 2147483647, %v2253
    %vm2283 = vcmp.eq.f32.partialorder %v2282, 8.507059e+37
    %v2284 = vand.u32 %v2253, 2147483648
    %v2285 = vor.u32 1.1754944e-38, %v2284
    %v2286 = vsel %vm2283, %v2285, %v2281
    %v2287 = vmul.f32 1.0, %v2286
    %v2288 = vrcp.pop %v2254
    %v2289 = vmul.f32 %v2254, %v2288
    %v2290 = vsub.f32 1.0, %v2289
    %v2291 = vmul.f32 %v2288, %v2290
    %v2292 = vadd.f32 %v2288, %v2291
    %vm2293 = vweird.f32 %v2254
    %vm2294 = vweird.f32 %v2288
    %vm2295 = vmor %vm2293, %vm2294
    %v2296 = vsel %vm2295, %v2288, %v2292
    %v2297 = vand.u32 2147483647, %v2254
    %vm2298 = vcmp.eq.f32.partialorder %v2297, 8.507059e+37
    %v2299 = vand.u32 %v2254, 2147483648
    %v2300 = vor.u32 1.1754944e-38, %v2299
    %v2301 = vsel %vm2298, %v2300, %v2296
    %v2302 = vmul.f32 1.0, %v2301
    %v2303 = vrcp.pop %v2255
    %v2304 = vmul.f32 %v2255, %v2303
    %v2305 = vsub.f32 1.0, %v2304
    %v2306 = vmul.f32 %v2303, %v2305
    %v2307 = vadd.f32 %v2303, %v2306
    %vm2308 = vweird.f32 %v2255
    %vm2309 = vweird.f32 %v2303
    %vm2310 = vmor %vm2308, %vm2309
    %v2311 = vsel %vm2310, %v2303, %v2307
    %v2312 = vand.u32 2147483647, %v2255
    %vm2313 = vcmp.eq.f32.partialorder %v2312, 8.507059e+37
    %v2314 = vand.u32 %v2255, 2147483648
    %v2315 = vor.u32 1.1754944e-38, %v2314
    %v2316 = vsel %vm2313, %v2315, %v2311
    %v2317 = vmul.f32 1.0, %v2316
    %v2318 = vrcp.pop %v2256
    %v2319 = vmul.f32 %v2256, %v2318
    %v2320 = vsub.f32 1.0, %v2319
    %v2321 = vmul.f32 %v2318, %v2320
    %v2322 = vadd.f32 %v2318, %v2321
    %vm2323 = vweird.f32 %v2256
    %vm2324 = vweird.f32 %v2318
    %vm2325 = vmor %vm2323, %vm2324
    %v2326 = vsel %vm2325, %v2318, %v2322
    %v2327 = vand.u32 2147483647, %v2256
    %vm2328 = vcmp.eq.f32.partialorder %v2327, 8.507059e+37
    %v2329 = vand.u32 %v2256, 2147483648
    %v2330 = vor.u32 1.1754944e-38, %v2329
    %v2331 = vsel %vm2328, %v2330, %v2326
    %v2332 = vmul.f32 1.0, %v2331
    %v2333 = vrcp.pop %v2257
    %v2334 = vmul.f32 %v2257, %v2333
    %v2335 = vsub.f32 1.0, %v2334
    %v2336 = vmul.f32 %v2333, %v2335
    %v2337 = vadd.f32 %v2333, %v2336
    %vm2338 = vweird.f32 %v2257
    %vm2339 = vweird.f32 %v2333
    %vm2340 = vmor %vm2338, %vm2339
    %v2341 = vsel %vm2340, %v2333, %v2337
    %v2342 = vand.u32 2147483647, %v2257
    %vm2343 = vcmp.eq.f32.partialorder %v2342, 8.507059e+37
    %v2344 = vand.u32 %v2257, 2147483648
    %v2345 = vor.u32 1.1754944e-38, %v2344
    %v2346 = vsel %vm2343, %v2345, %v2341
    %v2347 = vmul.f32 1.0, %v2346
    %v2348 = vtanh.pop %v2229
    %v2349 = vtanh.pop %v2233
    %v2350 = vmul.f32 %v2287, %v2142
    %v2351 = vmul.f32 %v2332, %v2143
    %v2352 = vmul.f32 %v2272, %v2348
    %v2353 = vmul.f32 %v2317, %v2349
    %v2354 = vadd.f32 %v2350, %v2352
    %v2355 = vadd.f32 %v2351, %v2353
    %v2356 = vtanh.pop %v2354
    %v2357 = vtanh.pop %v2355
    %v2358 = vmul.f32 %v2302, %v2356
    %v2359 = vmul.f32 %v2347, %v2357
    %v2360 = vpack.c.bf16 %v2358, %v2358
    %v2361 = vpack.c.bf16 %v2359, %v2359
    %s2362 = scalar_lea.vmem [#allocation2], 56
    %2363 = vst [vmem:[%s2362] sm:$0xf] %v2360
    %2364 = vst [vmem:[%s2362 + $0x4] sm:$0xf] %v2361
    %v2365 = vld [vmem:[#allocation9] sm:$0xff]
    %v2366 = vld [vmem:[#allocation9 + $0x8] sm:$0xff]
    %v2367 = vld [vmem:[#allocation9 + $0x10] sm:$0xff]
    %v2368 = vld [vmem:[#allocation9 + $0x18] sm:$0xff]
    %v2369 = vld [vmem:[#allocation9 + $0x20] sm:$0xff]
    %v2370 = vld [vmem:[#allocation9 + $0x28] sm:$0xff]
    %v2371 = vld [vmem:[#allocation9 + $0x30] sm:$0xff]
    %v2372 = vld [vmem:[#allocation9 + $0x38] sm:$0xff]
    %v2373 = vld [vmem:[#allocation9 + $0x40] sm:$0xff]
    %v2374 = vld [vmem:[#allocation9 + $0x48] sm:$0xff]
    %v2375 = vld [vmem:[#allocation9 + $0x50] sm:$0xff]
    %v2376 = vld [vmem:[#allocation9 + $0x58] sm:$0xff]
    %v2377 = vld [vmem:[#allocation9 + $0x60] sm:$0xff]
    %v2378 = vld [vmem:[#allocation9 + $0x68] sm:$0xff]
    %v2379 = vld [vmem:[#allocation9 + $0x70] sm:$0xff]
    %v2380 = vld [vmem:[#allocation9 + $0x78] sm:$0xff]
    %v2381 = vld [vmem:[#allocation9 + $0x80] sm:$0xff]
    %v2382 = vld [vmem:[#allocation9 + $0x88] sm:$0xff]
    %v2383 = vld [vmem:[#allocation9 + $0x90] sm:$0xff]
    %v2384 = vld [vmem:[#allocation9 + $0x98] sm:$0xff]
    %v2385 = vld [vmem:[#allocation9 + $0xa0] sm:$0xff]
    %v2386 = vld [vmem:[#allocation9 + $0xa8] sm:$0xff]
    %v2387 = vld [vmem:[#allocation9 + $0xb0] sm:$0xff]
    %v2388 = vld [vmem:[#allocation9 + $0xb8] sm:$0xff]
    %v2389 = vld [vmem:[#allocation9 + $0xc0] sm:$0xff]
    %v2390 = vld [vmem:[#allocation9 + $0xc8] sm:$0xff]
    %v2391 = vld [vmem:[#allocation9 + $0xd0] sm:$0xff]
    %v2392 = vld [vmem:[#allocation9 + $0xd8] sm:$0xff]
    %v2393 = vld [vmem:[#allocation9 + $0xe0] sm:$0xff]
    %v2394 = vld [vmem:[#allocation9 + $0xe8] sm:$0xff]
    %v2395 = vld [vmem:[#allocation9 + $0xf0] sm:$0xff]
    %v2396 = vld [vmem:[#allocation9 + $0xf8] sm:$0xff]
    %v2397 = vld [vmem:[#allocation11] sm:$0xf]
    %v2398 = vld [vmem:[#allocation2] sm:$0xf]
    %v2399 = vld [vmem:[#allocation2 + $0x4] sm:$0xf]
    %v2400 = vld [vmem:[#allocation2 + $0x8] sm:$0xf]
    %v2401 = vld [vmem:[#allocation2 + $0xc] sm:$0xf]
    %v2402 = vld [vmem:[#allocation2 + $0x10] sm:$0xf]
    %v2403 = vld [vmem:[#allocation2 + $0x14] sm:$0xf]
    %v2404 = vld [vmem:[#allocation2 + $0x18] sm:$0xf]
    %v2405 = vld [vmem:[#allocation2 + $0x1c] sm:$0xf]
    %v2406 = vld [vmem:[#allocation2 + $0x20] sm:$0xf]
    %v2407 = vld [vmem:[#allocation2 + $0x24] sm:$0xf]
    %v2408 = vld [vmem:[#allocation2 + $0x28] sm:$0xf]
    %v2409 = vld [vmem:[#allocation2 + $0x2c] sm:$0xf]
    %v2410 = vld [vmem:[#allocation2 + $0x30] sm:$0xf]
    %v2411 = vld [vmem:[#allocation2 + $0x34] sm:$0xf]
    %v2412 = vld [vmem:[#allocation2 + $0x38] sm:$0xf]
    %v2413 = vld [vmem:[#allocation2 + $0x3c] sm:$0xf]
    %v2414 = vld [vmem:[#allocation8] sm:$0xff]
    %v2415 = vld [vmem:[#allocation8 + $0x8] sm:$0xff]
    %v2416 = vld [vmem:[#allocation8 + $0x10] sm:$0xff]
    %v2417 = vld [vmem:[#allocation8 + $0x18] sm:$0xff]
    %v2418 = vld [vmem:[#allocation8 + $0x20] sm:$0xff]
    %v2419 = vld [vmem:[#allocation8 + $0x28] sm:$0xff]
    %v2420 = vld [vmem:[#allocation8 + $0x30] sm:$0xff]
    %v2421 = vld [vmem:[#allocation8 + $0x38] sm:$0xff]
    %v2422 = vld [vmem:[#allocation8 + $0x40] sm:$0xff]
    %v2423 = vld [vmem:[#allocation8 + $0x48] sm:$0xff]
    %v2424 = vld [vmem:[#allocation8 + $0x50] sm:$0xff]
    %v2425 = vld [vmem:[#allocation8 + $0x58] sm:$0xff]
    %v2426 = vld [vmem:[#allocation8 + $0x60] sm:$0xff]
    %v2427 = vld [vmem:[#allocation8 + $0x68] sm:$0xff]
    %v2428 = vld [vmem:[#allocation8 + $0x70] sm:$0xff]
    %v2429 = vld [vmem:[#allocation8 + $0x78] sm:$0xff]
    %v2430 = vld [vmem:[#allocation8 + $0x80] sm:$0xff]
    %v2431 = vld [vmem:[#allocation8 + $0x88] sm:$0xff]
    %v2432 = vld [vmem:[#allocation8 + $0x90] sm:$0xff]
    %v2433 = vld [vmem:[#allocation8 + $0x98] sm:$0xff]
    %v2434 = vld [vmem:[#allocation8 + $0xa0] sm:$0xff]
    %v2435 = vld [vmem:[#allocation8 + $0xa8] sm:$0xff]
    %v2436 = vld [vmem:[#allocation8 + $0xb0] sm:$0xff]
    %v2437 = vld [vmem:[#allocation8 + $0xb8] sm:$0xff]
    %v2438 = vld [vmem:[#allocation8 + $0xc0] sm:$0xff]
    %v2439 = vld [vmem:[#allocation8 + $0xc8] sm:$0xff]
    %v2440 = vld [vmem:[#allocation8 + $0xd0] sm:$0xff]
    %v2441 = vld [vmem:[#allocation8 + $0xd8] sm:$0xff]
    %v2442 = vld [vmem:[#allocation8 + $0xe0] sm:$0xff]
    %v2443 = vld [vmem:[#allocation8 + $0xe8] sm:$0xff]
    %v2444 = vld [vmem:[#allocation8 + $0xf0] sm:$0xff]
    %v2445 = vld [vmem:[#allocation8 + $0xf8] sm:$0xff]
    %v2447 = vperm.slane %v2397, 0
    %v2448 = vperm.slane %v2397, 1
    %v2449 = vperm.slane %v2397, 2
    %v2450 = vperm.slane %v2397, 3
    %v2471 = vunpack.c.l.b16 %v2398
    %v2472 = vunpack.c.l.b16 %v2399
    %v2473 = vunpack.c.l.b16 %v2400
    %v2474 = vunpack.c.l.b16 %v2401
    %v2475 = vunpack.c.l.b16 %v2402
    %v2476 = vunpack.c.l.b16 %v2403
    %v2477 = vunpack.c.l.b16 %v2404
    %v2478 = vunpack.c.l.b16 %v2405
    %v2479 = vunpack.c.l.b16 %v2406
    %v2480 = vunpack.c.l.b16 %v2407
    %v2481 = vunpack.c.l.b16 %v2408
    %v2482 = vunpack.c.l.b16 %v2409
    %v2483 = vunpack.c.l.b16 %v2410
    %v2484 = vunpack.c.l.b16 %v2411
    %v2485 = vunpack.c.l.b16 %v2412
    %v2486 = vunpack.c.l.b16 %v2413
    %v2487 = vpack.c.b16 %v2472, %v2471
    %v2488 = vpack.c.b16 %v2474, %v2473
    %v2489 = vpack.c.b16 %v2476, %v2475
    %v2490 = vpack.c.b16 %v2478, %v2477
    %v2491 = vpack.c.b16 %v2480, %v2479
    %v2492 = vpack.c.b16 %v2482, %v2481
    %v2493 = vpack.c.b16 %v2484, %v2483
    %v2494 = vpack.c.b16 %v2486, %v2485
    %v2535 = vunpack.c.l.b16 %v2414
    %v2536 = vunpack.c.h.b16 %v2414
    %v2537 = vunpack.c.l.b16 %v2415
    %v2538 = vunpack.c.h.b16 %v2415
    %v2539 = vunpack.c.l.b16 %v2416
    %v2540 = vunpack.c.h.b16 %v2416
    %v2541 = vunpack.c.l.b16 %v2417
    %v2542 = vunpack.c.h.b16 %v2417
    %v2543 = vunpack.c.l.b16 %v2418
    %v2544 = vunpack.c.h.b16 %v2418
    %v2545 = vunpack.c.l.b16 %v2419
    %v2546 = vunpack.c.h.b16 %v2419
    %v2547 = vunpack.c.l.b16 %v2420
    %v2548 = vunpack.c.h.b16 %v2420
    %v2549 = vunpack.c.l.b16 %v2421
    %v2550 = vunpack.c.h.b16 %v2421
    %v2551 = vunpack.c.l.b16 %v2422
    %v2552 = vunpack.c.h.b16 %v2422
    %v2553 = vunpack.c.l.b16 %v2423
    %v2554 = vunpack.c.h.b16 %v2423
    %v2555 = vunpack.c.l.b16 %v2424
    %v2556 = vunpack.c.h.b16 %v2424
    %v2557 = vunpack.c.l.b16 %v2425
    %v2558 = vunpack.c.h.b16 %v2425
    %v2559 = vunpack.c.l.b16 %v2426
    %v2560 = vunpack.c.h.b16 %v2426
    %v2561 = vunpack.c.l.b16 %v2427
    %v2562 = vunpack.c.h.b16 %v2427
    %v2563 = vunpack.c.l.b16 %v2428
    %v2564 = vunpack.c.h.b16 %v2428
    %v2565 = vunpack.c.l.b16 %v2429
    %v2566 = vunpack.c.h.b16 %v2429
    %v2567 = vunpack.c.l.b16 %v2430
    %v2568 = vunpack.c.h.b16 %v2430
    %v2569 = vunpack.c.l.b16 %v2431
    %v2570 = vunpack.c.h.b16 %v2431
    %v2571 = vunpack.c.l.b16 %v2432
    %v2572 = vunpack.c.h.b16 %v2432
    %v2573 = vunpack.c.l.b16 %v2433
    %v2574 = vunpack.c.h.b16 %v2433
    %v2575 = vunpack.c.l.b16 %v2434
    %v2576 = vunpack.c.h.b16 %v2434
    %v2577 = vunpack.c.l.b16 %v2435
    %v2578 = vunpack.c.h.b16 %v2435
    %v2579 = vunpack.c.l.b16 %v2436
    %v2580 = vunpack.c.h.b16 %v2436
    %v2581 = vunpack.c.l.b16 %v2437
    %v2582 = vunpack.c.h.b16 %v2437
    %v2583 = vunpack.c.l.b16 %v2438
    %v2584 = vunpack.c.h.b16 %v2438
    %v2585 = vunpack.c.l.b16 %v2439
    %v2586 = vunpack.c.h.b16 %v2439
    %v2587 = vunpack.c.l.b16 %v2440
    %v2588 = vunpack.c.h.b16 %v2440
    %v2589 = vunpack.c.l.b16 %v2441
    %v2590 = vunpack.c.h.b16 %v2441
    %v2591 = vunpack.c.l.b16 %v2442
    %v2592 = vunpack.c.h.b16 %v2442
    %v2593 = vunpack.c.l.b16 %v2443
    %v2594 = vunpack.c.h.b16 %v2443
    %v2595 = vunpack.c.l.b16 %v2444
    %v2596 = vunpack.c.h.b16 %v2444
    %v2597 = vunpack.c.l.b16 %v2445
    %v2598 = vunpack.c.h.b16 %v2445
    %v2599 = vpack.c.b16 %v2539, %v2535
    %v2600 = vpack.c.b16 %v2540, %v2536
    %v2601 = vpack.c.b16 %v2541, %v2537
    %v2602 = vpack.c.b16 %v2542, %v2538
    %v2603 = vpack.c.b16 %v2547, %v2543
    %v2604 = vpack.c.b16 %v2548, %v2544
    %v2605 = vpack.c.b16 %v2549, %v2545
    %v2606 = vpack.c.b16 %v2550, %v2546
    %v2607 = vpack.c.b16 %v2555, %v2551
    %v2608 = vpack.c.b16 %v2556, %v2552
    %v2609 = vpack.c.b16 %v2557, %v2553
    %v2610 = vpack.c.b16 %v2558, %v2554
    %v2611 = vpack.c.b16 %v2563, %v2559
    %v2612 = vpack.c.b16 %v2564, %v2560
    %v2613 = vpack.c.b16 %v2565, %v2561
    %v2614 = vpack.c.b16 %v2566, %v2562
    %v2615 = vpack.c.b16 %v2571, %v2567
    %v2616 = vpack.c.b16 %v2572, %v2568
    %v2617 = vpack.c.b16 %v2573, %v2569
    %v2618 = vpack.c.b16 %v2574, %v2570
    %v2619 = vpack.c.b16 %v2579, %v2575
    %v2620 = vpack.c.b16 %v2580, %v2576
    %v2621 = vpack.c.b16 %v2581, %v2577
    %v2622 = vpack.c.b16 %v2582, %v2578
    %v2623 = vpack.c.b16 %v2587, %v2583
    %v2624 = vpack.c.b16 %v2588, %v2584
    %v2625 = vpack.c.b16 %v2589, %v2585
    %v2626 = vpack.c.b16 %v2590, %v2586
    %v2627 = vpack.c.b16 %v2595, %v2591
    %v2628 = vpack.c.b16 %v2596, %v2592
    %v2629 = vpack.c.b16 %v2597, %v2593
    %v2630 = vpack.c.b16 %v2598, %v2594
    %2663 = vmatpush.bf16.msra.mxu0 %v2627
    %2664 = vmatpush.bf16.msra.mxu0 %v2623
    %2665 = vmatpush.bf16.msra.mxu0 %v2619
    %2666 = vmatpush.bf16.msra.mxu0 %v2615
    %2667 = vmatpush.bf16.msra.mxu0 %v2611
    %2668 = vmatpush.bf16.msra.mxu0 %v2607
    %2669 = vmatpush.bf16.msra.mxu0 %v2603
    %2670 = vmatpush.bf16.msra.mxu0 %v2599
    %2671 = vmatmul.bf16.gmra.mxu0 %v2487
    %v2672 = vpop.f32.mrf.mxu0
    %v2673 = vadd.f32 %v2447, %v2672
    %v2674 = vpop.f32.mrf.mxu0
    %v2675 = vadd.f32 %v2447, %v2674
    %2676 = vmatmul.bf16.gmra.mxu0 %v2488
    %v2677 = vpop.f32.mrf.mxu0
    %v2678 = vadd.f32 %v2447, %v2677
    %v2679 = vpop.f32.mrf.mxu0
    %v2680 = vadd.f32 %v2447, %v2679
    %2681 = vmatmul.bf16.gmra.mxu0 %v2489
    %v2682 = vpop.f32.mrf.mxu0
    %v2683 = vadd.f32 %v2447, %v2682
    %v2684 = vpop.f32.mrf.mxu0
    %v2685 = vadd.f32 %v2447, %v2684
    %2686 = vmatmul.bf16.gmra.mxu0 %v2490
    %v2687 = vpop.f32.mrf.mxu0
    %v2688 = vadd.f32 %v2447, %v2687
    %v2689 = vpop.f32.mrf.mxu0
    %v2690 = vadd.f32 %v2447, %v2689
    %2691 = vmatmul.bf16.gmra.mxu0 %v2491
    %v2692 = vpop.f32.mrf.mxu0
    %v2693 = vadd.f32 %v2447, %v2692
    %v2694 = vpop.f32.mrf.mxu0
    %v2695 = vadd.f32 %v2447, %v2694
    %2696 = vmatmul.bf16.gmra.mxu0 %v2492
    %v2697 = vpop.f32.mrf.mxu0
    %v2698 = vadd.f32 %v2447, %v2697
    %v2699 = vpop.f32.mrf.mxu0
    %v2700 = vadd.f32 %v2447, %v2699
    %2701 = vmatmul.bf16.gmra.mxu0 %v2493
    %v2702 = vpop.f32.mrf.mxu0
    %v2703 = vadd.f32 %v2447, %v2702
    %v2704 = vpop.f32.mrf.mxu0
    %v2705 = vadd.f32 %v2447, %v2704
    %2706 = vmatmul.bf16.gmra.mxu0 %v2494
    %v2707 = vpop.f32.mrf.mxu0
    %v2708 = vadd.f32 %v2447, %v2707
    %v2709 = vpop.f32.mrf.mxu0
    %v2710 = vadd.f32 %v2447, %v2709
    %2711 = vdwg.mxu0
    %2712 = vmatpush.bf16.msra.mxu0 %v2628
    %2713 = vmatpush.bf16.msra.mxu0 %v2624
    %2714 = vmatpush.bf16.msra.mxu0 %v2620
    %2715 = vmatpush.bf16.msra.mxu0 %v2616
    %2716 = vmatpush.bf16.msra.mxu0 %v2612
    %2717 = vmatpush.bf16.msra.mxu0 %v2608
    %2718 = vmatpush.bf16.msra.mxu0 %v2604
    %2719 = vmatpush.bf16.msra.mxu0 %v2600
    %2720 = vmatmul.bf16.gmra.mxu0 %v2487
    %v2721 = vpop.f32.mrf.mxu0
    %v2722 = vadd.f32 %v2448, %v2721
    %v2723 = vpop.f32.mrf.mxu0
    %v2724 = vadd.f32 %v2448, %v2723
    %2725 = vmatmul.bf16.gmra.mxu0 %v2488
    %v2726 = vpop.f32.mrf.mxu0
    %v2727 = vadd.f32 %v2448, %v2726
    %v2728 = vpop.f32.mrf.mxu0
    %v2729 = vadd.f32 %v2448, %v2728
    %2730 = vmatmul.bf16.gmra.mxu0 %v2489
    %v2731 = vpop.f32.mrf.mxu0
    %v2732 = vadd.f32 %v2448, %v2731
    %v2733 = vpop.f32.mrf.mxu0
    %v2734 = vadd.f32 %v2448, %v2733
    %2735 = vmatmul.bf16.gmra.mxu0 %v2490
    %v2736 = vpop.f32.mrf.mxu0
    %v2737 = vadd.f32 %v2448, %v2736
    %v2738 = vpop.f32.mrf.mxu0
    %v2739 = vadd.f32 %v2448, %v2738
    %2740 = vmatmul.bf16.gmra.mxu0 %v2491
    %v2741 = vpop.f32.mrf.mxu0
    %v2742 = vadd.f32 %v2448, %v2741
    %v2743 = vpop.f32.mrf.mxu0
    %v2744 = vadd.f32 %v2448, %v2743
    %2745 = vmatmul.bf16.gmra.mxu0 %v2492
    %v2746 = vpop.f32.mrf.mxu0
    %v2747 = vadd.f32 %v2448, %v2746
    %v2748 = vpop.f32.mrf.mxu0
    %v2749 = vadd.f32 %v2448, %v2748
    %2750 = vmatmul.bf16.gmra.mxu0 %v2493
    %v2751 = vpop.f32.mrf.mxu0
    %v2752 = vadd.f32 %v2448, %v2751
    %v2753 = vpop.f32.mrf.mxu0
    %v2754 = vadd.f32 %v2448, %v2753
    %2755 = vmatmul.bf16.gmra.mxu0 %v2494
    %v2756 = vpop.f32.mrf.mxu0
    %v2757 = vadd.f32 %v2448, %v2756
    %v2758 = vpop.f32.mrf.mxu0
    %v2759 = vadd.f32 %v2448, %v2758
    %2760 = vdwg.mxu0
    %2761 = vmatpush.bf16.msra.mxu0 %v2629
    %2762 = vmatpush.bf16.msra.mxu0 %v2625
    %2763 = vmatpush.bf16.msra.mxu0 %v2621
    %2764 = vmatpush.bf16.msra.mxu0 %v2617
    %2765 = vmatpush.bf16.msra.mxu0 %v2613
    %2766 = vmatpush.bf16.msra.mxu0 %v2609
    %2767 = vmatpush.bf16.msra.mxu0 %v2605
    %2768 = vmatpush.bf16.msra.mxu0 %v2601
    %2769 = vmatmul.bf16.gmra.mxu0 %v2487
    %v2770 = vpop.f32.mrf.mxu0
    %v2771 = vadd.f32 %v2449, %v2770
    %v2772 = vpop.f32.mrf.mxu0
    %v2773 = vadd.f32 %v2449, %v2772
    %2774 = vmatmul.bf16.gmra.mxu0 %v2488
    %v2775 = vpop.f32.mrf.mxu0
    %v2776 = vadd.f32 %v2449, %v2775
    %v2777 = vpop.f32.mrf.mxu0
    %v2778 = vadd.f32 %v2449, %v2777
    %2779 = vmatmul.bf16.gmra.mxu0 %v2489
    %v2780 = vpop.f32.mrf.mxu0
    %v2781 = vadd.f32 %v2449, %v2780
    %v2782 = vpop.f32.mrf.mxu0
    %v2783 = vadd.f32 %v2449, %v2782
    %2784 = vmatmul.bf16.gmra.mxu0 %v2490
    %v2785 = vpop.f32.mrf.mxu0
    %v2786 = vadd.f32 %v2449, %v2785
    %v2787 = vpop.f32.mrf.mxu0
    %v2788 = vadd.f32 %v2449, %v2787
    %2789 = vmatmul.bf16.gmra.mxu0 %v2491
    %v2790 = vpop.f32.mrf.mxu0
    %v2791 = vadd.f32 %v2449, %v2790
    %v2792 = vpop.f32.mrf.mxu0
    %v2793 = vadd.f32 %v2449, %v2792
    %2794 = vmatmul.bf16.gmra.mxu0 %v2492
    %v2795 = vpop.f32.mrf.mxu0
    %v2796 = vadd.f32 %v2449, %v2795
    %v2797 = vpop.f32.mrf.mxu0
    %v2798 = vadd.f32 %v2449, %v2797
    %2799 = vmatmul.bf16.gmra.mxu0 %v2493
    %v2800 = vpop.f32.mrf.mxu0
    %v2801 = vadd.f32 %v2449, %v2800
    %v2802 = vpop.f32.mrf.mxu0
    %v2803 = vadd.f32 %v2449, %v2802
    %2804 = vmatmul.bf16.gmra.mxu0 %v2494
    %v2805 = vpop.f32.mrf.mxu0
    %v2806 = vadd.f32 %v2449, %v2805
    %v2807 = vpop.f32.mrf.mxu0
    %v2808 = vadd.f32 %v2449, %v2807
    %2809 = vdwg.mxu0
    %2810 = vmatpush.bf16.msra.mxu0 %v2630
    %2811 = vmatpush.bf16.msra.mxu0 %v2626
    %2812 = vmatpush.bf16.msra.mxu0 %v2622
    %2813 = vmatpush.bf16.msra.mxu0 %v2618
    %2814 = vmatpush.bf16.msra.mxu0 %v2614
    %2815 = vmatpush.bf16.msra.mxu0 %v2610
    %2816 = vmatpush.bf16.msra.mxu0 %v2606
    %2817 = vmatpush.bf16.msra.mxu0 %v2602
    %2818 = vmatmul.bf16.gmra.mxu0 %v2487
    %v2819 = vpop.f32.mrf.mxu0
    %v2820 = vadd.f32 %v2450, %v2819
    %v2821 = vpop.f32.mrf.mxu0
    %v2822 = vadd.f32 %v2450, %v2821
    %2823 = vmatmul.bf16.gmra.mxu0 %v2488
    %v2824 = vpop.f32.mrf.mxu0
    %v2825 = vadd.f32 %v2450, %v2824
    %v2826 = vpop.f32.mrf.mxu0
    %v2827 = vadd.f32 %v2450, %v2826
    %2828 = vmatmul.bf16.gmra.mxu0 %v2489
    %v2829 = vpop.f32.mrf.mxu0
    %v2830 = vadd.f32 %v2450, %v2829
    %v2831 = vpop.f32.mrf.mxu0
    %v2832 = vadd.f32 %v2450, %v2831
    %2833 = vmatmul.bf16.gmra.mxu0 %v2490
    %v2834 = vpop.f32.mrf.mxu0
    %v2835 = vadd.f32 %v2450, %v2834
    %v2836 = vpop.f32.mrf.mxu0
    %v2837 = vadd.f32 %v2450, %v2836
    %2838 = vmatmul.bf16.gmra.mxu0 %v2491
    %v2839 = vpop.f32.mrf.mxu0
    %v2840 = vadd.f32 %v2450, %v2839
    %v2841 = vpop.f32.mrf.mxu0
    %v2842 = vadd.f32 %v2450, %v2841
    %2843 = vmatmul.bf16.gmra.mxu0 %v2492
    %v2844 = vpop.f32.mrf.mxu0
    %v2845 = vadd.f32 %v2450, %v2844
    %v2846 = vpop.f32.mrf.mxu0
    %v2847 = vadd.f32 %v2450, %v2846
    %2848 = vmatmul.bf16.gmra.mxu0 %v2493
    %v2849 = vpop.f32.mrf.mxu0
    %v2850 = vadd.f32 %v2450, %v2849
    %v2851 = vpop.f32.mrf.mxu0
    %v2852 = vadd.f32 %v2450, %v2851
    %2853 = vmatmul.bf16.gmra.mxu0 %v2494
    %v2854 = vpop.f32.mrf.mxu0
    %v2855 = vadd.f32 %v2450, %v2854
    %v2856 = vpop.f32.mrf.mxu0
    %v2857 = vadd.f32 %v2450, %v2856
    %2858 = vdwg.mxu0
    %2859 = vst [vmem:[#allocation3] sm:$0xff] %v2673
    %2860 = vst [vmem:[#allocation3 + $0x8] sm:$0xff] %v2722
    %2861 = vst [vmem:[#allocation3 + $0x10] sm:$0xff] %v2771
    %2862 = vst [vmem:[#allocation3 + $0x18] sm:$0xff] %v2820
    %2863 = vst [vmem:[#allocation3 + $0x20] sm:$0xff] %v2675
    %2864 = vst [vmem:[#allocation3 + $0x28] sm:$0xff] %v2724
    %2865 = vst [vmem:[#allocation3 + $0x30] sm:$0xff] %v2773
    %2866 = vst [vmem:[#allocation3 + $0x38] sm:$0xff] %v2822
    %2867 = vst [vmem:[#allocation3 + $0x40] sm:$0xff] %v2678
    %2868 = vst [vmem:[#allocation3 + $0x48] sm:$0xff] %v2727
    %2869 = vst [vmem:[#allocation3 + $0x50] sm:$0xff] %v2776
    %2870 = vst [vmem:[#allocation3 + $0x58] sm:$0xff] %v2825
    %2871 = vst [vmem:[#allocation3 + $0x60] sm:$0xff] %v2680
    %2872 = vst [vmem:[#allocation3 + $0x68] sm:$0xff] %v2729
    %2873 = vst [vmem:[#allocation3 + $0x70] sm:$0xff] %v2778
    %2874 = vst [vmem:[#allocation3 + $0x78] sm:$0xff] %v2827
    %2875 = vst [vmem:[#allocation3 + $0x80] sm:$0xff] %v2683
    %2876 = vst [vmem:[#allocation3 + $0x88] sm:$0xff] %v2732
    %2877 = vst [vmem:[#allocation3 + $0x90] sm:$0xff] %v2781
    %2878 = vst [vmem:[#allocation3 + $0x98] sm:$0xff] %v2830
    %2879 = vst [vmem:[#allocation3 + $0xa0] sm:$0xff] %v2685
    %2880 = vst [vmem:[#allocation3 + $0xa8] sm:$0xff] %v2734
    %2881 = vst [vmem:[#allocation3 + $0xb0] sm:$0xff] %v2783
    %2882 = vst [vmem:[#allocation3 + $0xb8] sm:$0xff] %v2832
    %2883 = vst [vmem:[#allocation3 + $0xc0] sm:$0xff] %v2688
    %2884 = vst [vmem:[#allocation3 + $0xc8] sm:$0xff] %v2737
    %2885 = vst [vmem:[#allocation3 + $0xd0] sm:$0xff] %v2786
    %2886 = vst [vmem:[#allocation3 + $0xd8] sm:$0xff] %v2835
    %2887 = vst [vmem:[#allocation3 + $0xe0] sm:$0xff] %v2690
    %2888 = vst [vmem:[#allocation3 + $0xe8] sm:$0xff] %v2739
    %2889 = vst [vmem:[#allocation3 + $0xf0] sm:$0xff] %v2788
    %2890 = vst [vmem:[#allocation3 + $0xf8] sm:$0xff] %v2837
    %2891 = vst [vmem:[#allocation3 + $0x100] sm:$0xff] %v2693
    %2892 = vst [vmem:[#allocation3 + $0x108] sm:$0xff] %v2742
    %2893 = vst [vmem:[#allocation3 + $0x110] sm:$0xff] %v2791
    %2894 = vst [vmem:[#allocation3 + $0x118] sm:$0xff] %v2840
    %2895 = vst [vmem:[#allocation3 + $0x120] sm:$0xff] %v2695
    %2896 = vst [vmem:[#allocation3 + $0x128] sm:$0xff] %v2744
    %2897 = vst [vmem:[#allocation3 + $0x130] sm:$0xff] %v2793
    %2898 = vst [vmem:[#allocation3 + $0x138] sm:$0xff] %v2842
    %2899 = vst [vmem:[#allocation3 + $0x140] sm:$0xff] %v2698
    %2900 = vst [vmem:[#allocation3 + $0x148] sm:$0xff] %v2747
    %2901 = vst [vmem:[#allocation3 + $0x150] sm:$0xff] %v2796
    %2902 = vst [vmem:[#allocation3 + $0x158] sm:$0xff] %v2845
    %2903 = vst [vmem:[#allocation3 + $0x160] sm:$0xff] %v2700
    %2904 = vst [vmem:[#allocation3 + $0x168] sm:$0xff] %v2749
    %2905 = vst [vmem:[#allocation3 + $0x170] sm:$0xff] %v2798
    %2906 = vst [vmem:[#allocation3 + $0x178] sm:$0xff] %v2847
    %2907 = vst [vmem:[#allocation3 + $0x180] sm:$0xff] %v2703
    %2908 = vst [vmem:[#allocation3 + $0x188] sm:$0xff] %v2752
    %2909 = vst [vmem:[#allocation3 + $0x190] sm:$0xff] %v2801
    %2910 = vst [vmem:[#allocation3 + $0x198] sm:$0xff] %v2850
    %2911 = vst [vmem:[#allocation3 + $0x1a0] sm:$0xff] %v2705
    %2912 = vst [vmem:[#allocation3 + $0x1a8] sm:$0xff] %v2754
    %2913 = vst [vmem:[#allocation3 + $0x1b0] sm:$0xff] %v2803
    %2914 = vst [vmem:[#allocation3 + $0x1b8] sm:$0xff] %v2852
    %2915 = vst [vmem:[#allocation3 + $0x1c0] sm:$0xff] %v2708
    %2916 = vst [vmem:[#allocation3 + $0x1c8] sm:$0xff] %v2757
    %2917 = vst [vmem:[#allocation3 + $0x1d0] sm:$0xff] %v2806
    %2918 = vst [vmem:[#allocation3 + $0x1d8] sm:$0xff] %v2855
    %2919 = vst [vmem:[#allocation3 + $0x1e0] sm:$0xff] %v2710
    %2920 = vst [vmem:[#allocation3 + $0x1e8] sm:$0xff] %v2759
    %2921 = vst [vmem:[#allocation3 + $0x1f0] sm:$0xff] %v2808
    %2922 = vst [vmem:[#allocation3 + $0x1f8] sm:$0xff] %v2857
    %v2923 = vld [vmem:[%s518] sm:$0xff]
    %v2924 = vld [vmem:[%s518 + $0x8] sm:$0xff]
    %v2925 = vld [vmem:[%s518 + $0x10] sm:$0xff]
    %v2926 = vld [vmem:[%s518 + $0x18] sm:$0xff]
    %v2927 = vld [vmem:[%s518 + $0x20] sm:$0xff]
    %v2928 = vld [vmem:[%s518 + $0x28] sm:$0xff]
    %v2929 = vld [vmem:[%s518 + $0x30] sm:$0xff]
    %v2930 = vld [vmem:[%s518 + $0x38] sm:$0xff]
    %v2963 = vunpack.c.l.b16 %v2365
    %v2964 = vunpack.c.h.b16 %v2365
    %v2965 = vunpack.c.l.b16 %v2366
    %v2966 = vunpack.c.h.b16 %v2366
    %v2967 = vunpack.c.l.b16 %v2367
    %v2968 = vunpack.c.h.b16 %v2367
    %v2969 = vunpack.c.l.b16 %v2368
    %v2970 = vunpack.c.h.b16 %v2368
    %v2971 = vunpack.c.l.b16 %v2369
    %v2972 = vunpack.c.h.b16 %v2369
    %v2973 = vunpack.c.l.b16 %v2370
    %v2974 = vunpack.c.h.b16 %v2370
    %v2975 = vunpack.c.l.b16 %v2371
    %v2976 = vunpack.c.h.b16 %v2371
    %v2977 = vunpack.c.l.b16 %v2372
    %v2978 = vunpack.c.h.b16 %v2372
    %v2979 = vunpack.c.l.b16 %v2373
    %v2980 = vunpack.c.h.b16 %v2373
    %v2981 = vunpack.c.l.b16 %v2374
    %v2982 = vunpack.c.h.b16 %v2374
    %v2983 = vunpack.c.l.b16 %v2375
    %v2984 = vunpack.c.h.b16 %v2375
    %v2985 = vunpack.c.l.b16 %v2376
    %v2986 = vunpack.c.h.b16 %v2376
    %v2987 = vunpack.c.l.b16 %v2377
    %v2988 = vunpack.c.h.b16 %v2377
    %v2989 = vunpack.c.l.b16 %v2378
    %v2990 = vunpack.c.h.b16 %v2378
    %v2991 = vunpack.c.l.b16 %v2379
    %v2992 = vunpack.c.h.b16 %v2379
    %v2993 = vunpack.c.l.b16 %v2380
    %v2994 = vunpack.c.h.b16 %v2380
    %v2995 = vunpack.c.l.b16 %v2381
    %v2996 = vunpack.c.h.b16 %v2381
    %v2997 = vunpack.c.l.b16 %v2382
    %v2998 = vunpack.c.h.b16 %v2382
    %v2999 = vunpack.c.l.b16 %v2383
    %v3000 = vunpack.c.h.b16 %v2383
    %v3001 = vunpack.c.l.b16 %v2384
    %v3002 = vunpack.c.h.b16 %v2384
    %v3003 = vunpack.c.l.b16 %v2385
    %v3004 = vunpack.c.h.b16 %v2385
    %v3005 = vunpack.c.l.b16 %v2386
    %v3006 = vunpack.c.h.b16 %v2386
    %v3007 = vunpack.c.l.b16 %v2387
    %v3008 = vunpack.c.h.b16 %v2387
    %v3009 = vunpack.c.l.b16 %v2388
    %v3010 = vunpack.c.h.b16 %v2388
    %v3011 = vunpack.c.l.b16 %v2389
    %v3012 = vunpack.c.h.b16 %v2389
    %v3013 = vunpack.c.l.b16 %v2390
    %v3014 = vunpack.c.h.b16 %v2390
    %v3015 = vunpack.c.l.b16 %v2391
    %v3016 = vunpack.c.h.b16 %v2391
    %v3017 = vunpack.c.l.b16 %v2392
    %v3018 = vunpack.c.h.b16 %v2392
    %v3019 = vunpack.c.l.b16 %v2393
    %v3020 = vunpack.c.h.b16 %v2393
    %v3021 = vunpack.c.l.b16 %v2394
    %v3022 = vunpack.c.h.b16 %v2394
    %v3023 = vunpack.c.l.b16 %v2395
    %v3024 = vunpack.c.h.b16 %v2395
    %v3025 = vunpack.c.l.b16 %v2396
    %v3026 = vunpack.c.h.b16 %v2396
    %v3027 = vpack.c.b16 %v2967, %v2963
    %v3028 = vpack.c.b16 %v2968, %v2964
    %v3029 = vpack.c.b16 %v2969, %v2965
    %v3030 = vpack.c.b16 %v2970, %v2966
    %v3031 = vpack.c.b16 %v2975, %v2971
    %v3032 = vpack.c.b16 %v2976, %v2972
    %v3033 = vpack.c.b16 %v2977, %v2973
    %v3034 = vpack.c.b16 %v2978, %v2974
    %v3035 = vpack.c.b16 %v2983, %v2979
    %v3036 = vpack.c.b16 %v2984, %v2980
    %v3037 = vpack.c.b16 %v2985, %v2981
    %v3038 = vpack.c.b16 %v2986, %v2982
    %v3039 = vpack.c.b16 %v2991, %v2987
    %v3040 = vpack.c.b16 %v2992, %v2988
    %v3041 = vpack.c.b16 %v2993, %v2989
    %v3042 = vpack.c.b16 %v2994, %v2990
    %v3043 = vpack.c.b16 %v2999, %v2995
    %v3044 = vpack.c.b16 %v3000, %v2996
    %v3045 = vpack.c.b16 %v3001, %v2997
    %v3046 = vpack.c.b16 %v3002, %v2998
    %v3047 = vpack.c.b16 %v3007, %v3003
    %v3048 = vpack.c.b16 %v3008, %v3004
    %v3049 = vpack.c.b16 %v3009, %v3005
    %v3050 = vpack.c.b16 %v3010, %v3006
    %v3051 = vpack.c.b16 %v3015, %v3011
    %v3052 = vpack.c.b16 %v3016, %v3012
    %v3053 = vpack.c.b16 %v3017, %v3013
    %v3054 = vpack.c.b16 %v3018, %v3014
    %v3055 = vpack.c.b16 %v3023, %v3019
    %v3056 = vpack.c.b16 %v3024, %v3020
    %v3057 = vpack.c.b16 %v3025, %v3021
    %v3058 = vpack.c.b16 %v3026, %v3022
    %3091 = vmatpush.bf16.msra.mxu0 %v3055
    %3092 = vmatpush.bf16.msra.mxu0 %v3051
    %3093 = vmatpush.bf16.msra.mxu0 %v3047
    %3094 = vmatpush.bf16.msra.mxu0 %v3043
    %3095 = vmatpush.bf16.msra.mxu0 %v3039
    %3096 = vmatpush.bf16.msra.mxu0 %v3035
    %3097 = vmatpush.bf16.msra.mxu0 %v3031
    %3098 = vmatpush.bf16.msra.mxu0 %v3027
    %3099 = vmatmul.bf16.gmra.mxu0 0
    %v3100 = vpop.f32.mrf.mxu0
    %v3101 = vadd.f32 0.0, %v3100
    %v3102 = vpop.f32.mrf.mxu0
    %v3103 = vadd.f32 0.0, %v3102
    %3104 = vdwg.mxu0
    %3105 = vmatpush.bf16.msra.mxu0 %v3056
    %3106 = vmatpush.bf16.msra.mxu0 %v3052
    %3107 = vmatpush.bf16.msra.mxu0 %v3048
    %3108 = vmatpush.bf16.msra.mxu0 %v3044
    %3109 = vmatpush.bf16.msra.mxu0 %v3040
    %3110 = vmatpush.bf16.msra.mxu0 %v3036
    %3111 = vmatpush.bf16.msra.mxu0 %v3032
    %3112 = vmatpush.bf16.msra.mxu0 %v3028
    %3113 = vmatmul.bf16.gmra.mxu0 0
    %v3114 = vpop.f32.mrf.mxu0
    %v3115 = vadd.f32 0.0, %v3114
    %v3116 = vpop.f32.mrf.mxu0
    %v3117 = vadd.f32 0.0, %v3116
    %3118 = vdwg.mxu0
    %3119 = vmatpush.bf16.msra.mxu0 %v3057
    %3120 = vmatpush.bf16.msra.mxu0 %v3053
    %3121 = vmatpush.bf16.msra.mxu0 %v3049
    %3122 = vmatpush.bf16.msra.mxu0 %v3045
    %3123 = vmatpush.bf16.msra.mxu0 %v3041
    %3124 = vmatpush.bf16.msra.mxu0 %v3037
    %3125 = vmatpush.bf16.msra.mxu0 %v3033
    %3126 = vmatpush.bf16.msra.mxu0 %v3029
    %3127 = vmatmul.bf16.gmra.mxu0 0
    %v3128 = vpop.f32.mrf.mxu0
    %v3129 = vadd.f32 0.0, %v3128
    %v3130 = vpop.f32.mrf.mxu0
    %v3131 = vadd.f32 0.0, %v3130
    %3132 = vdwg.mxu0
    %3133 = vmatpush.bf16.msra.mxu0 %v3058
    %3134 = vmatpush.bf16.msra.mxu0 %v3054
    %3135 = vmatpush.bf16.msra.mxu0 %v3050
    %3136 = vmatpush.bf16.msra.mxu0 %v3046
    %3137 = vmatpush.bf16.msra.mxu0 %v3042
    %3138 = vmatpush.bf16.msra.mxu0 %v3038
    %3139 = vmatpush.bf16.msra.mxu0 %v3034
    %3140 = vmatpush.bf16.msra.mxu0 %v3030
    %3141 = vmatmul.bf16.gmra.mxu0 0
    %v3142 = vpop.f32.mrf.mxu0
    %v3143 = vadd.f32 0.0, %v3142
    %v3144 = vpop.f32.mrf.mxu0
    %v3145 = vadd.f32 0.0, %v3144
    %3146 = vdwg.mxu0
    %v3147 = vadd.f32 %v2923, %v3101
    %v3148 = vadd.f32 %v2924, %v3115
    %v3149 = vadd.f32 %v2925, %v3129
    %v3150 = vadd.f32 %v2926, %v3143
    %v3151 = vadd.f32 %v2927, %v3103
    %v3152 = vadd.f32 %v2928, %v3117
    %v3153 = vadd.f32 %v2929, %v3131
    %v3154 = vadd.f32 %v2930, %v3145
    %v3155 = vxor.u32 %v3147, 2147483648
    %v3156 = vxor.u32 %v3148, 2147483648
    %v3157 = vxor.u32 %v3149, 2147483648
    %v3158 = vxor.u32 %v3151, 2147483648
    %v3159 = vxor.u32 %v3152, 2147483648
    %v3160 = vxor.u32 %v3153, 2147483648
    %v3161 = vmul.f32 %v3155, 1.442695
    %v3162 = vpow.pop %v3161
    %v3163 = vmul.f32 %v3156, 1.442695
    %v3164 = vpow.pop %v3163
    %v3165 = vmul.f32 %v3157, 1.442695
    %v3166 = vpow.pop %v3165
    %v3167 = vmul.f32 %v3158, 1.442695
    %v3168 = vpow.pop %v3167
    %v3169 = vmul.f32 %v3159, 1.442695
    %v3170 = vpow.pop %v3169
    %v3171 = vmul.f32 %v3160, 1.442695
    %v3172 = vpow.pop %v3171
    %v3173 = vadd.f32 %v3162, 1.0
    %v3174 = vadd.f32 %v3164, 1.0
    %v3175 = vadd.f32 %v3166, 1.0
    %v3176 = vadd.f32 %v3168, 1.0
    %v3177 = vadd.f32 %v3170, 1.0
    %v3178 = vadd.f32 %v3172, 1.0
    %v3179 = vrcp.pop %v3173
    %v3180 = vmul.f32 %v3173, %v3179
    %v3181 = vsub.f32 1.0, %v3180
    %v3182 = vmul.f32 %v3179, %v3181
    %v3183 = vadd.f32 %v3179, %v3182
    %vm3184 = vweird.f32 %v3173
    %vm3185 = vweird.f32 %v3179
    %vm3186 = vmor %vm3184, %vm3185
    %v3187 = vsel %vm3186, %v3179, %v3183
    %v3188 = vand.u32 2147483647, %v3173
    %vm3189 = vcmp.eq.f32.partialorder %v3188, 8.507059e+37
    %v3190 = vand.u32 %v3173, 2147483648
    %v3191 = vor.u32 1.1754944e-38, %v3190
    %v3192 = vsel %vm3189, %v3191, %v3187
    %v3193 = vmul.f32 1.0, %v3192
    %v3194 = vrcp.pop %v3174
    %v3195 = vmul.f32 %v3174, %v3194
    %v3196 = vsub.f32 1.0, %v3195
    %v3197 = vmul.f32 %v3194, %v3196
    %v3198 = vadd.f32 %v3194, %v3197
    %vm3199 = vweird.f32 %v3174
    %vm3200 = vweird.f32 %v3194
    %vm3201 = vmor %vm3199, %vm3200
    %v3202 = vsel %vm3201, %v3194, %v3198
    %v3203 = vand.u32 2147483647, %v3174
    %vm3204 = vcmp.eq.f32.partialorder %v3203, 8.507059e+37
    %v3205 = vand.u32 %v3174, 2147483648
    %v3206 = vor.u32 1.1754944e-38, %v3205
    %v3207 = vsel %vm3204, %v3206, %v3202
    %v3208 = vmul.f32 1.0, %v3207
    %v3209 = vrcp.pop %v3175
    %v3210 = vmul.f32 %v3175, %v3209
    %v3211 = vsub.f32 1.0, %v3210
    %v3212 = vmul.f32 %v3209, %v3211
    %v3213 = vadd.f32 %v3209, %v3212
    %vm3214 = vweird.f32 %v3175
    %vm3215 = vweird.f32 %v3209
    %vm3216 = vmor %vm3214, %vm3215
    %v3217 = vsel %vm3216, %v3209, %v3213
    %v3218 = vand.u32 2147483647, %v3175
    %vm3219 = vcmp.eq.f32.partialorder %v3218, 8.507059e+37
    %v3220 = vand.u32 %v3175, 2147483648
    %v3221 = vor.u32 1.1754944e-38, %v3220
    %v3222 = vsel %vm3219, %v3221, %v3217
    %v3223 = vmul.f32 1.0, %v3222
    %v3224 = vrcp.pop %v3176
    %v3225 = vmul.f32 %v3176, %v3224
    %v3226 = vsub.f32 1.0, %v3225
    %v3227 = vmul.f32 %v3224, %v3226
    %v3228 = vadd.f32 %v3224, %v3227
    %vm3229 = vweird.f32 %v3176
    %vm3230 = vweird.f32 %v3224
    %vm3231 = vmor %vm3229, %vm3230
    %v3232 = vsel %vm3231, %v3224, %v3228
    %v3233 = vand.u32 2147483647, %v3176
    %vm3234 = vcmp.eq.f32.partialorder %v3233, 8.507059e+37
    %v3235 = vand.u32 %v3176, 2147483648
    %v3236 = vor.u32 1.1754944e-38, %v3235
    %v3237 = vsel %vm3234, %v3236, %v3232
    %v3238 = vmul.f32 1.0, %v3237
    %v3239 = vrcp.pop %v3177
    %v3240 = vmul.f32 %v3177, %v3239
    %v3241 = vsub.f32 1.0, %v3240
    %v3242 = vmul.f32 %v3239, %v3241
    %v3243 = vadd.f32 %v3239, %v3242
    %vm3244 = vweird.f32 %v3177
    %vm3245 = vweird.f32 %v3239
    %vm3246 = vmor %vm3244, %vm3245
    %v3247 = vsel %vm3246, %v3239, %v3243
    %v3248 = vand.u32 2147483647, %v3177
    %vm3249 = vcmp.eq.f32.partialorder %v3248, 8.507059e+37
    %v3250 = vand.u32 %v3177, 2147483648
    %v3251 = vor.u32 1.1754944e-38, %v3250
    %v3252 = vsel %vm3249, %v3251, %v3247
    %v3253 = vmul.f32 1.0, %v3252
    %v3254 = vrcp.pop %v3178
    %v3255 = vmul.f32 %v3178, %v3254
    %v3256 = vsub.f32 1.0, %v3255
    %v3257 = vmul.f32 %v3254, %v3256
    %v3258 = vadd.f32 %v3254, %v3257
    %vm3259 = vweird.f32 %v3178
    %vm3260 = vweird.f32 %v3254
    %vm3261 = vmor %vm3259, %vm3260
    %v3262 = vsel %vm3261, %v3254, %v3258
    %v3263 = vand.u32 2147483647, %v3178
    %vm3264 = vcmp.eq.f32.partialorder %v3263, 8.507059e+37
    %v3265 = vand.u32 %v3178, 2147483648
    %v3266 = vor.u32 1.1754944e-38, %v3265
    %v3267 = vsel %vm3264, %v3266, %v3262
    %v3268 = vmul.f32 1.0, %v3267
    %v3269 = vtanh.pop %v3150
    %v3270 = vtanh.pop %v3154
    %v3271 = vmul.f32 %v3208, 0.0
    %v3272 = vmul.f32 %v3253, 0.0
    %v3273 = vmul.f32 %v3193, %v3269
    %v3274 = vmul.f32 %v3238, %v3270
    %v3275 = vadd.f32 %v3271, %v3273
    %v3276 = vadd.f32 %v3272, %v3274
    %v3277 = vtanh.pop %v3275
    %v3278 = vtanh.pop %v3276
    %v3279 = vmul.f32 %v3223, %v3277
    %v3280 = vmul.f32 %v3268, %v3278
    %v3281 = vld [vmem:[%s883] sm:$0xff]
    %v3282 = vld [vmem:[%s883 + $0x8] sm:$0xff]
    %v3283 = vld [vmem:[%s883 + $0x10] sm:$0xff]
    %v3284 = vld [vmem:[%s883 + $0x18] sm:$0xff]
    %v3285 = vld [vmem:[%s883 + $0x20] sm:$0xff]
    %v3286 = vld [vmem:[%s883 + $0x28] sm:$0xff]
    %v3287 = vld [vmem:[%s883 + $0x30] sm:$0xff]
    %v3288 = vld [vmem:[%s883 + $0x38] sm:$0xff]
    %v3289 = vpack.c.bf16 %v3280, %v3279
    %3290 = vmatpush.bf16.msra.mxu0 %v3055
    %3291 = vmatpush.bf16.msra.mxu0 %v3051
    %3292 = vmatpush.bf16.msra.mxu0 %v3047
    %3293 = vmatpush.bf16.msra.mxu0 %v3043
    %3294 = vmatpush.bf16.msra.mxu0 %v3039
    %3295 = vmatpush.bf16.msra.mxu0 %v3035
    %3296 = vmatpush.bf16.msra.mxu0 %v3031
    %3297 = vmatpush.bf16.msra.mxu0 %v3027
    %3298 = vmatmul.bf16.gmra.mxu0 %v3289
    %v3299 = vpop.f32.mrf.mxu0
    %v3300 = vadd.f32 0.0, %v3299
    %v3301 = vpop.f32.mrf.mxu0
    %v3302 = vadd.f32 0.0, %v3301
    %3303 = vdwg.mxu0
    %3304 = vmatpush.bf16.msra.mxu0 %v3056
    %3305 = vmatpush.bf16.msra.mxu0 %v3052
    %3306 = vmatpush.bf16.msra.mxu0 %v3048
    %3307 = vmatpush.bf16.msra.mxu0 %v3044
    %3308 = vmatpush.bf16.msra.mxu0 %v3040
    %3309 = vmatpush.bf16.msra.mxu0 %v3036
    %3310 = vmatpush.bf16.msra.mxu0 %v3032
    %3311 = vmatpush.bf16.msra.mxu0 %v3028
    %3312 = vmatmul.bf16.gmra.mxu0 %v3289
    %v3313 = vpop.f32.mrf.mxu0
    %v3314 = vadd.f32 0.0, %v3313
    %v3315 = vpop.f32.mrf.mxu0
    %v3316 = vadd.f32 0.0, %v3315
    %3317 = vdwg.mxu0
    %3318 = vmatpush.bf16.msra.mxu0 %v3057
    %3319 = vmatpush.bf16.msra.mxu0 %v3053
    %3320 = vmatpush.bf16.msra.mxu0 %v3049
    %3321 = vmatpush.bf16.msra.mxu0 %v3045
    %3322 = vmatpush.bf16.msra.mxu0 %v3041
    %3323 = vmatpush.bf16.msra.mxu0 %v3037
    %3324 = vmatpush.bf16.msra.mxu0 %v3033
    %3325 = vmatpush.bf16.msra.mxu0 %v3029
    %3326 = vmatmul.bf16.gmra.mxu0 %v3289
    %v3327 = vpop.f32.mrf.mxu0
    %v3328 = vadd.f32 0.0, %v3327
    %v3329 = vpop.f32.mrf.mxu0
    %v3330 = vadd.f32 0.0, %v3329
    %3331 = vdwg.mxu0
    %3332 = vmatpush.bf16.msra.mxu0 %v3058
    %3333 = vmatpush.bf16.msra.mxu0 %v3054
    %3334 = vmatpush.bf16.msra.mxu0 %v3050
    %3335 = vmatpush.bf16.msra.mxu0 %v3046
    %3336 = vmatpush.bf16.msra.mxu0 %v3042
    %3337 = vmatpush.bf16.msra.mxu0 %v3038
    %3338 = vmatpush.bf16.msra.mxu0 %v3034
    %3339 = vmatpush.bf16.msra.mxu0 %v3030
    %3340 = vmatmul.bf16.gmra.mxu0 %v3289
    %v3341 = vpop.f32.mrf.mxu0
    %v3342 = vadd.f32 0.0, %v3341
    %v3343 = vpop.f32.mrf.mxu0
    %v3344 = vadd.f32 0.0, %v3343
    %3345 = vdwg.mxu0
    %v3346 = vadd.f32 %v3281, %v3300
    %v3347 = vadd.f32 %v3282, %v3314
    %v3348 = vadd.f32 %v3283, %v3328
    %v3349 = vadd.f32 %v3284, %v3342
    %v3350 = vadd.f32 %v3285, %v3302
    %v3351 = vadd.f32 %v3286, %v3316
    %v3352 = vadd.f32 %v3287, %v3330
    %v3353 = vadd.f32 %v3288, %v3344
    %v3354 = vxor.u32 %v3346, 2147483648
    %v3355 = vxor.u32 %v3347, 2147483648
    %v3356 = vxor.u32 %v3348, 2147483648
    %v3357 = vxor.u32 %v3350, 2147483648
    %v3358 = vxor.u32 %v3351, 2147483648
    %v3359 = vxor.u32 %v3352, 2147483648
    %v3360 = vmul.f32 %v3354, 1.442695
    %v3361 = vpow.pop %v3360
    %v3362 = vmul.f32 %v3355, 1.442695
    %v3363 = vpow.pop %v3362
    %v3364 = vmul.f32 %v3356, 1.442695
    %v3365 = vpow.pop %v3364
    %v3366 = vmul.f32 %v3357, 1.442695
    %v3367 = vpow.pop %v3366
    %v3368 = vmul.f32 %v3358, 1.442695
    %v3369 = vpow.pop %v3368
    %v3370 = vmul.f32 %v3359, 1.442695
    %v3371 = vpow.pop %v3370
    %v3372 = vadd.f32 %v3361, 1.0
    %v3373 = vadd.f32 %v3363, 1.0
    %v3374 = vadd.f32 %v3365, 1.0
    %v3375 = vadd.f32 %v3367, 1.0
    %v3376 = vadd.f32 %v3369, 1.0
    %v3377 = vadd.f32 %v3371, 1.0
    %v3378 = vrcp.pop %v3372
    %v3379 = vmul.f32 %v3372, %v3378
    %v3380 = vsub.f32 1.0, %v3379
    %v3381 = vmul.f32 %v3378, %v3380
    %v3382 = vadd.f32 %v3378, %v3381
    %vm3383 = vweird.f32 %v3372
    %vm3384 = vweird.f32 %v3378
    %vm3385 = vmor %vm3383, %vm3384
    %v3386 = vsel %vm3385, %v3378, %v3382
    %v3387 = vand.u32 2147483647, %v3372
    %vm3388 = vcmp.eq.f32.partialorder %v3387, 8.507059e+37
    %v3389 = vand.u32 %v3372, 2147483648
    %v3390 = vor.u32 1.1754944e-38, %v3389
    %v3391 = vsel %vm3388, %v3390, %v3386
    %v3392 = vmul.f32 1.0, %v3391
    %v3393 = vrcp.pop %v3373
    %v3394 = vmul.f32 %v3373, %v3393
    %v3395 = vsub.f32 1.0, %v3394
    %v3396 = vmul.f32 %v3393, %v3395
    %v3397 = vadd.f32 %v3393, %v3396
    %vm3398 = vweird.f32 %v3373
    %vm3399 = vweird.f32 %v3393
    %vm3400 = vmor %vm3398, %vm3399
    %v3401 = vsel %vm3400, %v3393, %v3397
    %v3402 = vand.u32 2147483647, %v3373
    %vm3403 = vcmp.eq.f32.partialorder %v3402, 8.507059e+37
    %v3404 = vand.u32 %v3373, 2147483648
    %v3405 = vor.u32 1.1754944e-38, %v3404
    %v3406 = vsel %vm3403, %v3405, %v3401
    %v3407 = vmul.f32 1.0, %v3406
    %v3408 = vrcp.pop %v3374
    %v3409 = vmul.f32 %v3374, %v3408
    %v3410 = vsub.f32 1.0, %v3409
    %v3411 = vmul.f32 %v3408, %v3410
    %v3412 = vadd.f32 %v3408, %v3411
    %vm3413 = vweird.f32 %v3374
    %vm3414 = vweird.f32 %v3408
    %vm3415 = vmor %vm3413, %vm3414
    %v3416 = vsel %vm3415, %v3408, %v3412
    %v3417 = vand.u32 2147483647, %v3374
    %vm3418 = vcmp.eq.f32.partialorder %v3417, 8.507059e+37
    %v3419 = vand.u32 %v3374, 2147483648
    %v3420 = vor.u32 1.1754944e-38, %v3419
    %v3421 = vsel %vm3418, %v3420, %v3416
    %v3422 = vmul.f32 1.0, %v3421
    %v3423 = vrcp.pop %v3375
    %v3424 = vmul.f32 %v3375, %v3423
    %v3425 = vsub.f32 1.0, %v3424
    %v3426 = vmul.f32 %v3423, %v3425
    %v3427 = vadd.f32 %v3423, %v3426
    %vm3428 = vweird.f32 %v3375
    %vm3429 = vweird.f32 %v3423
    %vm3430 = vmor %vm3428, %vm3429
    %v3431 = vsel %vm3430, %v3423, %v3427
    %v3432 = vand.u32 2147483647, %v3375
    %vm3433 = vcmp.eq.f32.partialorder %v3432, 8.507059e+37
    %v3434 = vand.u32 %v3375, 2147483648
    %v3435 = vor.u32 1.1754944e-38, %v3434
    %v3436 = vsel %vm3433, %v3435, %v3431
    %v3437 = vmul.f32 1.0, %v3436
    %v3438 = vrcp.pop %v3376
    %v3439 = vmul.f32 %v3376, %v3438
    %v3440 = vsub.f32 1.0, %v3439
    %v3441 = vmul.f32 %v3438, %v3440
    %v3442 = vadd.f32 %v3438, %v3441
    %vm3443 = vweird.f32 %v3376
    %vm3444 = vweird.f32 %v3438
    %vm3445 = vmor %vm3443, %vm3444
    %v3446 = vsel %vm3445, %v3438, %v3442
    %v3447 = vand.u32 2147483647, %v3376
    %vm3448 = vcmp.eq.f32.partialorder %v3447, 8.507059e+37
    %v3449 = vand.u32 %v3376, 2147483648
    %v3450 = vor.u32 1.1754944e-38, %v3449
    %v3451 = vsel %vm3448, %v3450, %v3446
    %v3452 = vmul.f32 1.0, %v3451
    %v3453 = vrcp.pop %v3377
    %v3454 = vmul.f32 %v3377, %v3453
    %v3455 = vsub.f32 1.0, %v3454
    %v3456 = vmul.f32 %v3453, %v3455
    %v3457 = vadd.f32 %v3453, %v3456
    %vm3458 = vweird.f32 %v3377
    %vm3459 = vweird.f32 %v3453
    %vm3460 = vmor %vm3458, %vm3459
    %v3461 = vsel %vm3460, %v3453, %v3457
    %v3462 = vand.u32 2147483647, %v3377
    %vm3463 = vcmp.eq.f32.partialorder %v3462, 8.507059e+37
    %v3464 = vand.u32 %v3377, 2147483648
    %v3465 = vor.u32 1.1754944e-38, %v3464
    %v3466 = vsel %vm3463, %v3465, %v3461
    %v3467 = vmul.f32 1.0, %v3466
    %v3468 = vtanh.pop %v3349
    %v3469 = vtanh.pop %v3353
    %v3470 = vmul.f32 %v3407, %v3275
    %v3471 = vmul.f32 %v3452, %v3276
    %v3472 = vmul.f32 %v3392, %v3468
    %v3473 = vmul.f32 %v3437, %v3469
    %v3474 = vadd.f32 %v3470, %v3472
    %v3475 = vadd.f32 %v3471, %v3473
    %v3476 = vtanh.pop %v3474
    %v3477 = vtanh.pop %v3475
    %v3478 = vmul.f32 %v3422, %v3476
    %v3479 = vmul.f32 %v3467, %v3477
    %v3480 = vld [vmem:[%s1095] sm:$0xff]
    %v3481 = vld [vmem:[%s1095 + $0x8] sm:$0xff]
    %v3482 = vld [vmem:[%s1095 + $0x10] sm:$0xff]
    %v3483 = vld [vmem:[%s1095 + $0x18] sm:$0xff]
    %v3484 = vld [vmem:[%s1095 + $0x20] sm:$0xff]
    %v3485 = vld [vmem:[%s1095 + $0x28] sm:$0xff]
    %v3486 = vld [vmem:[%s1095 + $0x30] sm:$0xff]
    %v3487 = vld [vmem:[%s1095 + $0x38] sm:$0xff]
    %v3488 = vpack.c.bf16 %v3479, %v3478
    %3489 = vmatpush.bf16.msra.mxu0 %v3055
    %3490 = vmatpush.bf16.msra.mxu0 %v3051
    %3491 = vmatpush.bf16.msra.mxu0 %v3047
    %3492 = vmatpush.bf16.msra.mxu0 %v3043
    %3493 = vmatpush.bf16.msra.mxu0 %v3039
    %3494 = vmatpush.bf16.msra.mxu0 %v3035
    %3495 = vmatpush.bf16.msra.mxu0 %v3031
    %3496 = vmatpush.bf16.msra.mxu0 %v3027
    %3497 = vmatmul.bf16.gmra.mxu0 %v3488
    %v3498 = vpop.f32.mrf.mxu0
    %v3499 = vadd.f32 0.0, %v3498
    %v3500 = vpop.f32.mrf.mxu0
    %v3501 = vadd.f32 0.0, %v3500
    %3502 = vdwg.mxu0
    %3503 = vmatpush.bf16.msra.mxu0 %v3056
    %3504 = vmatpush.bf16.msra.mxu0 %v3052
    %3505 = vmatpush.bf16.msra.mxu0 %v3048
    %3506 = vmatpush.bf16.msra.mxu0 %v3044
    %3507 = vmatpush.bf16.msra.mxu0 %v3040
    %3508 = vmatpush.bf16.msra.mxu0 %v3036
    %3509 = vmatpush.bf16.msra.mxu0 %v3032
    %3510 = vmatpush.bf16.msra.mxu0 %v3028
    %3511 = vmatmul.bf16.gmra.mxu0 %v3488
    %v3512 = vpop.f32.mrf.mxu0
    %v3513 = vadd.f32 0.0, %v3512
    %v3514 = vpop.f32.mrf.mxu0
    %v3515 = vadd.f32 0.0, %v3514
    %3516 = vdwg.mxu0
    %3517 = vmatpush.bf16.msra.mxu0 %v3057
    %3518 = vmatpush.bf16.msra.mxu0 %v3053
    %3519 = vmatpush.bf16.msra.mxu0 %v3049
    %3520 = vmatpush.bf16.msra.mxu0 %v3045
    %3521 = vmatpush.bf16.msra.mxu0 %v3041
    %3522 = vmatpush.bf16.msra.mxu0 %v3037
    %3523 = vmatpush.bf16.msra.mxu0 %v3033
    %3524 = vmatpush.bf16.msra.mxu0 %v3029
    %3525 = vmatmul.bf16.gmra.mxu0 %v3488
    %v3526 = vpop.f32.mrf.mxu0
    %v3527 = vadd.f32 0.0, %v3526
    %v3528 = vpop.f32.mrf.mxu0
    %v3529 = vadd.f32 0.0, %v3528
    %3530 = vdwg.mxu0
    %3531 = vmatpush.bf16.msra.mxu0 %v3058
    %3532 = vmatpush.bf16.msra.mxu0 %v3054
    %3533 = vmatpush.bf16.msra.mxu0 %v3050
    %3534 = vmatpush.bf16.msra.mxu0 %v3046
    %3535 = vmatpush.bf16.msra.mxu0 %v3042
    %3536 = vmatpush.bf16.msra.mxu0 %v3038
    %3537 = vmatpush.bf16.msra.mxu0 %v3034
    %3538 = vmatpush.bf16.msra.mxu0 %v3030
    %3539 = vmatmul.bf16.gmra.mxu0 %v3488
    %v3540 = vpop.f32.mrf.mxu0
    %v3541 = vadd.f32 0.0, %v3540
    %v3542 = vpop.f32.mrf.mxu0
    %v3543 = vadd.f32 0.0, %v3542
    %3544 = vdwg.mxu0
    %v3545 = vadd.f32 %v3480, %v3499
    %v3546 = vadd.f32 %v3481, %v3513
    %v3547 = vadd.f32 %v3482, %v3527
    %v3548 = vadd.f32 %v3483, %v3541
    %v3549 = vadd.f32 %v3484, %v3501
    %v3550 = vadd.f32 %v3485, %v3515
    %v3551 = vadd.f32 %v3486, %v3529
    %v3552 = vadd.f32 %v3487, %v3543
    %v3553 = vxor.u32 %v3545, 2147483648
    %v3554 = vxor.u32 %v3546, 2147483648
    %v3555 = vxor.u32 %v3547, 2147483648
    %v3556 = vxor.u32 %v3549, 2147483648
    %v3557 = vxor.u32 %v3550, 2147483648
    %v3558 = vxor.u32 %v3551, 2147483648
    %v3559 = vmul.f32 %v3553, 1.442695
    %v3560 = vpow.pop %v3559
    %v3561 = vmul.f32 %v3554, 1.442695
    %v3562 = vpow.pop %v3561
    %v3563 = vmul.f32 %v3555, 1.442695
    %v3564 = vpow.pop %v3563
    %v3565 = vmul.f32 %v3556, 1.442695
    %v3566 = vpow.pop %v3565
    %v3567 = vmul.f32 %v3557, 1.442695
    %v3568 = vpow.pop %v3567
    %v3569 = vmul.f32 %v3558, 1.442695
    %v3570 = vpow.pop %v3569
    %v3571 = vadd.f32 %v3560, 1.0
    %v3572 = vadd.f32 %v3562, 1.0
    %v3573 = vadd.f32 %v3564, 1.0
    %v3574 = vadd.f32 %v3566, 1.0
    %v3575 = vadd.f32 %v3568, 1.0
    %v3576 = vadd.f32 %v3570, 1.0
    %v3577 = vrcp.pop %v3571
    %v3578 = vmul.f32 %v3571, %v3577
    %v3579 = vsub.f32 1.0, %v3578
    %v3580 = vmul.f32 %v3577, %v3579
    %v3581 = vadd.f32 %v3577, %v3580
    %vm3582 = vweird.f32 %v3571
    %vm3583 = vweird.f32 %v3577
    %vm3584 = vmor %vm3582, %vm3583
    %v3585 = vsel %vm3584, %v3577, %v3581
    %v3586 = vand.u32 2147483647, %v3571
    %vm3587 = vcmp.eq.f32.partialorder %v3586, 8.507059e+37
    %v3588 = vand.u32 %v3571, 2147483648
    %v3589 = vor.u32 1.1754944e-38, %v3588
    %v3590 = vsel %vm3587, %v3589, %v3585
    %v3591 = vmul.f32 1.0, %v3590
    %v3592 = vrcp.pop %v3572
    %v3593 = vmul.f32 %v3572, %v3592
    %v3594 = vsub.f32 1.0, %v3593
    %v3595 = vmul.f32 %v3592, %v3594
    %v3596 = vadd.f32 %v3592, %v3595
    %vm3597 = vweird.f32 %v3572
    %vm3598 = vweird.f32 %v3592
    %vm3599 = vmor %vm3597, %vm3598
    %v3600 = vsel %vm3599, %v3592, %v3596
    %v3601 = vand.u32 2147483647, %v3572
    %vm3602 = vcmp.eq.f32.partialorder %v3601, 8.507059e+37
    %v3603 = vand.u32 %v3572, 2147483648
    %v3604 = vor.u32 1.1754944e-38, %v3603
    %v3605 = vsel %vm3602, %v3604, %v3600
    %v3606 = vmul.f32 1.0, %v3605
    %v3607 = vrcp.pop %v3573
    %v3608 = vmul.f32 %v3573, %v3607
    %v3609 = vsub.f32 1.0, %v3608
    %v3610 = vmul.f32 %v3607, %v3609
    %v3611 = vadd.f32 %v3607, %v3610
    %vm3612 = vweird.f32 %v3573
    %vm3613 = vweird.f32 %v3607
    %vm3614 = vmor %vm3612, %vm3613
    %v3615 = vsel %vm3614, %v3607, %v3611
    %v3616 = vand.u32 2147483647, %v3573
    %vm3617 = vcmp.eq.f32.partialorder %v3616, 8.507059e+37
    %v3618 = vand.u32 %v3573, 2147483648
    %v3619 = vor.u32 1.1754944e-38, %v3618
    %v3620 = vsel %vm3617, %v3619, %v3615
    %v3621 = vmul.f32 1.0, %v3620
    %v3622 = vrcp.pop %v3574
    %v3623 = vmul.f32 %v3574, %v3622
    %v3624 = vsub.f32 1.0, %v3623
    %v3625 = vmul.f32 %v3622, %v3624
    %v3626 = vadd.f32 %v3622, %v3625
    %vm3627 = vweird.f32 %v3574
    %vm3628 = vweird.f32 %v3622
    %vm3629 = vmor %vm3627, %vm3628
    %v3630 = vsel %vm3629, %v3622, %v3626
    %v3631 = vand.u32 2147483647, %v3574
    %vm3632 = vcmp.eq.f32.partialorder %v3631, 8.507059e+37
    %v3633 = vand.u32 %v3574, 2147483648
    %v3634 = vor.u32 1.1754944e-38, %v3633
    %v3635 = vsel %vm3632, %v3634, %v3630
    %v3636 = vmul.f32 1.0, %v3635
    %v3637 = vrcp.pop %v3575
    %v3638 = vmul.f32 %v3575, %v3637
    %v3639 = vsub.f32 1.0, %v3638
    %v3640 = vmul.f32 %v3637, %v3639
    %v3641 = vadd.f32 %v3637, %v3640
    %vm3642 = vweird.f32 %v3575
    %vm3643 = vweird.f32 %v3637
    %vm3644 = vmor %vm3642, %vm3643
    %v3645 = vsel %vm3644, %v3637, %v3641
    %v3646 = vand.u32 2147483647, %v3575
    %vm3647 = vcmp.eq.f32.partialorder %v3646, 8.507059e+37
    %v3648 = vand.u32 %v3575, 2147483648
    %v3649 = vor.u32 1.1754944e-38, %v3648
    %v3650 = vsel %vm3647, %v3649, %v3645
    %v3651 = vmul.f32 1.0, %v3650
    %v3652 = vrcp.pop %v3576
    %v3653 = vmul.f32 %v3576, %v3652
    %v3654 = vsub.f32 1.0, %v3653
    %v3655 = vmul.f32 %v3652, %v3654
    %v3656 = vadd.f32 %v3652, %v3655
    %vm3657 = vweird.f32 %v3576
    %vm3658 = vweird.f32 %v3652
    %vm3659 = vmor %vm3657, %vm3658
    %v3660 = vsel %vm3659, %v3652, %v3656
    %v3661 = vand.u32 2147483647, %v3576
    %vm3662 = vcmp.eq.f32.partialorder %v3661, 8.507059e+37
    %v3663 = vand.u32 %v3576, 2147483648
    %v3664 = vor.u32 1.1754944e-38, %v3663
    %v3665 = vsel %vm3662, %v3664, %v3660
    %v3666 = vmul.f32 1.0, %v3665
    %v3667 = vtanh.pop %v3548
    %v3668 = vtanh.pop %v3552
    %v3669 = vmul.f32 %v3606, %v3474
    %v3670 = vmul.f32 %v3651, %v3475
    %v3671 = vmul.f32 %v3591, %v3667
    %v3672 = vmul.f32 %v3636, %v3668
    %v3673 = vadd.f32 %v3669, %v3671
    %v3674 = vadd.f32 %v3670, %v3672
    %v3675 = vtanh.pop %v3673
    %v3676 = vtanh.pop %v3674
    %v3677 = vmul.f32 %v3621, %v3675
    %v3678 = vmul.f32 %v3666, %v3676
    %v3679 = vld [vmem:[%s1307] sm:$0xff]
    %v3680 = vld [vmem:[%s1307 + $0x8] sm:$0xff]
    %v3681 = vld [vmem:[%s1307 + $0x10] sm:$0xff]
    %v3682 = vld [vmem:[%s1307 + $0x18] sm:$0xff]
    %v3683 = vld [vmem:[%s1307 + $0x20] sm:$0xff]
    %v3684 = vld [vmem:[%s1307 + $0x28] sm:$0xff]
    %v3685 = vld [vmem:[%s1307 + $0x30] sm:$0xff]
    %v3686 = vld [vmem:[%s1307 + $0x38] sm:$0xff]
    %v3687 = vpack.c.bf16 %v3678, %v3677
    %3688 = vmatpush.bf16.msra.mxu0 %v3055
    %3689 = vmatpush.bf16.msra.mxu0 %v3051
    %3690 = vmatpush.bf16.msra.mxu0 %v3047
    %3691 = vmatpush.bf16.msra.mxu0 %v3043
    %3692 = vmatpush.bf16.msra.mxu0 %v3039
    %3693 = vmatpush.bf16.msra.mxu0 %v3035
    %3694 = vmatpush.bf16.msra.mxu0 %v3031
    %3695 = vmatpush.bf16.msra.mxu0 %v3027
    %3696 = vmatmul.bf16.gmra.mxu0 %v3687
    %v3697 = vpop.f32.mrf.mxu0
    %v3698 = vadd.f32 0.0, %v3697
    %v3699 = vpop.f32.mrf.mxu0
    %v3700 = vadd.f32 0.0, %v3699
    %3701 = vdwg.mxu0
    %3702 = vmatpush.bf16.msra.mxu0 %v3056
    %3703 = vmatpush.bf16.msra.mxu0 %v3052
    %3704 = vmatpush.bf16.msra.mxu0 %v3048
    %3705 = vmatpush.bf16.msra.mxu0 %v3044
    %3706 = vmatpush.bf16.msra.mxu0 %v3040
    %3707 = vmatpush.bf16.msra.mxu0 %v3036
    %3708 = vmatpush.bf16.msra.mxu0 %v3032
    %3709 = vmatpush.bf16.msra.mxu0 %v3028
    %3710 = vmatmul.bf16.gmra.mxu0 %v3687
    %v3711 = vpop.f32.mrf.mxu0
    %v3712 = vadd.f32 0.0, %v3711
    %v3713 = vpop.f32.mrf.mxu0
    %v3714 = vadd.f32 0.0, %v3713
    %3715 = vdwg.mxu0
    %3716 = vmatpush.bf16.msra.mxu0 %v3057
    %3717 = vmatpush.bf16.msra.mxu0 %v3053
    %3718 = vmatpush.bf16.msra.mxu0 %v3049
    %3719 = vmatpush.bf16.msra.mxu0 %v3045
    %3720 = vmatpush.bf16.msra.mxu0 %v3041
    %3721 = vmatpush.bf16.msra.mxu0 %v3037
    %3722 = vmatpush.bf16.msra.mxu0 %v3033
    %3723 = vmatpush.bf16.msra.mxu0 %v3029
    %3724 = vmatmul.bf16.gmra.mxu0 %v3687
    %v3725 = vpop.f32.mrf.mxu0
    %v3726 = vadd.f32 0.0, %v3725
    %v3727 = vpop.f32.mrf.mxu0
    %v3728 = vadd.f32 0.0, %v3727
    %3729 = vdwg.mxu0
    %3730 = vmatpush.bf16.msra.mxu0 %v3058
    %3731 = vmatpush.bf16.msra.mxu0 %v3054
    %3732 = vmatpush.bf16.msra.mxu0 %v3050
    %3733 = vmatpush.bf16.msra.mxu0 %v3046
    %3734 = vmatpush.bf16.msra.mxu0 %v3042
    %3735 = vmatpush.bf16.msra.mxu0 %v3038
    %3736 = vmatpush.bf16.msra.mxu0 %v3034
    %3737 = vmatpush.bf16.msra.mxu0 %v3030
    %3738 = vmatmul.bf16.gmra.mxu0 %v3687
    %v3739 = vpop.f32.mrf.mxu0
    %v3740 = vadd.f32 0.0, %v3739
    %v3741 = vpop.f32.mrf.mxu0
    %v3742 = vadd.f32 0.0, %v3741
    %3743 = vdwg.mxu0
    %v3744 = vadd.f32 %v3679, %v3698
    %v3745 = vadd.f32 %v3680, %v3712
    %v3746 = vadd.f32 %v3681, %v3726
    %v3747 = vadd.f32 %v3682, %v3740
    %v3748 = vadd.f32 %v3683, %v3700
    %v3749 = vadd.f32 %v3684, %v3714
    %v3750 = vadd.f32 %v3685, %v3728
    %v3751 = vadd.f32 %v3686, %v3742
    %v3752 = vxor.u32 %v3744, 2147483648
    %v3753 = vxor.u32 %v3745, 2147483648
    %v3754 = vxor.u32 %v3746, 2147483648
    %v3755 = vxor.u32 %v3748, 2147483648
    %v3756 = vxor.u32 %v3749, 2147483648
    %v3757 = vxor.u32 %v3750, 2147483648
    %v3758 = vmul.f32 %v3752, 1.442695
    %v3759 = vpow.pop %v3758
    %v3760 = vmul.f32 %v3753, 1.442695
    %v3761 = vpow.pop %v3760
    %v3762 = vmul.f32 %v3754, 1.442695
    %v3763 = vpow.pop %v3762
    %v3764 = vmul.f32 %v3755, 1.442695
    %v3765 = vpow.pop %v3764
    %v3766 = vmul.f32 %v3756, 1.442695
    %v3767 = vpow.pop %v3766
    %v3768 = vmul.f32 %v3757, 1.442695
    %v3769 = vpow.pop %v3768
    %v3770 = vadd.f32 %v3759, 1.0
    %v3771 = vadd.f32 %v3761, 1.0
    %v3772 = vadd.f32 %v3763, 1.0
    %v3773 = vadd.f32 %v3765, 1.0
    %v3774 = vadd.f32 %v3767, 1.0
    %v3775 = vadd.f32 %v3769, 1.0
    %v3776 = vrcp.pop %v3770
    %v3777 = vmul.f32 %v3770, %v3776
    %v3778 = vsub.f32 1.0, %v3777
    %v3779 = vmul.f32 %v3776, %v3778
    %v3780 = vadd.f32 %v3776, %v3779
    %vm3781 = vweird.f32 %v3770
    %vm3782 = vweird.f32 %v3776
    %vm3783 = vmor %vm3781, %vm3782
    %v3784 = vsel %vm3783, %v3776, %v3780
    %v3785 = vand.u32 2147483647, %v3770
    %vm3786 = vcmp.eq.f32.partialorder %v3785, 8.507059e+37
    %v3787 = vand.u32 %v3770, 2147483648
    %v3788 = vor.u32 1.1754944e-38, %v3787
    %v3789 = vsel %vm3786, %v3788, %v3784
    %v3790 = vmul.f32 1.0, %v3789
    %v3791 = vrcp.pop %v3771
    %v3792 = vmul.f32 %v3771, %v3791
    %v3793 = vsub.f32 1.0, %v3792
    %v3794 = vmul.f32 %v3791, %v3793
    %v3795 = vadd.f32 %v3791, %v3794
    %vm3796 = vweird.f32 %v3771
    %vm3797 = vweird.f32 %v3791
    %vm3798 = vmor %vm3796, %vm3797
    %v3799 = vsel %vm3798, %v3791, %v3795
    %v3800 = vand.u32 2147483647, %v3771
    %vm3801 = vcmp.eq.f32.partialorder %v3800, 8.507059e+37
    %v3802 = vand.u32 %v3771, 2147483648
    %v3803 = vor.u32 1.1754944e-38, %v3802
    %v3804 = vsel %vm3801, %v3803, %v3799
    %v3805 = vmul.f32 1.0, %v3804
    %v3806 = vrcp.pop %v3772
    %v3807 = vmul.f32 %v3772, %v3806
    %v3808 = vsub.f32 1.0, %v3807
    %v3809 = vmul.f32 %v3806, %v3808
    %v3810 = vadd.f32 %v3806, %v3809
    %vm3811 = vweird.f32 %v3772
    %vm3812 = vweird.f32 %v3806
    %vm3813 = vmor %vm3811, %vm3812
    %v3814 = vsel %vm3813, %v3806, %v3810
    %v3815 = vand.u32 2147483647, %v3772
    %vm3816 = vcmp.eq.f32.partialorder %v3815, 8.507059e+37
    %v3817 = vand.u32 %v3772, 2147483648
    %v3818 = vor.u32 1.1754944e-38, %v3817
    %v3819 = vsel %vm3816, %v3818, %v3814
    %v3820 = vmul.f32 1.0, %v3819
    %v3821 = vrcp.pop %v3773
    %v3822 = vmul.f32 %v3773, %v3821
    %v3823 = vsub.f32 1.0, %v3822
    %v3824 = vmul.f32 %v3821, %v3823
    %v3825 = vadd.f32 %v3821, %v3824
    %vm3826 = vweird.f32 %v3773
    %vm3827 = vweird.f32 %v3821
    %vm3828 = vmor %vm3826, %vm3827
    %v3829 = vsel %vm3828, %v3821, %v3825
    %v3830 = vand.u32 2147483647, %v3773
    %vm3831 = vcmp.eq.f32.partialorder %v3830, 8.507059e+37
    %v3832 = vand.u32 %v3773, 2147483648
    %v3833 = vor.u32 1.1754944e-38, %v3832
    %v3834 = vsel %vm3831, %v3833, %v3829
    %v3835 = vmul.f32 1.0, %v3834
    %v3836 = vrcp.pop %v3774
    %v3837 = vmul.f32 %v3774, %v3836
    %v3838 = vsub.f32 1.0, %v3837
    %v3839 = vmul.f32 %v3836, %v3838
    %v3840 = vadd.f32 %v3836, %v3839
    %vm3841 = vweird.f32 %v3774
    %vm3842 = vweird.f32 %v3836
    %vm3843 = vmor %vm3841, %vm3842
    %v3844 = vsel %vm3843, %v3836, %v3840
    %v3845 = vand.u32 2147483647, %v3774
    %vm3846 = vcmp.eq.f32.partialorder %v3845, 8.507059e+37
    %v3847 = vand.u32 %v3774, 2147483648
    %v3848 = vor.u32 1.1754944e-38, %v3847
    %v3849 = vsel %vm3846, %v3848, %v3844
    %v3850 = vmul.f32 1.0, %v3849
    %v3851 = vrcp.pop %v3775
    %v3852 = vmul.f32 %v3775, %v3851
    %v3853 = vsub.f32 1.0, %v3852
    %v3854 = vmul.f32 %v3851, %v3853
    %v3855 = vadd.f32 %v3851, %v3854
    %vm3856 = vweird.f32 %v3775
    %vm3857 = vweird.f32 %v3851
    %vm3858 = vmor %vm3856, %vm3857
    %v3859 = vsel %vm3858, %v3851, %v3855
    %v3860 = vand.u32 2147483647, %v3775
    %vm3861 = vcmp.eq.f32.partialorder %v3860, 8.507059e+37
    %v3862 = vand.u32 %v3775, 2147483648
    %v3863 = vor.u32 1.1754944e-38, %v3862
    %v3864 = vsel %vm3861, %v3863, %v3859
    %v3865 = vmul.f32 1.0, %v3864
    %v3866 = vtanh.pop %v3747
    %v3867 = vtanh.pop %v3751
    %v3868 = vmul.f32 %v3805, %v3673
    %v3869 = vmul.f32 %v3850, %v3674
    %v3870 = vmul.f32 %v3790, %v3866
    %v3871 = vmul.f32 %v3835, %v3867
    %v3872 = vadd.f32 %v3868, %v3870
    %v3873 = vadd.f32 %v3869, %v3871
    %v3874 = vtanh.pop %v3872
    %v3875 = vtanh.pop %v3873
    %v3876 = vmul.f32 %v3820, %v3874
    %v3877 = vmul.f32 %v3865, %v3875
    %v3878 = vld [vmem:[%s1519] sm:$0xff]
    %v3879 = vld [vmem:[%s1519 + $0x8] sm:$0xff]
    %v3880 = vld [vmem:[%s1519 + $0x10] sm:$0xff]
    %v3881 = vld [vmem:[%s1519 + $0x18] sm:$0xff]
    %v3882 = vld [vmem:[%s1519 + $0x20] sm:$0xff]
    %v3883 = vld [vmem:[%s1519 + $0x28] sm:$0xff]
    %v3884 = vld [vmem:[%s1519 + $0x30] sm:$0xff]
    %v3885 = vld [vmem:[%s1519 + $0x38] sm:$0xff]
    %v3886 = vpack.c.bf16 %v3877, %v3876
    %3887 = vmatpush.bf16.msra.mxu0 %v3055
    %3888 = vmatpush.bf16.msra.mxu0 %v3051
    %3889 = vmatpush.bf16.msra.mxu0 %v3047
    %3890 = vmatpush.bf16.msra.mxu0 %v3043
    %3891 = vmatpush.bf16.msra.mxu0 %v3039
    %3892 = vmatpush.bf16.msra.mxu0 %v3035
    %3893 = vmatpush.bf16.msra.mxu0 %v3031
    %3894 = vmatpush.bf16.msra.mxu0 %v3027
    %3895 = vmatmul.bf16.gmra.mxu0 %v3886
    %v3896 = vpop.f32.mrf.mxu0
    %v3897 = vadd.f32 0.0, %v3896
    %v3898 = vpop.f32.mrf.mxu0
    %v3899 = vadd.f32 0.0, %v3898
    %3900 = vdwg.mxu0
    %3901 = vmatpush.bf16.msra.mxu0 %v3056
    %3902 = vmatpush.bf16.msra.mxu0 %v3052
    %3903 = vmatpush.bf16.msra.mxu0 %v3048
    %3904 = vmatpush.bf16.msra.mxu0 %v3044
    %3905 = vmatpush.bf16.msra.mxu0 %v3040
    %3906 = vmatpush.bf16.msra.mxu0 %v3036
    %3907 = vmatpush.bf16.msra.mxu0 %v3032
    %3908 = vmatpush.bf16.msra.mxu0 %v3028
    %3909 = vmatmul.bf16.gmra.mxu0 %v3886
    %v3910 = vpop.f32.mrf.mxu0
    %v3911 = vadd.f32 0.0, %v3910
    %v3912 = vpop.f32.mrf.mxu0
    %v3913 = vadd.f32 0.0, %v3912
    %3914 = vdwg.mxu0
    %3915 = vmatpush.bf16.msra.mxu0 %v3057
    %3916 = vmatpush.bf16.msra.mxu0 %v3053
    %3917 = vmatpush.bf16.msra.mxu0 %v3049
    %3918 = vmatpush.bf16.msra.mxu0 %v3045
    %3919 = vmatpush.bf16.msra.mxu0 %v3041
    %3920 = vmatpush.bf16.msra.mxu0 %v3037
    %3921 = vmatpush.bf16.msra.mxu0 %v3033
    %3922 = vmatpush.bf16.msra.mxu0 %v3029
    %3923 = vmatmul.bf16.gmra.mxu0 %v3886
    %v3924 = vpop.f32.mrf.mxu0
    %v3925 = vadd.f32 0.0, %v3924
    %v3926 = vpop.f32.mrf.mxu0
    %v3927 = vadd.f32 0.0, %v3926
    %3928 = vdwg.mxu0
    %3929 = vmatpush.bf16.msra.mxu0 %v3058
    %3930 = vmatpush.bf16.msra.mxu0 %v3054
    %3931 = vmatpush.bf16.msra.mxu0 %v3050
    %3932 = vmatpush.bf16.msra.mxu0 %v3046
    %3933 = vmatpush.bf16.msra.mxu0 %v3042
    %3934 = vmatpush.bf16.msra.mxu0 %v3038
    %3935 = vmatpush.bf16.msra.mxu0 %v3034
    %3936 = vmatpush.bf16.msra.mxu0 %v3030
    %3937 = vmatmul.bf16.gmra.mxu0 %v3886
    %v3938 = vpop.f32.mrf.mxu0
    %v3939 = vadd.f32 0.0, %v3938
    %v3940 = vpop.f32.mrf.mxu0
    %v3941 = vadd.f32 0.0, %v3940
    %3942 = vdwg.mxu0
    %v3943 = vadd.f32 %v3878, %v3897
    %v3944 = vadd.f32 %v3879, %v3911
    %v3945 = vadd.f32 %v3880, %v3925
    %v3946 = vadd.f32 %v3881, %v3939
    %v3947 = vadd.f32 %v3882, %v3899
    %v3948 = vadd.f32 %v3883, %v3913
    %v3949 = vadd.f32 %v3884, %v3927
    %v3950 = vadd.f32 %v3885, %v3941
    %v3951 = vxor.u32 %v3943, 2147483648
    %v3952 = vxor.u32 %v3944, 2147483648
    %v3953 = vxor.u32 %v3945, 2147483648
    %v3954 = vxor.u32 %v3947, 2147483648
    %v3955 = vxor.u32 %v3948, 2147483648
    %v3956 = vxor.u32 %v3949, 2147483648
    %v3957 = vmul.f32 %v3951, 1.442695
    %v3958 = vpow.pop %v3957
    %v3959 = vmul.f32 %v3952, 1.442695
    %v3960 = vpow.pop %v3959
    %v3961 = vmul.f32 %v3953, 1.442695
    %v3962 = vpow.pop %v3961
    %v3963 = vmul.f32 %v3954, 1.442695
    %v3964 = vpow.pop %v3963
    %v3965 = vmul.f32 %v3955, 1.442695
    %v3966 = vpow.pop %v3965
    %v3967 = vmul.f32 %v3956, 1.442695
    %v3968 = vpow.pop %v3967
    %v3969 = vadd.f32 %v3958, 1.0
    %v3970 = vadd.f32 %v3960, 1.0
    %v3971 = vadd.f32 %v3962, 1.0
    %v3972 = vadd.f32 %v3964, 1.0
    %v3973 = vadd.f32 %v3966, 1.0
    %v3974 = vadd.f32 %v3968, 1.0
    %v3975 = vrcp.pop %v3969
    %v3976 = vmul.f32 %v3969, %v3975
    %v3977 = vsub.f32 1.0, %v3976
    %v3978 = vmul.f32 %v3975, %v3977
    %v3979 = vadd.f32 %v3975, %v3978
    %vm3980 = vweird.f32 %v3969
    %vm3981 = vweird.f32 %v3975
    %vm3982 = vmor %vm3980, %vm3981
    %v3983 = vsel %vm3982, %v3975, %v3979
    %v3984 = vand.u32 2147483647, %v3969
    %vm3985 = vcmp.eq.f32.partialorder %v3984, 8.507059e+37
    %v3986 = vand.u32 %v3969, 2147483648
    %v3987 = vor.u32 1.1754944e-38, %v3986
    %v3988 = vsel %vm3985, %v3987, %v3983
    %v3989 = vmul.f32 1.0, %v3988
    %v3990 = vrcp.pop %v3970
    %v3991 = vmul.f32 %v3970, %v3990
    %v3992 = vsub.f32 1.0, %v3991
    %v3993 = vmul.f32 %v3990, %v3992
    %v3994 = vadd.f32 %v3990, %v3993
    %vm3995 = vweird.f32 %v3970
    %vm3996 = vweird.f32 %v3990
    %vm3997 = vmor %vm3995, %vm3996
    %v3998 = vsel %vm3997, %v3990, %v3994
    %v3999 = vand.u32 2147483647, %v3970
    %vm4000 = vcmp.eq.f32.partialorder %v3999, 8.507059e+37
    %v4001 = vand.u32 %v3970, 2147483648
    %v4002 = vor.u32 1.1754944e-38, %v4001
    %v4003 = vsel %vm4000, %v4002, %v3998
    %v4004 = vmul.f32 1.0, %v4003
    %v4005 = vrcp.pop %v3971
    %v4006 = vmul.f32 %v3971, %v4005
    %v4007 = vsub.f32 1.0, %v4006
    %v4008 = vmul.f32 %v4005, %v4007
    %v4009 = vadd.f32 %v4005, %v4008
    %vm4010 = vweird.f32 %v3971
    %vm4011 = vweird.f32 %v4005
    %vm4012 = vmor %vm4010, %vm4011
    %v4013 = vsel %vm4012, %v4005, %v4009
    %v4014 = vand.u32 2147483647, %v3971
    %vm4015 = vcmp.eq.f32.partialorder %v4014, 8.507059e+37
    %v4016 = vand.u32 %v3971, 2147483648
    %v4017 = vor.u32 1.1754944e-38, %v4016
    %v4018 = vsel %vm4015, %v4017, %v4013
    %v4019 = vmul.f32 1.0, %v4018
    %v4020 = vrcp.pop %v3972
    %v4021 = vmul.f32 %v3972, %v4020
    %v4022 = vsub.f32 1.0, %v4021
    %v4023 = vmul.f32 %v4020, %v4022
    %v4024 = vadd.f32 %v4020, %v4023
    %vm4025 = vweird.f32 %v3972
    %vm4026 = vweird.f32 %v4020
    %vm4027 = vmor %vm4025, %vm4026
    %v4028 = vsel %vm4027, %v4020, %v4024
    %v4029 = vand.u32 2147483647, %v3972
    %vm4030 = vcmp.eq.f32.partialorder %v4029, 8.507059e+37
    %v4031 = vand.u32 %v3972, 2147483648
    %v4032 = vor.u32 1.1754944e-38, %v4031
    %v4033 = vsel %vm4030, %v4032, %v4028
    %v4034 = vmul.f32 1.0, %v4033
    %v4035 = vrcp.pop %v3973
    %v4036 = vmul.f32 %v3973, %v4035
    %v4037 = vsub.f32 1.0, %v4036
    %v4038 = vmul.f32 %v4035, %v4037
    %v4039 = vadd.f32 %v4035, %v4038
    %vm4040 = vweird.f32 %v3973
    %vm4041 = vweird.f32 %v4035
    %vm4042 = vmor %vm4040, %vm4041
    %v4043 = vsel %vm4042, %v4035, %v4039
    %v4044 = vand.u32 2147483647, %v3973
    %vm4045 = vcmp.eq.f32.partialorder %v4044, 8.507059e+37
    %v4046 = vand.u32 %v3973, 2147483648
    %v4047 = vor.u32 1.1754944e-38, %v4046
    %v4048 = vsel %vm4045, %v4047, %v4043
    %v4049 = vmul.f32 1.0, %v4048
    %v4050 = vrcp.pop %v3974
    %v4051 = vmul.f32 %v3974, %v4050
    %v4052 = vsub.f32 1.0, %v4051
    %v4053 = vmul.f32 %v4050, %v4052
    %v4054 = vadd.f32 %v4050, %v4053
    %vm4055 = vweird.f32 %v3974
    %vm4056 = vweird.f32 %v4050
    %vm4057 = vmor %vm4055, %vm4056
    %v4058 = vsel %vm4057, %v4050, %v4054
    %v4059 = vand.u32 2147483647, %v3974
    %vm4060 = vcmp.eq.f32.partialorder %v4059, 8.507059e+37
    %v4061 = vand.u32 %v3974, 2147483648
    %v4062 = vor.u32 1.1754944e-38, %v4061
    %v4063 = vsel %vm4060, %v4062, %v4058
    %v4064 = vmul.f32 1.0, %v4063
    %v4065 = vtanh.pop %v3946
    %v4066 = vtanh.pop %v3950
    %v4067 = vmul.f32 %v4004, %v3872
    %v4068 = vmul.f32 %v4049, %v3873
    %v4069 = vmul.f32 %v3989, %v4065
    %v4070 = vmul.f32 %v4034, %v4066
    %v4071 = vadd.f32 %v4067, %v4069
    %v4072 = vadd.f32 %v4068, %v4070
    %v4073 = vtanh.pop %v4071
    %v4074 = vtanh.pop %v4072
    %v4075 = vmul.f32 %v4019, %v4073
    %v4076 = vmul.f32 %v4064, %v4074
    %v4077 = vld [vmem:[%s1731] sm:$0xff]
    %v4078 = vld [vmem:[%s1731 + $0x8] sm:$0xff]
    %v4079 = vld [vmem:[%s1731 + $0x10] sm:$0xff]
    %v4080 = vld [vmem:[%s1731 + $0x18] sm:$0xff]
    %v4081 = vld [vmem:[%s1731 + $0x20] sm:$0xff]
    %v4082 = vld [vmem:[%s1731 + $0x28] sm:$0xff]
    %v4083 = vld [vmem:[%s1731 + $0x30] sm:$0xff]
    %v4084 = vld [vmem:[%s1731 + $0x38] sm:$0xff]
    %v4085 = vpack.c.bf16 %v4076, %v4075
    %4086 = vmatpush.bf16.msra.mxu0 %v3055
    %4087 = vmatpush.bf16.msra.mxu0 %v3051
    %4088 = vmatpush.bf16.msra.mxu0 %v3047
    %4089 = vmatpush.bf16.msra.mxu0 %v3043
    %4090 = vmatpush.bf16.msra.mxu0 %v3039
    %4091 = vmatpush.bf16.msra.mxu0 %v3035
    %4092 = vmatpush.bf16.msra.mxu0 %v3031
    %4093 = vmatpush.bf16.msra.mxu0 %v3027
    %4094 = vmatmul.bf16.gmra.mxu0 %v4085
    %v4095 = vpop.f32.mrf.mxu0
    %v4096 = vadd.f32 0.0, %v4095
    %v4097 = vpop.f32.mrf.mxu0
    %v4098 = vadd.f32 0.0, %v4097
    %4099 = vdwg.mxu0
    %4100 = vmatpush.bf16.msra.mxu0 %v3056
    %4101 = vmatpush.bf16.msra.mxu0 %v3052
    %4102 = vmatpush.bf16.msra.mxu0 %v3048
    %4103 = vmatpush.bf16.msra.mxu0 %v3044
    %4104 = vmatpush.bf16.msra.mxu0 %v3040
    %4105 = vmatpush.bf16.msra.mxu0 %v3036
    %4106 = vmatpush.bf16.msra.mxu0 %v3032
    %4107 = vmatpush.bf16.msra.mxu0 %v3028
    %4108 = vmatmul.bf16.gmra.mxu0 %v4085
    %v4109 = vpop.f32.mrf.mxu0
    %v4110 = vadd.f32 0.0, %v4109
    %v4111 = vpop.f32.mrf.mxu0
    %v4112 = vadd.f32 0.0, %v4111
    %4113 = vdwg.mxu0
    %4114 = vmatpush.bf16.msra.mxu0 %v3057
    %4115 = vmatpush.bf16.msra.mxu0 %v3053
    %4116 = vmatpush.bf16.msra.mxu0 %v3049
    %4117 = vmatpush.bf16.msra.mxu0 %v3045
    %4118 = vmatpush.bf16.msra.mxu0 %v3041
    %4119 = vmatpush.bf16.msra.mxu0 %v3037
    %4120 = vmatpush.bf16.msra.mxu0 %v3033
    %4121 = vmatpush.bf16.msra.mxu0 %v3029
    %4122 = vmatmul.bf16.gmra.mxu0 %v4085
    %v4123 = vpop.f32.mrf.mxu0
    %v4124 = vadd.f32 0.0, %v4123
    %v4125 = vpop.f32.mrf.mxu0
    %v4126 = vadd.f32 0.0, %v4125
    %4127 = vdwg.mxu0
    %4128 = vmatpush.bf16.msra.mxu0 %v3058
    %4129 = vmatpush.bf16.msra.mxu0 %v3054
    %4130 = vmatpush.bf16.msra.mxu0 %v3050
    %4131 = vmatpush.bf16.msra.mxu0 %v3046
    %4132 = vmatpush.bf16.msra.mxu0 %v3042
    %4133 = vmatpush.bf16.msra.mxu0 %v3038
    %4134 = vmatpush.bf16.msra.mxu0 %v3034
    %4135 = vmatpush.bf16.msra.mxu0 %v3030
    %4136 = vmatmul.bf16.gmra.mxu0 %v4085
    %v4137 = vpop.f32.mrf.mxu0
    %v4138 = vadd.f32 0.0, %v4137
    %v4139 = vpop.f32.mrf.mxu0
    %v4140 = vadd.f32 0.0, %v4139
    %4141 = vdwg.mxu0
    %v4142 = vadd.f32 %v4077, %v4096
    %v4143 = vadd.f32 %v4078, %v4110
    %v4144 = vadd.f32 %v4079, %v4124
    %v4145 = vadd.f32 %v4080, %v4138
    %v4146 = vadd.f32 %v4081, %v4098
    %v4147 = vadd.f32 %v4082, %v4112
    %v4148 = vadd.f32 %v4083, %v4126
    %v4149 = vadd.f32 %v4084, %v4140
    %v4150 = vxor.u32 %v4142, 2147483648
    %v4151 = vxor.u32 %v4143, 2147483648
    %v4152 = vxor.u32 %v4144, 2147483648
    %v4153 = vxor.u32 %v4146, 2147483648
    %v4154 = vxor.u32 %v4147, 2147483648
    %v4155 = vxor.u32 %v4148, 2147483648
    %v4156 = vmul.f32 %v4150, 1.442695
    %v4157 = vpow.pop %v4156
    %v4158 = vmul.f32 %v4151, 1.442695
    %v4159 = vpow.pop %v4158
    %v4160 = vmul.f32 %v4152, 1.442695
    %v4161 = vpow.pop %v4160
    %v4162 = vmul.f32 %v4153, 1.442695
    %v4163 = vpow.pop %v4162
    %v4164 = vmul.f32 %v4154, 1.442695
    %v4165 = vpow.pop %v4164
    %v4166 = vmul.f32 %v4155, 1.442695
    %v4167 = vpow.pop %v4166
    %v4168 = vadd.f32 %v4157, 1.0
    %v4169 = vadd.f32 %v4159, 1.0
    %v4170 = vadd.f32 %v4161, 1.0
    %v4171 = vadd.f32 %v4163, 1.0
    %v4172 = vadd.f32 %v4165, 1.0
    %v4173 = vadd.f32 %v4167, 1.0
    %v4174 = vrcp.pop %v4168
    %v4175 = vmul.f32 %v4168, %v4174
    %v4176 = vsub.f32 1.0, %v4175
    %v4177 = vmul.f32 %v4174, %v4176
    %v4178 = vadd.f32 %v4174, %v4177
    %vm4179 = vweird.f32 %v4168
    %vm4180 = vweird.f32 %v4174
    %vm4181 = vmor %vm4179, %vm4180
    %v4182 = vsel %vm4181, %v4174, %v4178
    %v4183 = vand.u32 2147483647, %v4168
    %vm4184 = vcmp.eq.f32.partialorder %v4183, 8.507059e+37
    %v4185 = vand.u32 %v4168, 2147483648
    %v4186 = vor.u32 1.1754944e-38, %v4185
    %v4187 = vsel %vm4184, %v4186, %v4182
    %v4188 = vmul.f32 1.0, %v4187
    %v4189 = vrcp.pop %v4169
    %v4190 = vmul.f32 %v4169, %v4189
    %v4191 = vsub.f32 1.0, %v4190
    %v4192 = vmul.f32 %v4189, %v4191
    %v4193 = vadd.f32 %v4189, %v4192
    %vm4194 = vweird.f32 %v4169
    %vm4195 = vweird.f32 %v4189
    %vm4196 = vmor %vm4194, %vm4195
    %v4197 = vsel %vm4196, %v4189, %v4193
    %v4198 = vand.u32 2147483647, %v4169
    %vm4199 = vcmp.eq.f32.partialorder %v4198, 8.507059e+37
    %v4200 = vand.u32 %v4169, 2147483648
    %v4201 = vor.u32 1.1754944e-38, %v4200
    %v4202 = vsel %vm4199, %v4201, %v4197
    %v4203 = vmul.f32 1.0, %v4202
    %v4204 = vrcp.pop %v4170
    %v4205 = vmul.f32 %v4170, %v4204
    %v4206 = vsub.f32 1.0, %v4205
    %v4207 = vmul.f32 %v4204, %v4206
    %v4208 = vadd.f32 %v4204, %v4207
    %vm4209 = vweird.f32 %v4170
    %vm4210 = vweird.f32 %v4204
    %vm4211 = vmor %vm4209, %vm4210
    %v4212 = vsel %vm4211, %v4204, %v4208
    %v4213 = vand.u32 2147483647, %v4170
    %vm4214 = vcmp.eq.f32.partialorder %v4213, 8.507059e+37
    %v4215 = vand.u32 %v4170, 2147483648
    %v4216 = vor.u32 1.1754944e-38, %v4215
    %v4217 = vsel %vm4214, %v4216, %v4212
    %v4218 = vmul.f32 1.0, %v4217
    %v4219 = vrcp.pop %v4171
    %v4220 = vmul.f32 %v4171, %v4219
    %v4221 = vsub.f32 1.0, %v4220
    %v4222 = vmul.f32 %v4219, %v4221
    %v4223 = vadd.f32 %v4219, %v4222
    %vm4224 = vweird.f32 %v4171
    %vm4225 = vweird.f32 %v4219
    %vm4226 = vmor %vm4224, %vm4225
    %v4227 = vsel %vm4226, %v4219, %v4223
    %v4228 = vand.u32 2147483647, %v4171
    %vm4229 = vcmp.eq.f32.partialorder %v4228, 8.507059e+37
    %v4230 = vand.u32 %v4171, 2147483648
    %v4231 = vor.u32 1.1754944e-38, %v4230
    %v4232 = vsel %vm4229, %v4231, %v4227
    %v4233 = vmul.f32 1.0, %v4232
    %v4234 = vrcp.pop %v4172
    %v4235 = vmul.f32 %v4172, %v4234
    %v4236 = vsub.f32 1.0, %v4235
    %v4237 = vmul.f32 %v4234, %v4236
    %v4238 = vadd.f32 %v4234, %v4237
    %vm4239 = vweird.f32 %v4172
    %vm4240 = vweird.f32 %v4234
    %vm4241 = vmor %vm4239, %vm4240
    %v4242 = vsel %vm4241, %v4234, %v4238
    %v4243 = vand.u32 2147483647, %v4172
    %vm4244 = vcmp.eq.f32.partialorder %v4243, 8.507059e+37
    %v4245 = vand.u32 %v4172, 2147483648
    %v4246 = vor.u32 1.1754944e-38, %v4245
    %v4247 = vsel %vm4244, %v4246, %v4242
    %v4248 = vmul.f32 1.0, %v4247
    %v4249 = vrcp.pop %v4173
    %v4250 = vmul.f32 %v4173, %v4249
    %v4251 = vsub.f32 1.0, %v4250
    %v4252 = vmul.f32 %v4249, %v4251
    %v4253 = vadd.f32 %v4249, %v4252
    %vm4254 = vweird.f32 %v4173
    %vm4255 = vweird.f32 %v4249
    %vm4256 = vmor %vm4254, %vm4255
    %v4257 = vsel %vm4256, %v4249, %v4253
    %v4258 = vand.u32 2147483647, %v4173
    %vm4259 = vcmp.eq.f32.partialorder %v4258, 8.507059e+37
    %v4260 = vand.u32 %v4173, 2147483648
    %v4261 = vor.u32 1.1754944e-38, %v4260
    %v4262 = vsel %vm4259, %v4261, %v4257
    %v4263 = vmul.f32 1.0, %v4262
    %v4264 = vtanh.pop %v4145
    %v4265 = vtanh.pop %v4149
    %v4266 = vmul.f32 %v4203, %v4071
    %v4267 = vmul.f32 %v4248, %v4072
    %v4268 = vmul.f32 %v4188, %v4264
    %v4269 = vmul.f32 %v4233, %v4265
    %v4270 = vadd.f32 %v4266, %v4268
    %v4271 = vadd.f32 %v4267, %v4269
    %v4272 = vtanh.pop %v4270
    %v4273 = vtanh.pop %v4271
    %v4274 = vmul.f32 %v4218, %v4272
    %v4275 = vmul.f32 %v4263, %v4273
    %v4276 = vld [vmem:[%s1943] sm:$0xff]
    %v4277 = vld [vmem:[%s1943 + $0x8] sm:$0xff]
    %v4278 = vld [vmem:[%s1943 + $0x10] sm:$0xff]
    %v4279 = vld [vmem:[%s1943 + $0x18] sm:$0xff]
    %v4280 = vld [vmem:[%s1943 + $0x20] sm:$0xff]
    %v4281 = vld [vmem:[%s1943 + $0x28] sm:$0xff]
    %v4282 = vld [vmem:[%s1943 + $0x30] sm:$0xff]
    %v4283 = vld [vmem:[%s1943 + $0x38] sm:$0xff]
    %v4284 = vpack.c.bf16 %v4275, %v4274
    %4285 = vmatpush.bf16.msra.mxu0 %v3055
    %4286 = vmatpush.bf16.msra.mxu0 %v3051
    %4287 = vmatpush.bf16.msra.mxu0 %v3047
    %4288 = vmatpush.bf16.msra.mxu0 %v3043
    %4289 = vmatpush.bf16.msra.mxu0 %v3039
    %4290 = vmatpush.bf16.msra.mxu0 %v3035
    %4291 = vmatpush.bf16.msra.mxu0 %v3031
    %4292 = vmatpush.bf16.msra.mxu0 %v3027
    %4293 = vmatmul.bf16.gmra.mxu0 %v4284
    %v4294 = vpop.f32.mrf.mxu0
    %v4295 = vadd.f32 0.0, %v4294
    %v4296 = vpop.f32.mrf.mxu0
    %v4297 = vadd.f32 0.0, %v4296
    %4298 = vdwg.mxu0
    %4299 = vmatpush.bf16.msra.mxu0 %v3056
    %4300 = vmatpush.bf16.msra.mxu0 %v3052
    %4301 = vmatpush.bf16.msra.mxu0 %v3048
    %4302 = vmatpush.bf16.msra.mxu0 %v3044
    %4303 = vmatpush.bf16.msra.mxu0 %v3040
    %4304 = vmatpush.bf16.msra.mxu0 %v3036
    %4305 = vmatpush.bf16.msra.mxu0 %v3032
    %4306 = vmatpush.bf16.msra.mxu0 %v3028
    %4307 = vmatmul.bf16.gmra.mxu0 %v4284
    %v4308 = vpop.f32.mrf.mxu0
    %v4309 = vadd.f32 0.0, %v4308
    %v4310 = vpop.f32.mrf.mxu0
    %v4311 = vadd.f32 0.0, %v4310
    %4312 = vdwg.mxu0
    %4313 = vmatpush.bf16.msra.mxu0 %v3057
    %4314 = vmatpush.bf16.msra.mxu0 %v3053
    %4315 = vmatpush.bf16.msra.mxu0 %v3049
    %4316 = vmatpush.bf16.msra.mxu0 %v3045
    %4317 = vmatpush.bf16.msra.mxu0 %v3041
    %4318 = vmatpush.bf16.msra.mxu0 %v3037
    %4319 = vmatpush.bf16.msra.mxu0 %v3033
    %4320 = vmatpush.bf16.msra.mxu0 %v3029
    %4321 = vmatmul.bf16.gmra.mxu0 %v4284
    %v4322 = vpop.f32.mrf.mxu0
    %v4323 = vadd.f32 0.0, %v4322
    %v4324 = vpop.f32.mrf.mxu0
    %v4325 = vadd.f32 0.0, %v4324
    %4326 = vdwg.mxu0
    %4327 = vmatpush.bf16.msra.mxu0 %v3058
    %4328 = vmatpush.bf16.msra.mxu0 %v3054
    %4329 = vmatpush.bf16.msra.mxu0 %v3050
    %4330 = vmatpush.bf16.msra.mxu0 %v3046
    %4331 = vmatpush.bf16.msra.mxu0 %v3042
    %4332 = vmatpush.bf16.msra.mxu0 %v3038
    %4333 = vmatpush.bf16.msra.mxu0 %v3034
    %4334 = vmatpush.bf16.msra.mxu0 %v3030
    %4335 = vmatmul.bf16.gmra.mxu0 %v4284
    %v4336 = vpop.f32.mrf.mxu0
    %v4337 = vadd.f32 0.0, %v4336
    %v4338 = vpop.f32.mrf.mxu0
    %v4339 = vadd.f32 0.0, %v4338
    %4340 = vdwg.mxu0
    %v4341 = vadd.f32 %v4276, %v4295
    %v4342 = vadd.f32 %v4277, %v4309
    %v4343 = vadd.f32 %v4278, %v4323
    %v4344 = vadd.f32 %v4279, %v4337
    %v4345 = vadd.f32 %v4280, %v4297
    %v4346 = vadd.f32 %v4281, %v4311
    %v4347 = vadd.f32 %v4282, %v4325
    %v4348 = vadd.f32 %v4283, %v4339
    %v4349 = vxor.u32 %v4341, 2147483648
    %v4350 = vxor.u32 %v4342, 2147483648
    %v4351 = vxor.u32 %v4343, 2147483648
    %v4352 = vxor.u32 %v4345, 2147483648
    %v4353 = vxor.u32 %v4346, 2147483648
    %v4354 = vxor.u32 %v4347, 2147483648
    %v4355 = vmul.f32 %v4349, 1.442695
    %v4356 = vpow.pop %v4355
    %v4357 = vmul.f32 %v4350, 1.442695
    %v4358 = vpow.pop %v4357
    %v4359 = vmul.f32 %v4351, 1.442695
    %v4360 = vpow.pop %v4359
    %v4361 = vmul.f32 %v4352, 1.442695
    %v4362 = vpow.pop %v4361
    %v4363 = vmul.f32 %v4353, 1.442695
    %v4364 = vpow.pop %v4363
    %v4365 = vmul.f32 %v4354, 1.442695
    %v4366 = vpow.pop %v4365
    %v4367 = vadd.f32 %v4356, 1.0
    %v4368 = vadd.f32 %v4358, 1.0
    %v4369 = vadd.f32 %v4360, 1.0
    %v4370 = vadd.f32 %v4362, 1.0
    %v4371 = vadd.f32 %v4364, 1.0
    %v4372 = vadd.f32 %v4366, 1.0
    %v4373 = vrcp.pop %v4367
    %v4374 = vmul.f32 %v4367, %v4373
    %v4375 = vsub.f32 1.0, %v4374
    %v4376 = vmul.f32 %v4373, %v4375
    %v4377 = vadd.f32 %v4373, %v4376
    %vm4378 = vweird.f32 %v4367
    %vm4379 = vweird.f32 %v4373
    %vm4380 = vmor %vm4378, %vm4379
    %v4381 = vsel %vm4380, %v4373, %v4377
    %v4382 = vand.u32 2147483647, %v4367
    %vm4383 = vcmp.eq.f32.partialorder %v4382, 8.507059e+37
    %v4384 = vand.u32 %v4367, 2147483648
    %v4385 = vor.u32 1.1754944e-38, %v4384
    %v4386 = vsel %vm4383, %v4385, %v4381
    %v4387 = vmul.f32 1.0, %v4386
    %v4388 = vrcp.pop %v4368
    %v4389 = vmul.f32 %v4368, %v4388
    %v4390 = vsub.f32 1.0, %v4389
    %v4391 = vmul.f32 %v4388, %v4390
    %v4392 = vadd.f32 %v4388, %v4391
    %vm4393 = vweird.f32 %v4368
    %vm4394 = vweird.f32 %v4388
    %vm4395 = vmor %vm4393, %vm4394
    %v4396 = vsel %vm4395, %v4388, %v4392
    %v4397 = vand.u32 2147483647, %v4368
    %vm4398 = vcmp.eq.f32.partialorder %v4397, 8.507059e+37
    %v4399 = vand.u32 %v4368, 2147483648
    %v4400 = vor.u32 1.1754944e-38, %v4399
    %v4401 = vsel %vm4398, %v4400, %v4396
    %v4402 = vmul.f32 1.0, %v4401
    %v4403 = vrcp.pop %v4369
    %v4404 = vmul.f32 %v4369, %v4403
    %v4405 = vsub.f32 1.0, %v4404
    %v4406 = vmul.f32 %v4403, %v4405
    %v4407 = vadd.f32 %v4403, %v4406
    %vm4408 = vweird.f32 %v4369
    %vm4409 = vweird.f32 %v4403
    %vm4410 = vmor %vm4408, %vm4409
    %v4411 = vsel %vm4410, %v4403, %v4407
    %v4412 = vand.u32 2147483647, %v4369
    %vm4413 = vcmp.eq.f32.partialorder %v4412, 8.507059e+37
    %v4414 = vand.u32 %v4369, 2147483648
    %v4415 = vor.u32 1.1754944e-38, %v4414
    %v4416 = vsel %vm4413, %v4415, %v4411
    %v4417 = vmul.f32 1.0, %v4416
    %v4418 = vrcp.pop %v4370
    %v4419 = vmul.f32 %v4370, %v4418
    %v4420 = vsub.f32 1.0, %v4419
    %v4421 = vmul.f32 %v4418, %v4420
    %v4422 = vadd.f32 %v4418, %v4421
    %vm4423 = vweird.f32 %v4370
    %vm4424 = vweird.f32 %v4418
    %vm4425 = vmor %vm4423, %vm4424
    %v4426 = vsel %vm4425, %v4418, %v4422
    %v4427 = vand.u32 2147483647, %v4370
    %vm4428 = vcmp.eq.f32.partialorder %v4427, 8.507059e+37
    %v4429 = vand.u32 %v4370, 2147483648
    %v4430 = vor.u32 1.1754944e-38, %v4429
    %v4431 = vsel %vm4428, %v4430, %v4426
    %v4432 = vmul.f32 1.0, %v4431
    %v4433 = vrcp.pop %v4371
    %v4434 = vmul.f32 %v4371, %v4433
    %v4435 = vsub.f32 1.0, %v4434
    %v4436 = vmul.f32 %v4433, %v4435
    %v4437 = vadd.f32 %v4433, %v4436
    %vm4438 = vweird.f32 %v4371
    %vm4439 = vweird.f32 %v4433
    %vm4440 = vmor %vm4438, %vm4439
    %v4441 = vsel %vm4440, %v4433, %v4437
    %v4442 = vand.u32 2147483647, %v4371
    %vm4443 = vcmp.eq.f32.partialorder %v4442, 8.507059e+37
    %v4444 = vand.u32 %v4371, 2147483648
    %v4445 = vor.u32 1.1754944e-38, %v4444
    %v4446 = vsel %vm4443, %v4445, %v4441
    %v4447 = vmul.f32 1.0, %v4446
    %v4448 = vrcp.pop %v4372
    %v4449 = vmul.f32 %v4372, %v4448
    %v4450 = vsub.f32 1.0, %v4449
    %v4451 = vmul.f32 %v4448, %v4450
    %v4452 = vadd.f32 %v4448, %v4451
    %vm4453 = vweird.f32 %v4372
    %vm4454 = vweird.f32 %v4448
    %vm4455 = vmor %vm4453, %vm4454
    %v4456 = vsel %vm4455, %v4448, %v4452
    %v4457 = vand.u32 2147483647, %v4372
    %vm4458 = vcmp.eq.f32.partialorder %v4457, 8.507059e+37
    %v4459 = vand.u32 %v4372, 2147483648
    %v4460 = vor.u32 1.1754944e-38, %v4459
    %v4461 = vsel %vm4458, %v4460, %v4456
    %v4462 = vmul.f32 1.0, %v4461
    %v4463 = vtanh.pop %v4344
    %v4464 = vtanh.pop %v4348
    %v4465 = vmul.f32 %v4402, %v4270
    %v4466 = vmul.f32 %v4447, %v4271
    %v4467 = vmul.f32 %v4387, %v4463
    %v4468 = vmul.f32 %v4432, %v4464
    %v4469 = vadd.f32 %v4465, %v4467
    %v4470 = vadd.f32 %v4466, %v4468
    %v4471 = vtanh.pop %v4469
    %v4472 = vtanh.pop %v4470
    %v4473 = vmul.f32 %v4417, %v4471
    %v4474 = vmul.f32 %v4462, %v4472
    %v4475 = vld [vmem:[%s2155] sm:$0xff]
    %v4476 = vld [vmem:[%s2155 + $0x8] sm:$0xff]
    %v4477 = vld [vmem:[%s2155 + $0x10] sm:$0xff]
    %v4478 = vld [vmem:[%s2155 + $0x18] sm:$0xff]
    %v4479 = vld [vmem:[%s2155 + $0x20] sm:$0xff]
    %v4480 = vld [vmem:[%s2155 + $0x28] sm:$0xff]
    %v4481 = vld [vmem:[%s2155 + $0x30] sm:$0xff]
    %v4482 = vld [vmem:[%s2155 + $0x38] sm:$0xff]
    %v4483 = vpack.c.bf16 %v4474, %v4473
    %4484 = vmatpush.bf16.msra.mxu0 %v3055
    %4485 = vmatpush.bf16.msra.mxu0 %v3051
    %4486 = vmatpush.bf16.msra.mxu0 %v3047
    %4487 = vmatpush.bf16.msra.mxu0 %v3043
    %4488 = vmatpush.bf16.msra.mxu0 %v3039
    %4489 = vmatpush.bf16.msra.mxu0 %v3035
    %4490 = vmatpush.bf16.msra.mxu0 %v3031
    %4491 = vmatpush.bf16.msra.mxu0 %v3027
    %4492 = vmatmul.bf16.gmra.mxu0 %v4483
    %v4493 = vpop.f32.mrf.mxu0
    %v4494 = vadd.f32 0.0, %v4493
    %v4495 = vpop.f32.mrf.mxu0
    %v4496 = vadd.f32 0.0, %v4495
    %4497 = vdwg.mxu0
    %4498 = vmatpush.bf16.msra.mxu0 %v3056
    %4499 = vmatpush.bf16.msra.mxu0 %v3052
    %4500 = vmatpush.bf16.msra.mxu0 %v3048
    %4501 = vmatpush.bf16.msra.mxu0 %v3044
    %4502 = vmatpush.bf16.msra.mxu0 %v3040
    %4503 = vmatpush.bf16.msra.mxu0 %v3036
    %4504 = vmatpush.bf16.msra.mxu0 %v3032
    %4505 = vmatpush.bf16.msra.mxu0 %v3028
    %4506 = vmatmul.bf16.gmra.mxu0 %v4483
    %v4507 = vpop.f32.mrf.mxu0
    %v4508 = vadd.f32 0.0, %v4507
    %v4509 = vpop.f32.mrf.mxu0
    %v4510 = vadd.f32 0.0, %v4509
    %4511 = vdwg.mxu0
    %4512 = vmatpush.bf16.msra.mxu0 %v3057
    %4513 = vmatpush.bf16.msra.mxu0 %v3053
    %4514 = vmatpush.bf16.msra.mxu0 %v3049
    %4515 = vmatpush.bf16.msra.mxu0 %v3045
    %4516 = vmatpush.bf16.msra.mxu0 %v3041
    %4517 = vmatpush.bf16.msra.mxu0 %v3037
    %4518 = vmatpush.bf16.msra.mxu0 %v3033
    %4519 = vmatpush.bf16.msra.mxu0 %v3029
    %4520 = vmatmul.bf16.gmra.mxu0 %v4483
    %v4521 = vpop.f32.mrf.mxu0
    %v4522 = vadd.f32 0.0, %v4521
    %v4523 = vpop.f32.mrf.mxu0
    %v4524 = vadd.f32 0.0, %v4523
    %4525 = vdwg.mxu0
    %4526 = vmatpush.bf16.msra.mxu0 %v3058
    %4527 = vmatpush.bf16.msra.mxu0 %v3054
    %4528 = vmatpush.bf16.msra.mxu0 %v3050
    %4529 = vmatpush.bf16.msra.mxu0 %v3046
    %4530 = vmatpush.bf16.msra.mxu0 %v3042
    %4531 = vmatpush.bf16.msra.mxu0 %v3038
    %4532 = vmatpush.bf16.msra.mxu0 %v3034
    %4533 = vmatpush.bf16.msra.mxu0 %v3030
    %4534 = vmatmul.bf16.gmra.mxu0 %v4483
    %v4535 = vpop.f32.mrf.mxu0
    %v4536 = vadd.f32 0.0, %v4535
    %v4537 = vpop.f32.mrf.mxu0
    %v4538 = vadd.f32 0.0, %v4537
    %4539 = vdwg.mxu0
    %v4540 = vadd.f32 %v4475, %v4494
    %v4541 = vadd.f32 %v4476, %v4508
    %v4542 = vadd.f32 %v4477, %v4522
    %v4543 = vadd.f32 %v4478, %v4536
    %v4544 = vadd.f32 %v4479, %v4496
    %v4545 = vadd.f32 %v4480, %v4510
    %v4546 = vadd.f32 %v4481, %v4524
    %v4547 = vadd.f32 %v4482, %v4538
    %v4548 = vxor.u32 %v4540, 2147483648
    %v4549 = vxor.u32 %v4541, 2147483648
    %v4550 = vxor.u32 %v4542, 2147483648
    %v4551 = vxor.u32 %v4544, 2147483648
    %v4552 = vxor.u32 %v4545, 2147483648
    %v4553 = vxor.u32 %v4546, 2147483648
    %v4554 = vmul.f32 %v4548, 1.442695
    %v4555 = vpow.pop %v4554
    %v4556 = vmul.f32 %v4549, 1.442695
    %v4557 = vpow.pop %v4556
    %v4558 = vmul.f32 %v4550, 1.442695
    %v4559 = vpow.pop %v4558
    %v4560 = vmul.f32 %v4551, 1.442695
    %v4561 = vpow.pop %v4560
    %v4562 = vmul.f32 %v4552, 1.442695
    %v4563 = vpow.pop %v4562
    %v4564 = vmul.f32 %v4553, 1.442695
    %v4565 = vpow.pop %v4564
    %v4566 = vadd.f32 %v4555, 1.0
    %v4567 = vadd.f32 %v4557, 1.0
    %v4568 = vadd.f32 %v4559, 1.0
    %v4569 = vadd.f32 %v4561, 1.0
    %v4570 = vadd.f32 %v4563, 1.0
    %v4571 = vadd.f32 %v4565, 1.0
    %v4572 = vrcp.pop %v4566
    %v4573 = vmul.f32 %v4566, %v4572
    %v4574 = vsub.f32 1.0, %v4573
    %v4575 = vmul.f32 %v4572, %v4574
    %v4576 = vadd.f32 %v4572, %v4575
    %vm4577 = vweird.f32 %v4566
    %vm4578 = vweird.f32 %v4572
    %vm4579 = vmor %vm4577, %vm4578
    %v4580 = vsel %vm4579, %v4572, %v4576
    %v4581 = vand.u32 2147483647, %v4566
    %vm4582 = vcmp.eq.f32.partialorder %v4581, 8.507059e+37
    %v4583 = vand.u32 %v4566, 2147483648
    %v4584 = vor.u32 1.1754944e-38, %v4583
    %v4585 = vsel %vm4582, %v4584, %v4580
    %v4586 = vmul.f32 1.0, %v4585
    %v4587 = vrcp.pop %v4567
    %v4588 = vmul.f32 %v4567, %v4587
    %v4589 = vsub.f32 1.0, %v4588
    %v4590 = vmul.f32 %v4587, %v4589
    %v4591 = vadd.f32 %v4587, %v4590
    %vm4592 = vweird.f32 %v4567
    %vm4593 = vweird.f32 %v4587
    %vm4594 = vmor %vm4592, %vm4593
    %v4595 = vsel %vm4594, %v4587, %v4591
    %v4596 = vand.u32 2147483647, %v4567
    %vm4597 = vcmp.eq.f32.partialorder %v4596, 8.507059e+37
    %v4598 = vand.u32 %v4567, 2147483648
    %v4599 = vor.u32 1.1754944e-38, %v4598
    %v4600 = vsel %vm4597, %v4599, %v4595
    %v4601 = vmul.f32 1.0, %v4600
    %v4602 = vrcp.pop %v4568
    %v4603 = vmul.f32 %v4568, %v4602
    %v4604 = vsub.f32 1.0, %v4603
    %v4605 = vmul.f32 %v4602, %v4604
    %v4606 = vadd.f32 %v4602, %v4605
    %vm4607 = vweird.f32 %v4568
    %vm4608 = vweird.f32 %v4602
    %vm4609 = vmor %vm4607, %vm4608
    %v4610 = vsel %vm4609, %v4602, %v4606
    %v4611 = vand.u32 2147483647, %v4568
    %vm4612 = vcmp.eq.f32.partialorder %v4611, 8.507059e+37
    %v4613 = vand.u32 %v4568, 2147483648
    %v4614 = vor.u32 1.1754944e-38, %v4613
    %v4615 = vsel %vm4612, %v4614, %v4610
    %v4616 = vmul.f32 1.0, %v4615
    %v4617 = vrcp.pop %v4569
    %v4618 = vmul.f32 %v4569, %v4617
    %v4619 = vsub.f32 1.0, %v4618
    %v4620 = vmul.f32 %v4617, %v4619
    %v4621 = vadd.f32 %v4617, %v4620
    %vm4622 = vweird.f32 %v4569
    %vm4623 = vweird.f32 %v4617
    %vm4624 = vmor %vm4622, %vm4623
    %v4625 = vsel %vm4624, %v4617, %v4621
    %v4626 = vand.u32 2147483647, %v4569
    %vm4627 = vcmp.eq.f32.partialorder %v4626, 8.507059e+37
    %v4628 = vand.u32 %v4569, 2147483648
    %v4629 = vor.u32 1.1754944e-38, %v4628
    %v4630 = vsel %vm4627, %v4629, %v4625
    %v4631 = vmul.f32 1.0, %v4630
    %v4632 = vrcp.pop %v4570
    %v4633 = vmul.f32 %v4570, %v4632
    %v4634 = vsub.f32 1.0, %v4633
    %v4635 = vmul.f32 %v4632, %v4634
    %v4636 = vadd.f32 %v4632, %v4635
    %vm4637 = vweird.f32 %v4570
    %vm4638 = vweird.f32 %v4632
    %vm4639 = vmor %vm4637, %vm4638
    %v4640 = vsel %vm4639, %v4632, %v4636
    %v4641 = vand.u32 2147483647, %v4570
    %vm4642 = vcmp.eq.f32.partialorder %v4641, 8.507059e+37
    %v4643 = vand.u32 %v4570, 2147483648
    %v4644 = vor.u32 1.1754944e-38, %v4643
    %v4645 = vsel %vm4642, %v4644, %v4640
    %v4646 = vmul.f32 1.0, %v4645
    %v4647 = vrcp.pop %v4571
    %v4648 = vmul.f32 %v4571, %v4647
    %v4649 = vsub.f32 1.0, %v4648
    %v4650 = vmul.f32 %v4647, %v4649
    %v4651 = vadd.f32 %v4647, %v4650
    %vm4652 = vweird.f32 %v4571
    %vm4653 = vweird.f32 %v4647
    %vm4654 = vmor %vm4652, %vm4653
    %v4655 = vsel %vm4654, %v4647, %v4651
    %v4656 = vand.u32 2147483647, %v4571
    %vm4657 = vcmp.eq.f32.partialorder %v4656, 8.507059e+37
    %v4658 = vand.u32 %v4571, 2147483648
    %v4659 = vor.u32 1.1754944e-38, %v4658
    %v4660 = vsel %vm4657, %v4659, %v4655
    %v4661 = vmul.f32 1.0, %v4660
    %v4662 = vtanh.pop %v4543
    %v4663 = vtanh.pop %v4547
    %v4664 = vmul.f32 %v4601, %v4469
    %v4665 = vmul.f32 %v4646, %v4470
    %v4666 = vmul.f32 %v4586, %v4662
    %v4667 = vmul.f32 %v4631, %v4663
    %v4668 = vadd.f32 %v4664, %v4666
    %v4669 = vadd.f32 %v4665, %v4667
    %v4670 = vtanh.pop %v4668
    %v4671 = vtanh.pop %v4669
    %v4672 = vmul.f32 %v4616, %v4670
    %v4673 = vmul.f32 %v4661, %v4671
    %v4674 = vpack.c.bf16 %v4673, %v4672
    %v4675 = vld [vmem:[%s7] sm:$0xf]
    %v4676 = vld [vmem:[%s7 + $0x4] sm:$0xf]
    %v4677 = vld [vmem:[%s7 + $0x8] sm:$0xf]
    %v4678 = vld [vmem:[%s7 + $0xc] sm:$0xf]
    %v4679 = vld [vmem:[%s7 + $0x10] sm:$0xf]
    %v4680 = vld [vmem:[%s7 + $0x14] sm:$0xf]
    %v4681 = vld [vmem:[%s7 + $0x18] sm:$0xf]
    %v4682 = vld [vmem:[%s7 + $0x1c] sm:$0xf]
    %v4683 = vld [vmem:[%s7 + $0x20] sm:$0xf]
    %v4684 = vld [vmem:[%s7 + $0x24] sm:$0xf]
    %v4685 = vld [vmem:[%s7 + $0x28] sm:$0xf]
    %v4686 = vld [vmem:[%s7 + $0x2c] sm:$0xf]
    %v4687 = vld [vmem:[%s7 + $0x30] sm:$0xf]
    %v4688 = vld [vmem:[%s7 + $0x34] sm:$0xf]
    %v4689 = vld [vmem:[%s7 + $0x38] sm:$0xf]
    %v4690 = vld [vmem:[%s7 + $0x3c] sm:$0xf]
    %v4691 = vld [vmem:[%s8] sm:$0x1]
    %v4693 = vperm.slane %v4691, 0
    %v4711 = vunpack.c.l.b16 %v4675
    %v4712 = vunpack.c.l.b16 %v4676
    %v4713 = vunpack.c.l.b16 %v4677
    %v4714 = vunpack.c.l.b16 %v4678
    %v4715 = vunpack.c.l.b16 %v4679
    %v4716 = vunpack.c.l.b16 %v4680
    %v4717 = vunpack.c.l.b16 %v4681
    %v4718 = vunpack.c.l.b16 %v4682
    %v4719 = vunpack.c.l.b16 %v4683
    %v4720 = vunpack.c.l.b16 %v4684
    %v4721 = vunpack.c.l.b16 %v4685
    %v4722 = vunpack.c.l.b16 %v4686
    %v4723 = vunpack.c.l.b16 %v4687
    %v4724 = vunpack.c.l.b16 %v4688
    %v4725 = vunpack.c.l.b16 %v4689
    %v4726 = vunpack.c.l.b16 %v4690
    %v4727 = vpack.c.b16 %v4712, %v4711
    %v4728 = vpack.c.b16 %v4714, %v4713
    %v4729 = vpack.c.b16 %v4716, %v4715
    %v4730 = vpack.c.b16 %v4718, %v4717
    %v4731 = vpack.c.b16 %v4720, %v4719
    %v4732 = vpack.c.b16 %v4722, %v4721
    %v4733 = vpack.c.b16 %v4724, %v4723
    %v4734 = vpack.c.b16 %v4726, %v4725
    %4743 = vmatpush.bf16.msra.mxu0 %v4734
    %4744 = vmatpush.bf16.msra.mxu0 %v4733
    %4745 = vmatpush.bf16.msra.mxu0 %v4732
    %4746 = vmatpush.bf16.msra.mxu0 %v4731
    %4747 = vmatpush.bf16.msra.mxu0 %v4730
    %4748 = vmatpush.bf16.msra.mxu0 %v4729
    %4749 = vmatpush.bf16.msra.mxu0 %v4728
    %4750 = vmatpush.bf16.msra.mxu0 %v4727
    %4751 = vmatmul.bf16.gmra.mxu0 %v4674
    %v4752 = vpop.f32.mrf.mxu0
    %v4753 = vadd.f32 %v4693, %v4752
    %v4754 = vpop.f32.mrf.mxu0
    %v4755 = vadd.f32 %v4693, %v4754
    %4756 = vdwg.mxu0
    %vm4757 = vcmask 64512
    %4758 = vst.msk [vmem:[%s9] sm:$0xff] %vm4757, %v4753
    %4759 = vst.msk [vmem:[%s9 + $0x8] sm:$0xff] %vm4757, %v4755
    // Predicated region
    $region58: #{tpu_custom_call.1} parent=1 // pred_check
      _
    $region59: #{tpu_custom_call.1} parent=1 // pred_check_branch
      %4761 = sbr.rel (0) target = $region61
    $region60: #{tpu_custom_call.1} parent=1 // pred_region
      _
    $region61: #{tpu_custom_call.1} parent=1 // pred_fallthru
      _
    // Predicated region
    $region62: #{tpu_custom_call.1} parent=1 // pred_check
      _
    $region63: #{tpu_custom_call.1} parent=1 // pred_check_branch
      %4763 = sbr.rel (0) target = $region65
    $region64: #{tpu_custom_call.1} parent=1 // pred_region
      _
    $region65: #{tpu_custom_call.1} parent=1 // pred_fallthru
      _
    %4764 = vsyncpa [#allocation5], 1
    %4765 = vsyncpa [#allocation7], 1
    %4766 = vsyncpa [#allocation10], 1

</llo_original>
